<compile_context>
chip_gen: v6e
topology: v6e:2x2x1
jax: 0.10.0
libtpu: 0.0.40
codegen_flags: <defaults>
</compile_context>

<pallas_src>
import math

import numpy as np
import jax
import jax.numpy as jnp
from jax import lax
from jax.experimental import pallas as pl
from jax.experimental.pallas import tpu as pltpu

LEAKY_SLOPE = 0.01  # torch.nn.LeakyReLU default negative_slope
_VMEM_LIMIT = 48 * 1024 * 1024


def _leaky_relu(x):
    return jnp.where(x >= 0, x, LEAKY_SLOPE * x)


# ---------------------------------------------------------------------------
# In-kernel conv helper: 3x3 / stride-2 / pad-1 conv as 9 tap-GEMMs over the
# polyphase (stride-2 de-interleaved) planes of the zero-padded input.
# All slices are static and contiguous; no im2col matrix is ever materialized.
# ---------------------------------------------------------------------------
def _conv3x3s2_polyphase(xs_ref, w_ref, ho, wo):
    """xs_ref: (4, ho+1, wo+1, cin)   polyphase planes, plane t = 2*(row%2)+(col%2)
       w_ref : (9, cin, cout)         tap-major (kh*3+kw) weight blocks
       returns (ho*wo, cout) float32 accumulator (no bias / activation)."""
    cin = xs_ref.shape[-1]
    cout = w_ref.shape[-1]
    acc = jnp.zeros((ho * wo, cout), jnp.float32)
    for kh in range(3):
        for kw in range(3):
            # padded row 2*ho_out + kh  ->  plane row-parity kh%2, row  ho_out + kh//2
            plane = xs_ref[(kh % 2) * 2 + (kw % 2)]                 # (ho+1, wo+1, cin)
            tap = plane[kh // 2:kh // 2 + ho, kw // 2:kw // 2 + wo, :]
            acc += jnp.dot(tap.reshape(ho * wo, cin), w_ref[kh * 3 + kw],
                           preferred_element_type=jnp.float32)
    return acc


# ---------------------------------------------------------------------------
# Pallas kernels
# ---------------------------------------------------------------------------
def _conv_lrelu_kernel(xs_ref, w_ref, b_ref, o_ref):
    """One batch element: conv3x3/s2/p1 + bias + LeakyReLU, weights resident in VMEM."""
    _, ho, wo, cout = o_ref.shape
    acc = _conv3x3s2_polyphase(xs_ref, w_ref, ho, wo)               # (ho*wo, cout) f32
    y = _leaky_relu(acc + b_ref[...])
    o_ref[...] = y.reshape(1, ho, wo, cout).astype(o_ref.dtype)


def _tail_kernel(xs_ref, w2_ref, b2_ref, w3_ref, b3_ref, wl_ref, bl_ref, o_ref):
    """Fused tail for one batch element: conv(4x4->2x2) + conv(2x2->1x1) + EqualLinear.

    Intermediate activations stay in VMEM / registers; everything after the first
    conv's f32 accumulation stays in f32 (incl. the EqualLinear matmul).
    """
    d = o_ref.shape[-1]
    # conv[-2]: 4x4 -> 2x2 ; rows of h2 are ordered (ho, wo).
    h2 = _leaky_relu(_conv3x3s2_polyphase(xs_ref, w2_ref, 2, 2) + b2_ref[...])   # (4, d) f32
    # conv[-1]: 2x2 -> 1x1 ; only the 4 interior taps (kh,kw in {1,2}) see real data.
    acc = jnp.zeros((1, d), jnp.float32)
    for t in range(4):
        acc += jnp.dot(h2[t:t + 1, :], w3_ref[t], preferred_element_type=jnp.float32)
    h3 = _leaky_relu(acc + b3_ref[...])
    # EqualLinear (1/sqrt(d) scale pre-folded into wl), f32.
    out = jnp.dot(h3, wl_ref[...], preferred_element_type=jnp.float32) + bl_ref[...]
    o_ref[...] = out.reshape(1, 1, d)


# ---------------------------------------------------------------------------
# pallas_call wrappers (no padding, no slicing; weights fetched once per call)
# ---------------------------------------------------------------------------
def _conv_lrelu(xs, w9, b):
    """xs: (4N, Ho+1, Wo+1, Cin) bf16, w9: (9, Cin, Cout) bf16, b: (1, Cout) f32
       -> (N, Ho, Wo, Cout) bf16."""
    n = xs.shape[0] // 4
    hop1, wop1, cin = xs.shape[1], xs.shape[2], xs.shape[3]
    ho, wo = hop1 - 1, wop1 - 1
    cout = w9.shape[-1]
    return pl.pallas_call(
        _conv_lrelu_kernel,
        out_shape=jax.ShapeDtypeStruct((n, ho, wo, cout), jnp.bfloat16),
        grid=(n,),
        in_specs=[
            pl.BlockSpec((4, hop1, wop1, cin), lambda i: (i, 0, 0, 0)),
            pl.BlockSpec((9, cin, cout), lambda i: (0, 0, 0)),
            pl.BlockSpec((1, cout), lambda i: (0, 0)),
        ],
        out_specs=pl.BlockSpec((1, ho, wo, cout), lambda i: (i, 0, 0, 0)),
        compiler_params=pltpu.CompilerParams(
            dimension_semantics=("parallel",),
            vmem_limit_bytes=_VMEM_LIMIT,
        ),
    )(xs, w9, b)


def _tail_fused(xs, w2, b2, w3, b3, wl, bl):
    """xs: (4N, 3, 3, C) bf16 (polyphase of the 4x4 activation) -> (N, D) f32."""
    n = xs.shape[0] // 4
    c = xs.shape[-1]
    d = wl.shape[-1]
    out = pl.pallas_call(
        _tail_kernel,
        out_shape=jax.ShapeDtypeStruct((n, 1, d), jnp.float32),
        grid=(n,),
        in_specs=[
            pl.BlockSpec((4, 3, 3, c), lambda i: (i, 0, 0, 0)),
            pl.BlockSpec((9, c, d), lambda i: (0, 0, 0)),
            pl.BlockSpec((1, d), lambda i: (0, 0)),
            pl.BlockSpec((4, d, d), lambda i: (0, 0, 0)),
            pl.BlockSpec((1, d), lambda i: (0, 0)),
            pl.BlockSpec((d, d), lambda i: (0, 0)),
            pl.BlockSpec((1, d), lambda i: (0, 0)),
        ],
        out_specs=pl.BlockSpec((1, 1, d), lambda i: (i, 0, 0)),
        compiler_params=pltpu.CompilerParams(
            dimension_semantics=("parallel",),
            vmem_limit_bytes=_VMEM_LIMIT,
        ),
    )(xs, w2, b2, w3, b3, wl, bl)
    return out.reshape(n, d)


# ---------------------------------------------------------------------------
# JAX glue: polyphase re-layout of the zero-padded activation (XLA, ~1.3x bytes)
# ---------------------------------------------------------------------------
def _polyphase_pad(x):
    """(N, H, W, C) -> (4N, H//2+1, W//2+1, C): the four stride-2 polyphase planes
    of the (pad=1) zero-padded image, plane index t = 2*(row parity) + col parity,
    grouped per batch element (element n occupies rows 4n..4n+3)."""
    n, h, w, c = x.shape
    ho, wo = h // 2, w // 2
    xp = jnp.pad(x, ((0, 0), (1, 1), (1, 1), (0, 0)))
    xp = xp.reshape(n, ho + 1, 2, wo + 1, 2, c)
    xp = jnp.transpose(xp, (0, 2, 4, 1, 3, 5))          # (N, 2, 2, Ho+1, Wo+1, C)
    return xp.reshape(n * 4, ho + 1, wo + 1, c)


def _w_to_taps(w):
    """torch Conv2d weight (O, I, 3, 3) -> (9, I, O), tap-major (kh*3+kw)."""
    o, i = w.shape[0], w.shape[1]
    return jnp.transpose(w, (2, 3, 1, 0)).reshape(9, i, o)


# ---------------------------------------------------------------------------
# Parameter init (mirrors the module) and one-time kernel-layout prep
# ---------------------------------------------------------------------------
def init_params(key, in_c, out_c, spatial):
    num_pools = int(np.log2(spatial))
    chans = [in_c] + [out_c] * num_pools
    convs = []
    for li in range(num_pools):
        key, kw_, kb_ = jax.random.split(key, 3)
        cin, cout = chans[li], chans[li + 1]
        bound = 1.0 / math.sqrt(cin * 9)  # PyTorch Conv2d default init range
        w = jax.random.uniform(kw_, (cout, cin, 3, 3), jnp.float32, -bound, bound)
        b = jax.random.uniform(kb_, (cout,), jnp.float32, -bound, bound)
        convs.append((w, b))
    key, kl = jax.random.split(key)
    lin_w = jax.random.normal(kl, (out_c, out_c), jnp.float32)  # randn / lr_mul (=1)
    lin_b = jnp.zeros((out_c,), jnp.float32)                    # EqualLinear bias_init=0
    return {"convs": convs, "linear": (lin_w, lin_b)}


def prep_params(params):
    """One-time conversion to kernel layouts (bf16 tap-major conv weights; f32 tail
    conv / EqualLinear weights with the 1/sqrt(d) scale pre-folded)."""
    convs = params["convs"]
    assert len(convs) >= 2, "GradualStyleBlock kernel path needs spatial >= 4"
    gen = [(_w_to_taps(w).astype(jnp.bfloat16), b.astype(jnp.float32).reshape(1, -1))
           for (w, b) in convs[:-2]]

    w2, b2 = convs[-2]
    w3, b3 = convs[-1]
    lw, lb = params["linear"]
    d = lw.shape[0]
    scale = 1.0 / math.sqrt(d)                       # EqualLinear: (1/sqrt(in_dim)) * lr_mul
    w3_taps = _w_to_taps(w3).astype(jnp.float32)     # (9, d, d)
    w3_sub = jnp.stack([w3_taps[4], w3_taps[5], w3_taps[7], w3_taps[8]])  # interior taps
    tail = (
        _w_to_taps(w2).astype(jnp.bfloat16),
        b2.astype(jnp.float32).reshape(1, -1),
        w3_sub,
        b3.astype(jnp.float32).reshape(1, -1),
        (jnp.transpose(lw) * scale).astype(jnp.float32),   # scale folded once
        lb.astype(jnp.float32).reshape(1, -1),
    )
    return {"gen": gen, "tail": tail}


# ---------------------------------------------------------------------------
# Forward pass (Pallas) and pure-JAX f32 reference
# ---------------------------------------------------------------------------
def gradual_style_block_forward(x_nchw, prepped):
    # NCHW -> NHWC, bf16 at the kernel boundary (f32 accumulate inside kernels).
    x = jnp.transpose(x_nchw, (0, 2, 3, 1)).astype(jnp.bfloat16)

    # All conv layers except the last two: per-layer pallas_call, grid over batch.
    for (w9, b) in prepped["gen"]:
        xs = _polyphase_pad(x)
        y = _conv_lrelu(xs, w9, b)          # (N, Ho, Wo, Cout) bf16
        x = y

    # Fused tail: conv(4x4->2x2) + conv(2x2->1x1) + EqualLinear, all in one call.
    assert x.shape[1] == 4 and x.shape[2] == 4
    w2, b2, w3, b3, wl, bl = prepped["tail"]
    xs = _polyphase_pad(x)
    # NHWC (N,1,1,out_c) flattens identically to torch's view(-1, out_c) on (N,out_c,1,1)
    return _tail_fused(xs, w2, b2, w3, b3, wl, bl)


def reference_forward(x_nchw, params, out_c):
    x = jnp.transpose(x_nchw, (0, 2, 3, 1)).astype(jnp.float32)
    for (w, b) in params["convs"]:
        w_hwio = jnp.transpose(w, (2, 3, 1, 0))
        y = lax.conv_general_dilated(
            x, w_hwio, (2, 2), ((1, 1), (1, 1)),
            dimension_numbers=("NHWC", "HWIO", "NHWC"),
            precision=lax.Precision.HIGHEST,
        ) + b.reshape(1, 1, 1, -1)
        x = jnp.where(y >= 0, y, LEAKY_SLOPE * y)
    feat = x.reshape(-1, out_c)
    lw, lb = params["linear"]
    scale = 1.0 / math.sqrt(out_c)
    return feat @ (lw * scale).T + lb


if __name__ == "__main__":
    # num_pools = log2(16) = 4 convs: spatial 16 -> 8 -> 4 -> 2 -> 1
    N, in_c, out_c, spatial = 2, 4, 32, 16
    key = jax.random.PRNGKey(0)
    kx, kp = jax.random.split(key)
    x = jax.random.normal(kx, (N, in_c, spatial, spatial), jnp.float32)  # NCHW, like PyTorch

    params = init_params(kp, in_c, out_c, spatial)
    prepped = prep_params(params)           # weight layout / scale folding: done once

    fwd = jax.jit(gradual_style_block_forward)
    out = jax.block_until_ready(fwd(x, prepped))
    assert out.shape == (N, out_c), out.shape

    ref = reference_forward(x, params, out_c)
    # bf16 conv matmuls (f32 accumulate, f32 tail) vs f32 HIGHEST reference
    np.testing.assert_allclose(np.asarray(out), np.asarray(ref), rtol=2e-2, atol=2e-2)

    print("KERNEL_OK")
</pallas_src>

<mosaic_0001>
module attributes {stable_mosaic.version = 11 : i64} {
  func.func @_conv_lrelu_kernel(%arg0: i32, %arg1: memref<4x9x9x4xbf16, #tpu.memory_space<vmem>>, %arg2: memref<9x4x32xbf16, #tpu.memory_space<vmem>>, %arg3: memref<1x32xf32, #tpu.memory_space<vmem>>, %arg4: memref<1x8x8x32xbf16, #tpu.memory_space<vmem>>) attributes {dimension_semantics = [#tpu.dimension_semantics<parallel>], iteration_bounds = array<i64: 2>, scalar_prefetch = 0 : i64, scratch_operands = 0 : i64, tpu.core_type = #tpu.core_type<tc>, window_params = [{transform_indices = @transform_0, window_bounds = array<i64: 4, 9, 9, 4>}, {pipeline_mode = #tpu.pipeline_mode<synchronous>, transform_indices = @transform_1, window_bounds = array<i64: 9, 4, 32>}, {pipeline_mode = #tpu.pipeline_mode<synchronous>, transform_indices = @transform_2, window_bounds = array<i64: 1, 32>}, {transform_indices = @transform_3, window_bounds = array<i64: 1, 8, 8, 32>}]} {
    %cst = arith.constant 0.000000e+00 : f32
    %0 = vector.broadcast %cst : f32 to vector<64x32xf32>
    %c0 = arith.constant 0 : index
    %c0_0 = arith.constant 0 : index
    %c0_1 = arith.constant 0 : index
    %c0_2 = arith.constant 0 : index
    %1 = vector.load %arg1[%c0, %c0_0, %c0_1, %c0_2] : memref<4x9x9x4xbf16, #tpu.memory_space<vmem>>, vector<1x9x9x4xbf16>
    %2 = vector.shape_cast %1 : vector<1x9x9x4xbf16> to vector<9x9x4xbf16>
    %3 = vector.extract_strided_slice %2 {offsets = [0, 0, 0], sizes = [8, 8, 4], strides = [1, 1, 1]} : vector<9x9x4xbf16> to vector<8x8x4xbf16>
    %4 = vector.shape_cast %3 : vector<8x8x4xbf16> to vector<64x4xbf16>
    %c0_3 = arith.constant 0 : index
    %c0_4 = arith.constant 0 : index
    %c0_5 = arith.constant 0 : index
    %5 = vector.load %arg2[%c0_3, %c0_4, %c0_5] : memref<9x4x32xbf16, #tpu.memory_space<vmem>>, vector<1x4x32xbf16>
    %6 = vector.shape_cast %5 : vector<1x4x32xbf16> to vector<4x32xbf16>
    %cst_6 = arith.constant dense<0.000000e+00> : vector<64x32xf32>
    %7 = tpu.matmul %4, %6, %cst_6 {dimension_numbers = #tpu.dot_dimension_numbers<[1], [0], [0], [1], [0, 0, 1, 1], [], []>} : vector<64x4xbf16>, vector<4x32xbf16>, vector<64x32xf32> -> vector<64x32xf32>
    %8 = arith.addf %0, %7 : vector<64x32xf32>
    %c1 = arith.constant 1 : index
    %c0_7 = arith.constant 0 : index
    %c0_8 = arith.constant 0 : index
    %c0_9 = arith.constant 0 : index
    %9 = vector.load %arg1[%c1, %c0_7, %c0_8, %c0_9] : memref<4x9x9x4xbf16, #tpu.memory_space<vmem>>, vector<1x9x9x4xbf16>
    %10 = vector.shape_cast %9 : vector<1x9x9x4xbf16> to vector<9x9x4xbf16>
    %11 = vector.extract_strided_slice %10 {offsets = [0, 0, 0], sizes = [8, 8, 4], strides = [1, 1, 1]} : vector<9x9x4xbf16> to vector<8x8x4xbf16>
    %12 = vector.shape_cast %11 : vector<8x8x4xbf16> to vector<64x4xbf16>
    %c1_10 = arith.constant 1 : index
    %c0_11 = arith.constant 0 : index
    %c0_12 = arith.constant 0 : index
    %13 = vector.load %arg2[%c1_10, %c0_11, %c0_12] : memref<9x4x32xbf16, #tpu.memory_space<vmem>>, vector<1x4x32xbf16>
    %14 = vector.shape_cast %13 : vector<1x4x32xbf16> to vector<4x32xbf16>
    %cst_13 = arith.constant dense<0.000000e+00> : vector<64x32xf32>
    %15 = tpu.matmul %12, %14, %cst_13 {dimension_numbers = #tpu.dot_dimension_numbers<[1], [0], [0], [1], [0, 0, 1, 1], [], []>} : vector<64x4xbf16>, vector<4x32xbf16>, vector<64x32xf32> -> vector<64x32xf32>
    %16 = arith.addf %8, %15 : vector<64x32xf32>
    %c0_14 = arith.constant 0 : index
    %c0_15 = arith.constant 0 : index
    %c0_16 = arith.constant 0 : index
    %c0_17 = arith.constant 0 : index
    %17 = vector.load %arg1[%c0_14, %c0_15, %c0_16, %c0_17] : memref<4x9x9x4xbf16, #tpu.memory_space<vmem>>, vector<1x9x9x4xbf16>
    %18 = vector.shape_cast %17 : vector<1x9x9x4xbf16> to vector<9x9x4xbf16>
    %19 = vector.extract_strided_slice %18 {offsets = [0, 1, 0], sizes = [8, 8, 4], strides = [1, 1, 1]} : vector<9x9x4xbf16> to vector<8x8x4xbf16>
    %20 = vector.shape_cast %19 : vector<8x8x4xbf16> to vector<64x4xbf16>
    %c2 = arith.constant 2 : index
    %c0_18 = arith.constant 0 : index
    %c0_19 = arith.constant 0 : index
    %21 = vector.load %arg2[%c2, %c0_18, %c0_19] : memref<9x4x32xbf16, #tpu.memory_space<vmem>>, vector<1x4x32xbf16>
    %22 = vector.shape_cast %21 : vector<1x4x32xbf16> to vector<4x32xbf16>
    %cst_20 = arith.constant dense<0.000000e+00> : vector<64x32xf32>
    %23 = tpu.matmul %20, %22, %cst_20 {dimension_numbers = #tpu.dot_dimension_numbers<[1], [0], [0], [1], [0, 0, 1, 1], [], []>} : vector<64x4xbf16>, vector<4x32xbf16>, vector<64x32xf32> -> vector<64x32xf32>
    %24 = arith.addf %16, %23 : vector<64x32xf32>
    %c2_21 = arith.constant 2 : index
    %c0_22 = arith.constant 0 : index
    %c0_23 = arith.constant 0 : index
    %c0_24 = arith.constant 0 : index
    %25 = vector.load %arg1[%c2_21, %c0_22, %c0_23, %c0_24] : memref<4x9x9x4xbf16, #tpu.memory_space<vmem>>, vector<1x9x9x4xbf16>
    %26 = vector.shape_cast %25 : vector<1x9x9x4xbf16> to vector<9x9x4xbf16>
    %27 = vector.extract_strided_slice %26 {offsets = [0, 0, 0], sizes = [8, 8, 4], strides = [1, 1, 1]} : vector<9x9x4xbf16> to vector<8x8x4xbf16>
    %28 = vector.shape_cast %27 : vector<8x8x4xbf16> to vector<64x4xbf16>
    %c3 = arith.constant 3 : index
    %c0_25 = arith.constant 0 : index
    %c0_26 = arith.constant 0 : index
    %29 = vector.load %arg2[%c3, %c0_25, %c0_26] : memref<9x4x32xbf16, #tpu.memory_space<vmem>>, vector<1x4x32xbf16>
    %30 = vector.shape_cast %29 : vector<1x4x32xbf16> to vector<4x32xbf16>
    %cst_27 = arith.constant dense<0.000000e+00> : vector<64x32xf32>
    %31 = tpu.matmul %28, %30, %cst_27 {dimension_numbers = #tpu.dot_dimension_numbers<[1], [0], [0], [1], [0, 0, 1, 1], [], []>} : vector<64x4xbf16>, vector<4x32xbf16>, vector<64x32xf32> -> vector<64x32xf32>
    %32 = arith.addf %24, %31 : vector<64x32xf32>
    %c3_28 = arith.constant 3 : index
    %c0_29 = arith.constant 0 : index
    %c0_30 = arith.constant 0 : index
    %c0_31 = arith.constant 0 : index
    %33 = vector.load %arg1[%c3_28, %c0_29, %c0_30, %c0_31] : memref<4x9x9x4xbf16, #tpu.memory_space<vmem>>, vector<1x9x9x4xbf16>
    %34 = vector.shape_cast %33 : vector<1x9x9x4xbf16> to vector<9x9x4xbf16>
    %35 = vector.extract_strided_slice %34 {offsets = [0, 0, 0], sizes = [8, 8, 4], strides = [1, 1, 1]} : vector<9x9x4xbf16> to vector<8x8x4xbf16>
    %36 = vector.shape_cast %35 : vector<8x8x4xbf16> to vector<64x4xbf16>
    %c4 = arith.constant 4 : index
    %c0_32 = arith.constant 0 : index
    %c0_33 = arith.constant 0 : index
    %37 = vector.load %arg2[%c4, %c0_32, %c0_33] : memref<9x4x32xbf16, #tpu.memory_space<vmem>>, vector<1x4x32xbf16>
    %38 = vector.shape_cast %37 : vector<1x4x32xbf16> to vector<4x32xbf16>
    %cst_34 = arith.constant dense<0.000000e+00> : vector<64x32xf32>
    %39 = tpu.matmul %36, %38, %cst_34 {dimension_numbers = #tpu.dot_dimension_numbers<[1], [0], [0], [1], [0, 0, 1, 1], [], []>} : vector<64x4xbf16>, vector<4x32xbf16>, vector<64x32xf32> -> vector<64x32xf32>
    %40 = arith.addf %32, %39 : vector<64x32xf32>
    %c2_35 = arith.constant 2 : index
    %c0_36 = arith.constant 0 : index
    %c0_37 = arith.constant 0 : index
    %c0_38 = arith.constant 0 : index
    %41 = vector.load %arg1[%c2_35, %c0_36, %c0_37, %c0_38] : memref<4x9x9x4xbf16, #tpu.memory_space<vmem>>, vector<1x9x9x4xbf16>
    %42 = vector.shape_cast %41 : vector<1x9x9x4xbf16> to vector<9x9x4xbf16>
    %43 = vector.extract_strided_slice %42 {offsets = [0, 1, 0], sizes = [8, 8, 4], strides = [1, 1, 1]} : vector<9x9x4xbf16> to vector<8x8x4xbf16>
    %44 = vector.shape_cast %43 : vector<8x8x4xbf16> to vector<64x4xbf16>
    %c5 = arith.constant 5 : index
    %c0_39 = arith.constant 0 : index
    %c0_40 = arith.constant 0 : index
    %45 = vector.load %arg2[%c5, %c0_39, %c0_40] : memref<9x4x32xbf16, #tpu.memory_space<vmem>>, vector<1x4x32xbf16>
    %46 = vector.shape_cast %45 : vector<1x4x32xbf16> to vector<4x32xbf16>
    %cst_41 = arith.constant dense<0.000000e+00> : vector<64x32xf32>
    %47 = tpu.matmul %44, %46, %cst_41 {dimension_numbers = #tpu.dot_dimension_numbers<[1], [0], [0], [1], [0, 0, 1, 1], [], []>} : vector<64x4xbf16>, vector<4x32xbf16>, vector<64x32xf32> -> vector<64x32xf32>
    %48 = arith.addf %40, %47 : vector<64x32xf32>
    %c0_42 = arith.constant 0 : index
    %c0_43 = arith.constant 0 : index
    %c0_44 = arith.constant 0 : index
    %c0_45 = arith.constant 0 : index
    %49 = vector.load %arg1[%c0_42, %c0_43, %c0_44, %c0_45] : memref<4x9x9x4xbf16, #tpu.memory_space<vmem>>, vector<1x9x9x4xbf16>
    %50 = vector.shape_cast %49 : vector<1x9x9x4xbf16> to vector<9x9x4xbf16>
    %51 = vector.extract_strided_slice %50 {offsets = [1, 0, 0], sizes = [8, 8, 4], strides = [1, 1, 1]} : vector<9x9x4xbf16> to vector<8x8x4xbf16>
    %52 = vector.shape_cast %51 : vector<8x8x4xbf16> to vector<64x4xbf16>
    %c6 = arith.constant 6 : index
    %c0_46 = arith.constant 0 : index
    %c0_47 = arith.constant 0 : index
    %53 = vector.load %arg2[%c6, %c0_46, %c0_47] : memref<9x4x32xbf16, #tpu.memory_space<vmem>>, vector<1x4x32xbf16>
    %54 = vector.shape_cast %53 : vector<1x4x32xbf16> to vector<4x32xbf16>
    %cst_48 = arith.constant dense<0.000000e+00> : vector<64x32xf32>
    %55 = tpu.matmul %52, %54, %cst_48 {dimension_numbers = #tpu.dot_dimension_numbers<[1], [0], [0], [1], [0, 0, 1, 1], [], []>} : vector<64x4xbf16>, vector<4x32xbf16>, vector<64x32xf32> -> vector<64x32xf32>
    %56 = arith.addf %48, %55 : vector<64x32xf32>
    %c1_49 = arith.constant 1 : index
    %c0_50 = arith.constant 0 : index
    %c0_51 = arith.constant 0 : index
    %c0_52 = arith.constant 0 : index
    %57 = vector.load %arg1[%c1_49, %c0_50, %c0_51, %c0_52] : memref<4x9x9x4xbf16, #tpu.memory_space<vmem>>, vector<1x9x9x4xbf16>
    %58 = vector.shape_cast %57 : vector<1x9x9x4xbf16> to vector<9x9x4xbf16>
    %59 = vector.extract_strided_slice %58 {offsets = [1, 0, 0], sizes = [8, 8, 4], strides = [1, 1, 1]} : vector<9x9x4xbf16> to vector<8x8x4xbf16>
    %60 = vector.shape_cast %59 : vector<8x8x4xbf16> to vector<64x4xbf16>
    %c7 = arith.constant 7 : index
    %c0_53 = arith.constant 0 : index
    %c0_54 = arith.constant 0 : index
    %61 = vector.load %arg2[%c7, %c0_53, %c0_54] : memref<9x4x32xbf16, #tpu.memory_space<vmem>>, vector<1x4x32xbf16>
    %62 = vector.shape_cast %61 : vector<1x4x32xbf16> to vector<4x32xbf16>
    %cst_55 = arith.constant dense<0.000000e+00> : vector<64x32xf32>
    %63 = tpu.matmul %60, %62, %cst_55 {dimension_numbers = #tpu.dot_dimension_numbers<[1], [0], [0], [1], [0, 0, 1, 1], [], []>} : vector<64x4xbf16>, vector<4x32xbf16>, vector<64x32xf32> -> vector<64x32xf32>
    %64 = arith.addf %56, %63 : vector<64x32xf32>
    %c0_56 = arith.constant 0 : index
    %c0_57 = arith.constant 0 : index
    %c0_58 = arith.constant 0 : index
    %c0_59 = arith.constant 0 : index
    %65 = vector.load %arg1[%c0_56, %c0_57, %c0_58, %c0_59] : memref<4x9x9x4xbf16, #tpu.memory_space<vmem>>, vector<1x9x9x4xbf16>
    %66 = vector.shape_cast %65 : vector<1x9x9x4xbf16> to vector<9x9x4xbf16>
    %67 = vector.extract_strided_slice %66 {offsets = [1, 1, 0], sizes = [8, 8, 4], strides = [1, 1, 1]} : vector<9x9x4xbf16> to vector<8x8x4xbf16>
    %68 = vector.shape_cast %67 : vector<8x8x4xbf16> to vector<64x4xbf16>
    %c8 = arith.constant 8 : index
    %c0_60 = arith.constant 0 : index
    %c0_61 = arith.constant 0 : index
    %69 = vector.load %arg2[%c8, %c0_60, %c0_61] : memref<9x4x32xbf16, #tpu.memory_space<vmem>>, vector<1x4x32xbf16>
    %70 = vector.shape_cast %69 : vector<1x4x32xbf16> to vector<4x32xbf16>
    %cst_62 = arith.constant dense<0.000000e+00> : vector<64x32xf32>
    %71 = tpu.matmul %68, %70, %cst_62 {dimension_numbers = #tpu.dot_dimension_numbers<[1], [0], [0], [1], [0, 0, 1, 1], [], []>} : vector<64x4xbf16>, vector<4x32xbf16>, vector<64x32xf32> -> vector<64x32xf32>
    %72 = arith.addf %64, %71 : vector<64x32xf32>
    %c0_63 = arith.constant 0 : index
    %c0_64 = arith.constant 0 : index
    %73 = vector.load %arg3[%c0_63, %c0_64] : memref<1x32xf32, #tpu.memory_space<vmem>>, vector<1x32xf32>
    %74 = vector.broadcast %73 : vector<1x32xf32> to vector<64x32xf32>
    %75 = arith.addf %72, %74 : vector<64x32xf32>
    %cst_65 = arith.constant 0.000000e+00 : f32
    %76 = vector.broadcast %cst_65 : f32 to vector<64x32xf32>
    %77 = arith.cmpf oge, %75, %76 : vector<64x32xf32>
    %cst_66 = arith.constant 0.00999999977 : f32
    %78 = vector.broadcast %cst_66 : f32 to vector<64x32xf32>
    %79 = arith.mulf %78, %75 : vector<64x32xf32>
    %80 = arith.select %77, %75, %79 : vector<64x32xi1>, vector<64x32xf32>
    %81 = vector.shape_cast %80 : vector<64x32xf32> to vector<1x8x8x32xf32>
    %82 = arith.truncf %81 : vector<1x8x8x32xf32> to vector<1x8x8x32xbf16>
    %c0_67 = arith.constant 0 : index
    %c0_68 = arith.constant 0 : index
    %c0_69 = arith.constant 0 : index
    %c0_70 = arith.constant 0 : index
    %83 = vector.load %arg4[%c0_67, %c0_68, %c0_69, %c0_70] : memref<1x8x8x32xbf16, #tpu.memory_space<vmem>>, vector<1x8x8x32xbf16>
    tpu.vector_store %arg4[%c0_67, %c0_68, %c0_69, %c0_70], %82 {strides = array<i32>} : memref<1x8x8x32xbf16, #tpu.memory_space<vmem>>, vector<1x8x8x32xbf16>,
    return
  }
  func.func @transform_0(%arg0: i32) -> (i32, i32, i32, i32) {
    %c0_i32 = arith.constant 0 : i32
    %c0_i32_0 = arith.constant 0 : i32
    %c0_i32_1 = arith.constant 0 : i32
    %c0_i32_2 = arith.constant 0 : i32
    return %arg0, %c0_i32, %c0_i32_0, %c0_i32_1 : i32, i32, i32, i32
  }
  func.func @transform_1(%arg0: i32) -> (i32, i32, i32) {
    %c0_i32 = arith.constant 0 : i32
    %c0_i32_0 = arith.constant 0 : i32
    %c0_i32_1 = arith.constant 0 : i32
    %c0_i32_2 = arith.constant 0 : i32
    return %c0_i32, %c0_i32_0, %c0_i32_1 : i32, i32, i32
  }
  func.func @transform_2(%arg0: i32) -> (i32, i32) {
    %c0_i32 = arith.constant 0 : i32
    %c0_i32_0 = arith.constant 0 : i32
    %c0_i32_1 = arith.constant 0 : i32
    return %c0_i32, %c0_i32_0 : i32, i32
  }
  func.func @transform_3(%arg0: i32) -> (i32, i32, i32, i32) {
    %c0_i32 = arith.constant 0 : i32
    %c0_i32_0 = arith.constant 0 : i32
    %c0_i32_1 = arith.constant 0 : i32
    %c0_i32_2 = arith.constant 0 : i32
    return %arg0, %c0_i32, %c0_i32_0, %c0_i32_1 : i32, i32, i32, i32
  }
}

module attributes {stable_mosaic.version = 11 : i64} {
  func.func @_conv_lrelu_kernel(%arg0: i32, %arg1: memref<4x5x5x32xbf16, #tpu.memory_space<vmem>>, %arg2: memref<9x32x32xbf16, #tpu.memory_space<vmem>>, %arg3: memref<1x32xf32, #tpu.memory_space<vmem>>, %arg4: memref<1x4x4x32xbf16, #tpu.memory_space<vmem>>) attributes {dimension_semantics = [#tpu.dimension_semantics<parallel>], iteration_bounds = array<i64: 2>, scalar_prefetch = 0 : i64, scratch_operands = 0 : i64, tpu.core_type = #tpu.core_type<tc>, window_params = [{transform_indices = @transform_0, window_bounds = array<i64: 4, 5, 5, 32>}, {pipeline_mode = #tpu.pipeline_mode<synchronous>, transform_indices = @transform_1, window_bounds = array<i64: 9, 32, 32>}, {pipeline_mode = #tpu.pipeline_mode<synchronous>, transform_indices = @transform_2, window_bounds = array<i64: 1, 32>}, {transform_indices = @transform_3, window_bounds = array<i64: 1, 4, 4, 32>}]} {
    %cst = arith.constant 0.000000e+00 : f32
    %0 = vector.broadcast %cst : f32 to vector<16x32xf32>
    %c0 = arith.constant 0 : index
    %c0_0 = arith.constant 0 : index
    %c0_1 = arith.constant 0 : index
    %c0_2 = arith.constant 0 : index
    %1 = vector.load %arg1[%c0, %c0_0, %c0_1, %c0_2] : memref<4x5x5x32xbf16, #tpu.memory_space<vmem>>, vector<1x5x5x32xbf16>
    %2 = vector.shape_cast %1 : vector<1x5x5x32xbf16> to vector<5x5x32xbf16>
    %3 = vector.extract_strided_slice %2 {offsets = [0, 0, 0], sizes = [4, 4, 32], strides = [1, 1, 1]} : vector<5x5x32xbf16> to vector<4x4x32xbf16>
    %4 = vector.shape_cast %3 : vector<4x4x32xbf16> to vector<16x32xbf16>
    %c0_3 = arith.constant 0 : index
    %c0_4 = arith.constant 0 : index
    %c0_5 = arith.constant 0 : index
    %5 = vector.load %arg2[%c0_3, %c0_4, %c0_5] : memref<9x32x32xbf16, #tpu.memory_space<vmem>>, vector<1x32x32xbf16>
    %6 = vector.shape_cast %5 : vector<1x32x32xbf16> to vector<32x32xbf16>
    %cst_6 = arith.constant dense<0.000000e+00> : vector<16x32xf32>
    %7 = tpu.matmul %4, %6, %cst_6 {dimension_numbers = #tpu.dot_dimension_numbers<[1], [0], [0], [1], [0, 0, 1, 1], [], []>} : vector<16x32xbf16>, vector<32x32xbf16>, vector<16x32xf32> -> vector<16x32xf32>
    %8 = arith.addf %0, %7 : vector<16x32xf32>
    %c1 = arith.constant 1 : index
    %c0_7 = arith.constant 0 : index
    %c0_8 = arith.constant 0 : index
    %c0_9 = arith.constant 0 : index
    %9 = vector.load %arg1[%c1, %c0_7, %c0_8, %c0_9] : memref<4x5x5x32xbf16, #tpu.memory_space<vmem>>, vector<1x5x5x32xbf16>
    %10 = vector.shape_cast %9 : vector<1x5x5x32xbf16> to vector<5x5x32xbf16>
    %11 = vector.extract_strided_slice %10 {offsets = [0, 0, 0], sizes = [4, 4, 32], strides = [1, 1, 1]} : vector<5x5x32xbf16> to vector<4x4x32xbf16>
    %12 = vector.shape_cast %11 : vector<4x4x32xbf16> to vector<16x32xbf16>
    %c1_10 = arith.constant 1 : index
    %c0_11 = arith.constant 0 : index
    %c0_12 = arith.constant 0 : index
    %13 = vector.load %arg2[%c1_10, %c0_11, %c0_12] : memref<9x32x32xbf16, #tpu.memory_space<vmem>>, vector<1x32x32xbf16>
    %14 = vector.shape_cast %13 : vector<1x32x32xbf16> to vector<32x32xbf16>
    %cst_13 = arith.constant dense<0.000000e+00> : vector<16x32xf32>
    %15 = tpu.matmul %12, %14, %cst_13 {dimension_numbers = #tpu.dot_dimension_numbers<[1], [0], [0], [1], [0, 0, 1, 1], [], []>} : vector<16x32xbf16>, vector<32x32xbf16>, vector<16x32xf32> -> vector<16x32xf32>
    %16 = arith.addf %8, %15 : vector<16x32xf32>
    %c0_14 = arith.constant 0 : index
    %c0_15 = arith.constant 0 : index
    %c0_16 = arith.constant 0 : index
    %c0_17 = arith.constant 0 : index
    %17 = vector.load %arg1[%c0_14, %c0_15, %c0_16, %c0_17] : memref<4x5x5x32xbf16, #tpu.memory_space<vmem>>, vector<1x5x5x32xbf16>
    %18 = vector.shape_cast %17 : vector<1x5x5x32xbf16> to vector<5x5x32xbf16>
    %19 = vector.extract_strided_slice %18 {offsets = [0, 1, 0], sizes = [4, 4, 32], strides = [1, 1, 1]} : vector<5x5x32xbf16> to vector<4x4x32xbf16>
    %20 = vector.shape_cast %19 : vector<4x4x32xbf16> to vector<16x32xbf16>
    %c2 = arith.constant 2 : index
    %c0_18 = arith.constant 0 : index
    %c0_19 = arith.constant 0 : index
    %21 = vector.load %arg2[%c2, %c0_18, %c0_19] : memref<9x32x32xbf16, #tpu.memory_space<vmem>>, vector<1x32x32xbf16>
    %22 = vector.shape_cast %21 : vector<1x32x32xbf16> to vector<32x32xbf16>
    %cst_20 = arith.constant dense<0.000000e+00> : vector<16x32xf32>
    %23 = tpu.matmul %20, %22, %cst_20 {dimension_numbers = #tpu.dot_dimension_numbers<[1], [0], [0], [1], [0, 0, 1, 1], [], []>} : vector<16x32xbf16>, vector<32x32xbf16>, vector<16x32xf32> -> vector<16x32xf32>
    %24 = arith.addf %16, %23 : vector<16x32xf32>
    %c2_21 = arith.constant 2 : index
    %c0_22 = arith.constant 0 : index
    %c0_23 = arith.constant 0 : index
    %c0_24 = arith.constant 0 : index
    %25 = vector.load %arg1[%c2_21, %c0_22, %c0_23, %c0_24] : memref<4x5x5x32xbf16, #tpu.memory_space<vmem>>, vector<1x5x5x32xbf16>
    %26 = vector.shape_cast %25 : vector<1x5x5x32xbf16> to vector<5x5x32xbf16>
    %27 = vector.extract_strided_slice %26 {offsets = [0, 0, 0], sizes = [4, 4, 32], strides = [1, 1, 1]} : vector<5x5x32xbf16> to vector<4x4x32xbf16>
    %28 = vector.shape_cast %27 : vector<4x4x32xbf16> to vector<16x32xbf16>
    %c3 = arith.constant 3 : index
    %c0_25 = arith.constant 0 : index
    %c0_26 = arith.constant 0 : index
    %29 = vector.load %arg2[%c3, %c0_25, %c0_26] : memref<9x32x32xbf16, #tpu.memory_space<vmem>>, vector<1x32x32xbf16>
    %30 = vector.shape_cast %29 : vector<1x32x32xbf16> to vector<32x32xbf16>
    %cst_27 = arith.constant dense<0.000000e+00> : vector<16x32xf32>
    %31 = tpu.matmul %28, %30, %cst_27 {dimension_numbers = #tpu.dot_dimension_numbers<[1], [0], [0], [1], [0, 0, 1, 1], [], []>} : vector<16x32xbf16>, vector<32x32xbf16>, vector<16x32xf32> -> vector<16x32xf32>
    %32 = arith.addf %24, %31 : vector<16x32xf32>
    %c3_28 = arith.constant 3 : index
    %c0_29 = arith.constant 0 : index
    %c0_30 = arith.constant 0 : index
    %c0_31 = arith.constant 0 : index
    %33 = vector.load %arg1[%c3_28, %c0_29, %c0_30, %c0_31] : memref<4x5x5x32xbf16, #tpu.memory_space<vmem>>, vector<1x5x5x32xbf16>
    %34 = vector.shape_cast %33 : vector<1x5x5x32xbf16> to vector<5x5x32xbf16>
    %35 = vector.extract_strided_slice %34 {offsets = [0, 0, 0], sizes = [4, 4, 32], strides = [1, 1, 1]} : vector<5x5x32xbf16> to vector<4x4x32xbf16>
    %36 = vector.shape_cast %35 : vector<4x4x32xbf16> to vector<16x32xbf16>
    %c4 = arith.constant 4 : index
    %c0_32 = arith.constant 0 : index
    %c0_33 = arith.constant 0 : index
    %37 = vector.load %arg2[%c4, %c0_32, %c0_33] : memref<9x32x32xbf16, #tpu.memory_space<vmem>>, vector<1x32x32xbf16>
    %38 = vector.shape_cast %37 : vector<1x32x32xbf16> to vector<32x32xbf16>
    %cst_34 = arith.constant dense<0.000000e+00> : vector<16x32xf32>
    %39 = tpu.matmul %36, %38, %cst_34 {dimension_numbers = #tpu.dot_dimension_numbers<[1], [0], [0], [1], [0, 0, 1, 1], [], []>} : vector<16x32xbf16>, vector<32x32xbf16>, vector<16x32xf32> -> vector<16x32xf32>
    %40 = arith.addf %32, %39 : vector<16x32xf32>
    %c2_35 = arith.constant 2 : index
    %c0_36 = arith.constant 0 : index
    %c0_37 = arith.constant 0 : index
    %c0_38 = arith.constant 0 : index
    %41 = vector.load %arg1[%c2_35, %c0_36, %c0_37, %c0_38] : memref<4x5x5x32xbf16, #tpu.memory_space<vmem>>, vector<1x5x5x32xbf16>
    %42 = vector.shape_cast %41 : vector<1x5x5x32xbf16> to vector<5x5x32xbf16>
    %43 = vector.extract_strided_slice %42 {offsets = [0, 1, 0], sizes = [4, 4, 32], strides = [1, 1, 1]} : vector<5x5x32xbf16> to vector<4x4x32xbf16>
    %44 = vector.shape_cast %43 : vector<4x4x32xbf16> to vector<16x32xbf16>
    %c5 = arith.constant 5 : index
    %c0_39 = arith.constant 0 : index
    %c0_40 = arith.constant 0 : index
    %45 = vector.load %arg2[%c5, %c0_39, %c0_40] : memref<9x32x32xbf16, #tpu.memory_space<vmem>>, vector<1x32x32xbf16>
    %46 = vector.shape_cast %45 : vector<1x32x32xbf16> to vector<32x32xbf16>
    %cst_41 = arith.constant dense<0.000000e+00> : vector<16x32xf32>
    %47 = tpu.matmul %44, %46, %cst_41 {dimension_numbers = #tpu.dot_dimension_numbers<[1], [0], [0], [1], [0, 0, 1, 1], [], []>} : vector<16x32xbf16>, vector<32x32xbf16>, vector<16x32xf32> -> vector<16x32xf32>
    %48 = arith.addf %40, %47 : vector<16x32xf32>
    %c0_42 = arith.constant 0 : index
    %c0_43 = arith.constant 0 : index
    %c0_44 = arith.constant 0 : index
    %c0_45 = arith.constant 0 : index
    %49 = vector.load %arg1[%c0_42, %c0_43, %c0_44, %c0_45] : memref<4x5x5x32xbf16, #tpu.memory_space<vmem>>, vector<1x5x5x32xbf16>
    %50 = vector.shape_cast %49 : vector<1x5x5x32xbf16> to vector<5x5x32xbf16>
    %51 = vector.extract_strided_slice %50 {offsets = [1, 0, 0], sizes = [4, 4, 32], strides = [1, 1, 1]} : vector<5x5x32xbf16> to vector<4x4x32xbf16>
    %52 = vector.shape_cast %51 : vector<4x4x32xbf16> to vector<16x32xbf16>
    %c6 = arith.constant 6 : index
    %c0_46 = arith.constant 0 : index
    %c0_47 = arith.constant 0 : index
    %53 = vector.load %arg2[%c6, %c0_46, %c0_47] : memref<9x32x32xbf16, #tpu.memory_space<vmem>>, vector<1x32x32xbf16>
    %54 = vector.shape_cast %53 : vector<1x32x32xbf16> to vector<32x32xbf16>
    %cst_48 = arith.constant dense<0.000000e+00> : vector<16x32xf32>
    %55 = tpu.matmul %52, %54, %cst_48 {dimension_numbers = #tpu.dot_dimension_numbers<[1], [0], [0], [1], [0, 0, 1, 1], [], []>} : vector<16x32xbf16>, vector<32x32xbf16>, vector<16x32xf32> -> vector<16x32xf32>
    %56 = arith.addf %48, %55 : vector<16x32xf32>
    %c1_49 = arith.constant 1 : index
    %c0_50 = arith.constant 0 : index
    %c0_51 = arith.constant 0 : index
    %c0_52 = arith.constant 0 : index
    %57 = vector.load %arg1[%c1_49, %c0_50, %c0_51, %c0_52] : memref<4x5x5x32xbf16, #tpu.memory_space<vmem>>, vector<1x5x5x32xbf16>
    %58 = vector.shape_cast %57 : vector<1x5x5x32xbf16> to vector<5x5x32xbf16>
    %59 = vector.extract_strided_slice %58 {offsets = [1, 0, 0], sizes = [4, 4, 32], strides = [1, 1, 1]} : vector<5x5x32xbf16> to vector<4x4x32xbf16>
    %60 = vector.shape_cast %59 : vector<4x4x32xbf16> to vector<16x32xbf16>
    %c7 = arith.constant 7 : index
    %c0_53 = arith.constant 0 : index
    %c0_54 = arith.constant 0 : index
    %61 = vector.load %arg2[%c7, %c0_53, %c0_54] : memref<9x32x32xbf16, #tpu.memory_space<vmem>>, vector<1x32x32xbf16>
    %62 = vector.shape_cast %61 : vector<1x32x32xbf16> to vector<32x32xbf16>
    %cst_55 = arith.constant dense<0.000000e+00> : vector<16x32xf32>
    %63 = tpu.matmul %60, %62, %cst_55 {dimension_numbers = #tpu.dot_dimension_numbers<[1], [0], [0], [1], [0, 0, 1, 1], [], []>} : vector<16x32xbf16>, vector<32x32xbf16>, vector<16x32xf32> -> vector<16x32xf32>
    %64 = arith.addf %56, %63 : vector<16x32xf32>
    %c0_56 = arith.constant 0 : index
    %c0_57 = arith.constant 0 : index
    %c0_58 = arith.constant 0 : index
    %c0_59 = arith.constant 0 : index
    %65 = vector.load %arg1[%c0_56, %c0_57, %c0_58, %c0_59] : memref<4x5x5x32xbf16, #tpu.memory_space<vmem>>, vector<1x5x5x32xbf16>
    %66 = vector.shape_cast %65 : vector<1x5x5x32xbf16> to vector<5x5x32xbf16>
    %67 = vector.extract_strided_slice %66 {offsets = [1, 1, 0], sizes = [4, 4, 32], strides = [1, 1, 1]} : vector<5x5x32xbf16> to vector<4x4x32xbf16>
    %68 = vector.shape_cast %67 : vector<4x4x32xbf16> to vector<16x32xbf16>
    %c8 = arith.constant 8 : index
    %c0_60 = arith.constant 0 : index
    %c0_61 = arith.constant 0 : index
    %69 = vector.load %arg2[%c8, %c0_60, %c0_61] : memref<9x32x32xbf16, #tpu.memory_space<vmem>>, vector<1x32x32xbf16>
    %70 = vector.shape_cast %69 : vector<1x32x32xbf16> to vector<32x32xbf16>
    %cst_62 = arith.constant dense<0.000000e+00> : vector<16x32xf32>
    %71 = tpu.matmul %68, %70, %cst_62 {dimension_numbers = #tpu.dot_dimension_numbers<[1], [0], [0], [1], [0, 0, 1, 1], [], []>} : vector<16x32xbf16>, vector<32x32xbf16>, vector<16x32xf32> -> vector<16x32xf32>
    %72 = arith.addf %64, %71 : vector<16x32xf32>
    %c0_63 = arith.constant 0 : index
    %c0_64 = arith.constant 0 : index
    %73 = vector.load %arg3[%c0_63, %c0_64] : memref<1x32xf32, #tpu.memory_space<vmem>>, vector<1x32xf32>
    %74 = vector.broadcast %73 : vector<1x32xf32> to vector<16x32xf32>
    %75 = arith.addf %72, %74 : vector<16x32xf32>
    %cst_65 = arith.constant 0.000000e+00 : f32
    %76 = vector.broadcast %cst_65 : f32 to vector<16x32xf32>
    %77 = arith.cmpf oge, %75, %76 : vector<16x32xf32>
    %cst_66 = arith.constant 0.00999999977 : f32
    %78 = vector.broadcast %cst_66 : f32 to vector<16x32xf32>
    %79 = arith.mulf %78, %75 : vector<16x32xf32>
    %80 = arith.select %77, %75, %79 : vector<16x32xi1>, vector<16x32xf32>
    %81 = vector.shape_cast %80 : vector<16x32xf32> to vector<1x4x4x32xf32>
    %82 = arith.truncf %81 : vector<1x4x4x32xf32> to vector<1x4x4x32xbf16>
    %c0_67 = arith.constant 0 : index
    %c0_68 = arith.constant 0 : index
    %c0_69 = arith.constant 0 : index
    %c0_70 = arith.constant 0 : index
    %83 = vector.load %arg4[%c0_67, %c0_68, %c0_69, %c0_70] : memref<1x4x4x32xbf16, #tpu.memory_space<vmem>>, vector<1x4x4x32xbf16>
    tpu.vector_store %arg4[%c0_67, %c0_68, %c0_69, %c0_70], %82 {strides = array<i32>} : memref<1x4x4x32xbf16, #tpu.memory_space<vmem>>, vector<1x4x4x32xbf16>,
    return
  }
  func.func @transform_0(%arg0: i32) -> (i32, i32, i32, i32) {
    %c0_i32 = arith.constant 0 : i32
    %c0_i32_0 = arith.constant 0 : i32
    %c0_i32_1 = arith.constant 0 : i32
    %c0_i32_2 = arith.constant 0 : i32
    return %arg0, %c0_i32, %c0_i32_0, %c0_i32_1 : i32, i32, i32, i32
  }
  func.func @transform_1(%arg0: i32) -> (i32, i32, i32) {
    %c0_i32 = arith.constant 0 : i32
    %c0_i32_0 = arith.constant 0 : i32
    %c0_i32_1 = arith.constant 0 : i32
    %c0_i32_2 = arith.constant 0 : i32
    return %c0_i32, %c0_i32_0, %c0_i32_1 : i32, i32, i32
  }
  func.func @transform_2(%arg0: i32) -> (i32, i32) {
    %c0_i32 = arith.constant 0 : i32
    %c0_i32_0 = arith.constant 0 : i32
    %c0_i32_1 = arith.constant 0 : i32
    return %c0_i32, %c0_i32_0 : i32, i32
  }
  func.func @transform_3(%arg0: i32) -> (i32, i32, i32, i32) {
    %c0_i32 = arith.constant 0 : i32
    %c0_i32_0 = arith.constant 0 : i32
    %c0_i32_1 = arith.constant 0 : i32
    %c0_i32_2 = arith.constant 0 : i32
    return %arg0, %c0_i32, %c0_i32_0, %c0_i32_1 : i32, i32, i32, i32
  }
}

module attributes {stable_mosaic.version = 11 : i64} {
  func.func @_tail_kernel(%arg0: i32, %arg1: memref<4x3x3x32xbf16, #tpu.memory_space<vmem>>, %arg2: memref<9x32x32xbf16, #tpu.memory_space<vmem>>, %arg3: memref<1x32xf32, #tpu.memory_space<vmem>>, %arg4: memref<4x32x32xf32, #tpu.memory_space<vmem>>, %arg5: memref<1x32xf32, #tpu.memory_space<vmem>>, %arg6: memref<32x32xf32, #tpu.memory_space<vmem>>, %arg7: memref<1x32xf32, #tpu.memory_space<vmem>>, %arg8: memref<1x1x32xf32, #tpu.memory_space<vmem>>) attributes {dimension_semantics = [#tpu.dimension_semantics<parallel>], iteration_bounds = array<i64: 2>, scalar_prefetch = 0 : i64, scratch_operands = 0 : i64, tpu.core_type = #tpu.core_type<tc>, window_params = [{transform_indices = @transform_0, window_bounds = array<i64: 4, 3, 3, 32>}, {pipeline_mode = #tpu.pipeline_mode<synchronous>, transform_indices = @transform_1, window_bounds = array<i64: 9, 32, 32>}, {pipeline_mode = #tpu.pipeline_mode<synchronous>, transform_indices = @transform_2, window_bounds = array<i64: 1, 32>}, {pipeline_mode = #tpu.pipeline_mode<synchronous>, transform_indices = @transform_3, window_bounds = array<i64: 4, 32, 32>}, {pipeline_mode = #tpu.pipeline_mode<synchronous>, transform_indices = @transform_4, window_bounds = array<i64: 1, 32>}, {pipeline_mode = #tpu.pipeline_mode<synchronous>, transform_indices = @transform_5, window_bounds = array<i64: 32, 32>}, {pipeline_mode = #tpu.pipeline_mode<synchronous>, transform_indices = @transform_6, window_bounds = array<i64: 1, 32>}, {transform_indices = @transform_7, window_bounds = array<i64: 1, 1, 32>}]} {
    %cst = arith.constant 0.000000e+00 : f32
    %0 = vector.broadcast %cst : f32 to vector<4x32xf32>
    %c0 = arith.constant 0 : index
    %c0_0 = arith.constant 0 : index
    %c0_1 = arith.constant 0 : index
    %c0_2 = arith.constant 0 : index
    %1 = vector.load %arg1[%c0, %c0_0, %c0_1, %c0_2] : memref<4x3x3x32xbf16, #tpu.memory_space<vmem>>, vector<1x3x3x32xbf16>
    %2 = vector.shape_cast %1 : vector<1x3x3x32xbf16> to vector<3x3x32xbf16>
    %3 = vector.extract_strided_slice %2 {offsets = [0, 0, 0], sizes = [2, 2, 32], strides = [1, 1, 1]} : vector<3x3x32xbf16> to vector<2x2x32xbf16>
    %4 = vector.shape_cast %3 : vector<2x2x32xbf16> to vector<4x32xbf16>
    %c0_3 = arith.constant 0 : index
    %c0_4 = arith.constant 0 : index
    %c0_5 = arith.constant 0 : index
    %5 = vector.load %arg2[%c0_3, %c0_4, %c0_5] : memref<9x32x32xbf16, #tpu.memory_space<vmem>>, vector<1x32x32xbf16>
    %6 = vector.shape_cast %5 : vector<1x32x32xbf16> to vector<32x32xbf16>
    %cst_6 = arith.constant dense<0.000000e+00> : vector<4x32xf32>
    %7 = tpu.matmul %4, %6, %cst_6 {dimension_numbers = #tpu.dot_dimension_numbers<[1], [0], [0], [1], [0, 0, 1, 1], [], []>} : vector<4x32xbf16>, vector<32x32xbf16>, vector<4x32xf32> -> vector<4x32xf32>
    %8 = arith.addf %0, %7 : vector<4x32xf32>
    %c1 = arith.constant 1 : index
    %c0_7 = arith.constant 0 : index
    %c0_8 = arith.constant 0 : index
    %c0_9 = arith.constant 0 : index
    %9 = vector.load %arg1[%c1, %c0_7, %c0_8, %c0_9] : memref<4x3x3x32xbf16, #tpu.memory_space<vmem>>, vector<1x3x3x32xbf16>
    %10 = vector.shape_cast %9 : vector<1x3x3x32xbf16> to vector<3x3x32xbf16>
    %11 = vector.extract_strided_slice %10 {offsets = [0, 0, 0], sizes = [2, 2, 32], strides = [1, 1, 1]} : vector<3x3x32xbf16> to vector<2x2x32xbf16>
    %12 = vector.shape_cast %11 : vector<2x2x32xbf16> to vector<4x32xbf16>
    %c1_10 = arith.constant 1 : index
    %c0_11 = arith.constant 0 : index
    %c0_12 = arith.constant 0 : index
    %13 = vector.load %arg2[%c1_10, %c0_11, %c0_12] : memref<9x32x32xbf16, #tpu.memory_space<vmem>>, vector<1x32x32xbf16>
    %14 = vector.shape_cast %13 : vector<1x32x32xbf16> to vector<32x32xbf16>
    %cst_13 = arith.constant dense<0.000000e+00> : vector<4x32xf32>
    %15 = tpu.matmul %12, %14, %cst_13 {dimension_numbers = #tpu.dot_dimension_numbers<[1], [0], [0], [1], [0, 0, 1, 1], [], []>} : vector<4x32xbf16>, vector<32x32xbf16>, vector<4x32xf32> -> vector<4x32xf32>
    %16 = arith.addf %8, %15 : vector<4x32xf32>
    %c0_14 = arith.constant 0 : index
    %c0_15 = arith.constant 0 : index
    %c0_16 = arith.constant 0 : index
    %c0_17 = arith.constant 0 : index
    %17 = vector.load %arg1[%c0_14, %c0_15, %c0_16, %c0_17] : memref<4x3x3x32xbf16, #tpu.memory_space<vmem>>, vector<1x3x3x32xbf16>
    %18 = vector.shape_cast %17 : vector<1x3x3x32xbf16> to vector<3x3x32xbf16>
    %19 = vector.extract_strided_slice %18 {offsets = [0, 1, 0], sizes = [2, 2, 32], strides = [1, 1, 1]} : vector<3x3x32xbf16> to vector<2x2x32xbf16>
    %20 = vector.shape_cast %19 : vector<2x2x32xbf16> to vector<4x32xbf16>
    %c2 = arith.constant 2 : index
    %c0_18 = arith.constant 0 : index
    %c0_19 = arith.constant 0 : index
    %21 = vector.load %arg2[%c2, %c0_18, %c0_19] : memref<9x32x32xbf16, #tpu.memory_space<vmem>>, vector<1x32x32xbf16>
    %22 = vector.shape_cast %21 : vector<1x32x32xbf16> to vector<32x32xbf16>
    %cst_20 = arith.constant dense<0.000000e+00> : vector<4x32xf32>
    %23 = tpu.matmul %20, %22, %cst_20 {dimension_numbers = #tpu.dot_dimension_numbers<[1], [0], [0], [1], [0, 0, 1, 1], [], []>} : vector<4x32xbf16>, vector<32x32xbf16>, vector<4x32xf32> -> vector<4x32xf32>
    %24 = arith.addf %16, %23 : vector<4x32xf32>
    %c2_21 = arith.constant 2 : index
    %c0_22 = arith.constant 0 : index
    %c0_23 = arith.constant 0 : index
    %c0_24 = arith.constant 0 : index
    %25 = vector.load %arg1[%c2_21, %c0_22, %c0_23, %c0_24] : memref<4x3x3x32xbf16, #tpu.memory_space<vmem>>, vector<1x3x3x32xbf16>
    %26 = vector.shape_cast %25 : vector<1x3x3x32xbf16> to vector<3x3x32xbf16>
    %27 = vector.extract_strided_slice %26 {offsets = [0, 0, 0], sizes = [2, 2, 32], strides = [1, 1, 1]} : vector<3x3x32xbf16> to vector<2x2x32xbf16>
    %28 = vector.shape_cast %27 : vector<2x2x32xbf16> to vector<4x32xbf16>
    %c3 = arith.constant 3 : index
    %c0_25 = arith.constant 0 : index
    %c0_26 = arith.constant 0 : index
    %29 = vector.load %arg2[%c3, %c0_25, %c0_26] : memref<9x32x32xbf16, #tpu.memory_space<vmem>>, vector<1x32x32xbf16>
    %30 = vector.shape_cast %29 : vector<1x32x32xbf16> to vector<32x32xbf16>
    %cst_27 = arith.constant dense<0.000000e+00> : vector<4x32xf32>
    %31 = tpu.matmul %28, %30, %cst_27 {dimension_numbers = #tpu.dot_dimension_numbers<[1], [0], [0], [1], [0, 0, 1, 1], [], []>} : vector<4x32xbf16>, vector<32x32xbf16>, vector<4x32xf32> -> vector<4x32xf32>
    %32 = arith.addf %24, %31 : vector<4x32xf32>
    %c3_28 = arith.constant 3 : index
    %c0_29 = arith.constant 0 : index
    %c0_30 = arith.constant 0 : index
    %c0_31 = arith.constant 0 : index
    %33 = vector.load %arg1[%c3_28, %c0_29, %c0_30, %c0_31] : memref<4x3x3x32xbf16, #tpu.memory_space<vmem>>, vector<1x3x3x32xbf16>
    %34 = vector.shape_cast %33 : vector<1x3x3x32xbf16> to vector<3x3x32xbf16>
    %35 = vector.extract_strided_slice %34 {offsets = [0, 0, 0], sizes = [2, 2, 32], strides = [1, 1, 1]} : vector<3x3x32xbf16> to vector<2x2x32xbf16>
    %36 = vector.shape_cast %35 : vector<2x2x32xbf16> to vector<4x32xbf16>
    %c4 = arith.constant 4 : index
    %c0_32 = arith.constant 0 : index
    %c0_33 = arith.constant 0 : index
    %37 = vector.load %arg2[%c4, %c0_32, %c0_33] : memref<9x32x32xbf16, #tpu.memory_space<vmem>>, vector<1x32x32xbf16>
    %38 = vector.shape_cast %37 : vector<1x32x32xbf16> to vector<32x32xbf16>
    %cst_34 = arith.constant dense<0.000000e+00> : vector<4x32xf32>
    %39 = tpu.matmul %36, %38, %cst_34 {dimension_numbers = #tpu.dot_dimension_numbers<[1], [0], [0], [1], [0, 0, 1, 1], [], []>} : vector<4x32xbf16>, vector<32x32xbf16>, vector<4x32xf32> -> vector<4x32xf32>
    %40 = arith.addf %32, %39 : vector<4x32xf32>
    %c2_35 = arith.constant 2 : index
    %c0_36 = arith.constant 0 : index
    %c0_37 = arith.constant 0 : index
    %c0_38 = arith.constant 0 : index
    %41 = vector.load %arg1[%c2_35, %c0_36, %c0_37, %c0_38] : memref<4x3x3x32xbf16, #tpu.memory_space<vmem>>, vector<1x3x3x32xbf16>
    %42 = vector.shape_cast %41 : vector<1x3x3x32xbf16> to vector<3x3x32xbf16>
    %43 = vector.extract_strided_slice %42 {offsets = [0, 1, 0], sizes = [2, 2, 32], strides = [1, 1, 1]} : vector<3x3x32xbf16> to vector<2x2x32xbf16>
    %44 = vector.shape_cast %43 : vector<2x2x32xbf16> to vector<4x32xbf16>
    %c5 = arith.constant 5 : index
    %c0_39 = arith.constant 0 : index
    %c0_40 = arith.constant 0 : index
    %45 = vector.load %arg2[%c5, %c0_39, %c0_40] : memref<9x32x32xbf16, #tpu.memory_space<vmem>>, vector<1x32x32xbf16>
    %46 = vector.shape_cast %45 : vector<1x32x32xbf16> to vector<32x32xbf16>
    %cst_41 = arith.constant dense<0.000000e+00> : vector<4x32xf32>
    %47 = tpu.matmul %44, %46, %cst_41 {dimension_numbers = #tpu.dot_dimension_numbers<[1], [0], [0], [1], [0, 0, 1, 1], [], []>} : vector<4x32xbf16>, vector<32x32xbf16>, vector<4x32xf32> -> vector<4x32xf32>
    %48 = arith.addf %40, %47 : vector<4x32xf32>
    %c0_42 = arith.constant 0 : index
    %c0_43 = arith.constant 0 : index
    %c0_44 = arith.constant 0 : index
    %c0_45 = arith.constant 0 : index
    %49 = vector.load %arg1[%c0_42, %c0_43, %c0_44, %c0_45] : memref<4x3x3x32xbf16, #tpu.memory_space<vmem>>, vector<1x3x3x32xbf16>
    %50 = vector.shape_cast %49 : vector<1x3x3x32xbf16> to vector<3x3x32xbf16>
    %51 = vector.extract_strided_slice %50 {offsets = [1, 0, 0], sizes = [2, 2, 32], strides = [1, 1, 1]} : vector<3x3x32xbf16> to vector<2x2x32xbf16>
    %52 = vector.shape_cast %51 : vector<2x2x32xbf16> to vector<4x32xbf16>
    %c6 = arith.constant 6 : index
    %c0_46 = arith.constant 0 : index
    %c0_47 = arith.constant 0 : index
    %53 = vector.load %arg2[%c6, %c0_46, %c0_47] : memref<9x32x32xbf16, #tpu.memory_space<vmem>>, vector<1x32x32xbf16>
    %54 = vector.shape_cast %53 : vector<1x32x32xbf16> to vector<32x32xbf16>
    %cst_48 = arith.constant dense<0.000000e+00> : vector<4x32xf32>
    %55 = tpu.matmul %52, %54, %cst_48 {dimension_numbers = #tpu.dot_dimension_numbers<[1], [0], [0], [1], [0, 0, 1, 1], [], []>} : vector<4x32xbf16>, vector<32x32xbf16>, vector<4x32xf32> -> vector<4x32xf32>
    %56 = arith.addf %48, %55 : vector<4x32xf32>
    %c1_49 = arith.constant 1 : index
    %c0_50 = arith.constant 0 : index
    %c0_51 = arith.constant 0 : index
    %c0_52 = arith.constant 0 : index
    %57 = vector.load %arg1[%c1_49, %c0_50, %c0_51, %c0_52] : memref<4x3x3x32xbf16, #tpu.memory_space<vmem>>, vector<1x3x3x32xbf16>
    %58 = vector.shape_cast %57 : vector<1x3x3x32xbf16> to vector<3x3x32xbf16>
    %59 = vector.extract_strided_slice %58 {offsets = [1, 0, 0], sizes = [2, 2, 32], strides = [1, 1, 1]} : vector<3x3x32xbf16> to vector<2x2x32xbf16>
    %60 = vector.shape_cast %59 : vector<2x2x32xbf16> to vector<4x32xbf16>
    %c7 = arith.constant 7 : index
    %c0_53 = arith.constant 0 : index
    %c0_54 = arith.constant 0 : index
    %61 = vector.load %arg2[%c7, %c0_53, %c0_54] : memref<9x32x32xbf16, #tpu.memory_space<vmem>>, vector<1x32x32xbf16>
    %62 = vector.shape_cast %61 : vector<1x32x32xbf16> to vector<32x32xbf16>
    %cst_55 = arith.constant dense<0.000000e+00> : vector<4x32xf32>
    %63 = tpu.matmul %60, %62, %cst_55 {dimension_numbers = #tpu.dot_dimension_numbers<[1], [0], [0], [1], [0, 0, 1, 1], [], []>} : vector<4x32xbf16>, vector<32x32xbf16>, vector<4x32xf32> -> vector<4x32xf32>
    %64 = arith.addf %56, %63 : vector<4x32xf32>
    %c0_56 = arith.constant 0 : index
    %c0_57 = arith.constant 0 : index
    %c0_58 = arith.constant 0 : index
    %c0_59 = arith.constant 0 : index
    %65 = vector.load %arg1[%c0_56, %c0_57, %c0_58, %c0_59] : memref<4x3x3x32xbf16, #tpu.memory_space<vmem>>, vector<1x3x3x32xbf16>
    %66 = vector.shape_cast %65 : vector<1x3x3x32xbf16> to vector<3x3x32xbf16>
    %67 = vector.extract_strided_slice %66 {offsets = [1, 1, 0], sizes = [2, 2, 32], strides = [1, 1, 1]} : vector<3x3x32xbf16> to vector<2x2x32xbf16>
    %68 = vector.shape_cast %67 : vector<2x2x32xbf16> to vector<4x32xbf16>
    %c8 = arith.constant 8 : index
    %c0_60 = arith.constant 0 : index
    %c0_61 = arith.constant 0 : index
    %69 = vector.load %arg2[%c8, %c0_60, %c0_61] : memref<9x32x32xbf16, #tpu.memory_space<vmem>>, vector<1x32x32xbf16>
    %70 = vector.shape_cast %69 : vector<1x32x32xbf16> to vector<32x32xbf16>
    %cst_62 = arith.constant dense<0.000000e+00> : vector<4x32xf32>
    %71 = tpu.matmul %68, %70, %cst_62 {dimension_numbers = #tpu.dot_dimension_numbers<[1], [0], [0], [1], [0, 0, 1, 1], [], []>} : vector<4x32xbf16>, vector<32x32xbf16>, vector<4x32xf32> -> vector<4x32xf32>
    %72 = arith.addf %64, %71 : vector<4x32xf32>
    %c0_63 = arith.constant 0 : index
    %c0_64 = arith.constant 0 : index
    %73 = vector.load %arg3[%c0_63, %c0_64] : memref<1x32xf32, #tpu.memory_space<vmem>>, vector<1x32xf32>
    %74 = vector.broadcast %73 : vector<1x32xf32> to vector<4x32xf32>
    %75 = arith.addf %72, %74 : vector<4x32xf32>
    %cst_65 = arith.constant 0.000000e+00 : f32
    %76 = vector.broadcast %cst_65 : f32 to vector<4x32xf32>
    %77 = arith.cmpf oge, %75, %76 : vector<4x32xf32>
    %cst_66 = arith.constant 0.00999999977 : f32
    %78 = vector.broadcast %cst_66 : f32 to vector<4x32xf32>
    %79 = arith.mulf %78, %75 : vector<4x32xf32>
    %80 = arith.select %77, %75, %79 : vector<4x32xi1>, vector<4x32xf32>
    %cst_67 = arith.constant 0.000000e+00 : f32
    %81 = vector.broadcast %cst_67 : f32 to vector<1x32xf32>
    %82 = vector.extract_strided_slice %80 {offsets = [0, 0], sizes = [1, 32], strides = [1, 1]} : vector<4x32xf32> to vector<1x32xf32>
    %c0_68 = arith.constant 0 : index
    %c0_69 = arith.constant 0 : index
    %c0_70 = arith.constant 0 : index
    %83 = vector.load %arg4[%c0_68, %c0_69, %c0_70] : memref<4x32x32xf32, #tpu.memory_space<vmem>>, vector<1x32x32xf32>
    %84 = vector.shape_cast %83 : vector<1x32x32xf32> to vector<32x32xf32>
    %cst_71 = arith.constant dense<0.000000e+00> : vector<1x32xf32>
    %85 = tpu.matmul %82, %84, %cst_71 {dimension_numbers = #tpu.dot_dimension_numbers<[1], [0], [0], [1], [0, 0, 1, 1], [], []>} : vector<1x32xf32>, vector<32x32xf32>, vector<1x32xf32> -> vector<1x32xf32>
    %86 = arith.addf %81, %85 : vector<1x32xf32>
    %87 = vector.extract_strided_slice %80 {offsets = [1, 0], sizes = [1, 32], strides = [1, 1]} : vector<4x32xf32> to vector<1x32xf32>
    %c1_72 = arith.constant 1 : index
    %c0_73 = arith.constant 0 : index
    %c0_74 = arith.constant 0 : index
    %88 = vector.load %arg4[%c1_72, %c0_73, %c0_74] : memref<4x32x32xf32, #tpu.memory_space<vmem>>, vector<1x32x32xf32>
    %89 = vector.shape_cast %88 : vector<1x32x32xf32> to vector<32x32xf32>
    %cst_75 = arith.constant dense<0.000000e+00> : vector<1x32xf32>
    %90 = tpu.matmul %87, %89, %cst_75 {dimension_numbers = #tpu.dot_dimension_numbers<[1], [0], [0], [1], [0, 0, 1, 1], [], []>} : vector<1x32xf32>, vector<32x32xf32>, vector<1x32xf32> -> vector<1x32xf32>
    %91 = arith.addf %86, %90 : vector<1x32xf32>
    %92 = vector.extract_strided_slice %80 {offsets = [2, 0], sizes = [1, 32], strides = [1, 1]} : vector<4x32xf32> to vector<1x32xf32>
    %c2_76 = arith.constant 2 : index
    %c0_77 = arith.constant 0 : index
    %c0_78 = arith.constant 0 : index
    %93 = vector.load %arg4[%c2_76, %c0_77, %c0_78] : memref<4x32x32xf32, #tpu.memory_space<vmem>>, vector<1x32x32xf32>
    %94 = vector.shape_cast %93 : vector<1x32x32xf32> to vector<32x32xf32>
    %cst_79 = arith.constant dense<0.000000e+00> : vector<1x32xf32>
    %95 = tpu.matmul %92, %94, %cst_79 {dimension_numbers = #tpu.dot_dimension_numbers<[1], [0], [0], [1], [0, 0, 1, 1], [], []>} : vector<1x32xf32>, vector<32x32xf32>, vector<1x32xf32> -> vector<1x32xf32>
    %96 = arith.addf %91, %95 : vector<1x32xf32>
    %97 = vector.extract_strided_slice %80 {offsets = [3, 0], sizes = [1, 32], strides = [1, 1]} : vector<4x32xf32> to vector<1x32xf32>
    %c3_80 = arith.constant 3 : index
    %c0_81 = arith.constant 0 : index
    %c0_82 = arith.constant 0 : index
    %98 = vector.load %arg4[%c3_80, %c0_81, %c0_82] : memref<4x32x32xf32, #tpu.memory_space<vmem>>, vector<1x32x32xf32>
    %99 = vector.shape_cast %98 : vector<1x32x32xf32> to vector<32x32xf32>
    %cst_83 = arith.constant dense<0.000000e+00> : vector<1x32xf32>
    %100 = tpu.matmul %97, %99, %cst_83 {dimension_numbers = #tpu.dot_dimension_numbers<[1], [0], [0], [1], [0, 0, 1, 1], [], []>} : vector<1x32xf32>, vector<32x32xf32>, vector<1x32xf32> -> vector<1x32xf32>
    %101 = arith.addf %96, %100 : vector<1x32xf32>
    %c0_84 = arith.constant 0 : index
    %c0_85 = arith.constant 0 : index
    %102 = vector.load %arg5[%c0_84, %c0_85] : memref<1x32xf32, #tpu.memory_space<vmem>>, vector<1x32xf32>
    %103 = arith.addf %101, %102 : vector<1x32xf32>
    %cst_86 = arith.constant 0.000000e+00 : f32
    %104 = vector.broadcast %cst_86 : f32 to vector<1x32xf32>
    %105 = arith.cmpf oge, %103, %104 : vector<1x32xf32>
    %cst_87 = arith.constant 0.00999999977 : f32
    %106 = vector.broadcast %cst_87 : f32 to vector<1x32xf32>
    %107 = arith.mulf %106, %103 : vector<1x32xf32>
    %108 = arith.select %105, %103, %107 : vector<1x32xi1>, vector<1x32xf32>
    %c0_88 = arith.constant 0 : index
    %c0_89 = arith.constant 0 : index
    %109 = vector.load %arg6[%c0_88, %c0_89] : memref<32x32xf32, #tpu.memory_space<vmem>>, vector<32x32xf32>
    %cst_90 = arith.constant dense<0.000000e+00> : vector<1x32xf32>
    %110 = tpu.matmul %108, %109, %cst_90 {dimension_numbers = #tpu.dot_dimension_numbers<[1], [0], [0], [1], [0, 0, 1, 1], [], []>} : vector<1x32xf32>, vector<32x32xf32>, vector<1x32xf32> -> vector<1x32xf32>
    %c0_91 = arith.constant 0 : index
    %c0_92 = arith.constant 0 : index
    %111 = vector.load %arg7[%c0_91, %c0_92] : memref<1x32xf32, #tpu.memory_space<vmem>>, vector<1x32xf32>
    %112 = arith.addf %110, %111 : vector<1x32xf32>
    %113 = vector.shape_cast %112 : vector<1x32xf32> to vector<1x1x32xf32>
    %c0_93 = arith.constant 0 : index
    %c0_94 = arith.constant 0 : index
    %c0_95 = arith.constant 0 : index
    %114 = vector.load %arg8[%c0_93, %c0_94, %c0_95] : memref<1x1x32xf32, #tpu.memory_space<vmem>>, vector<1x1x32xf32>
    tpu.vector_store %arg8[%c0_93, %c0_94, %c0_95], %113 {strides = array<i32>} : memref<1x1x32xf32, #tpu.memory_space<vmem>>, vector<1x1x32xf32>,
    return
  }
  func.func @transform_0(%arg0: i32) -> (i32, i32, i32, i32) {
    %c0_i32 = arith.constant 0 : i32
    %c0_i32_0 = arith.constant 0 : i32
    %c0_i32_1 = arith.constant 0 : i32
    %c0_i32_2 = arith.constant 0 : i32
    return %arg0, %c0_i32, %c0_i32_0, %c0_i32_1 : i32, i32, i32, i32
  }
  func.func @transform_1(%arg0: i32) -> (i32, i32, i32) {
    %c0_i32 = arith.constant 0 : i32
    %c0_i32_0 = arith.constant 0 : i32
    %c0_i32_1 = arith.constant 0 : i32
    %c0_i32_2 = arith.constant 0 : i32
    return %c0_i32, %c0_i32_0, %c0_i32_1 : i32, i32, i32
  }
  func.func @transform_2(%arg0: i32) -> (i32, i32) {
    %c0_i32 = arith.constant 0 : i32
    %c0_i32_0 = arith.constant 0 : i32
    %c0_i32_1 = arith.constant 0 : i32
    return %c0_i32, %c0_i32_0 : i32, i32
  }
  func.func @transform_3(%arg0: i32) -> (i32, i32, i32) {
    %c0_i32 = arith.constant 0 : i32
    %c0_i32_0 = arith.constant 0 : i32
    %c0_i32_1 = arith.constant 0 : i32
    %c0_i32_2 = arith.constant 0 : i32
    return %c0_i32, %c0_i32_0, %c0_i32_1 : i32, i32, i32
  }
  func.func @transform_4(%arg0: i32) -> (i32, i32) {
    %c0_i32 = arith.constant 0 : i32
    %c0_i32_0 = arith.constant 0 : i32
    %c0_i32_1 = arith.constant 0 : i32
    return %c0_i32, %c0_i32_0 : i32, i32
  }
  func.func @transform_5(%arg0: i32) -> (i32, i32) {
    %c0_i32 = arith.constant 0 : i32
    %c0_i32_0 = arith.constant 0 : i32
    %c0_i32_1 = arith.constant 0 : i32
    return %c0_i32, %c0_i32_0 : i32, i32
  }
  func.func @transform_6(%arg0: i32) -> (i32, i32) {
    %c0_i32 = arith.constant 0 : i32
    %c0_i32_0 = arith.constant 0 : i32
    %c0_i32_1 = arith.constant 0 : i32
    return %c0_i32, %c0_i32_0 : i32, i32
  }
  func.func @transform_7(%arg0: i32) -> (i32, i32, i32) {
    %c0_i32 = arith.constant 0 : i32
    %c0_i32_0 = arith.constant 0 : i32
    %c0_i32_1 = arith.constant 0 : i32
    return %arg0, %c0_i32, %c0_i32_0 : i32, i32, i32
  }
}

</mosaic_0001>

<llo_original>
// kernel: gradual_style_block_forward.3
$region0: #{gradual_style_block_forward.3}
  #allocation0 [shape = 'u32[]', space=smem, size = 0x4, offset = 0x4, fixed_abs, tag = 'smem constant byte address 0x4 - core index']
  #allocation1 [shape = 'u32[144,128]{1,0:T(1,128)}', space=vmem, size = 0x12000, scoped, tag = 'internal scratch']
  %s0 = inlined_call_operand.vmem [shape: bf16[8,9,9,4], index: 0, kind: input, shape index: {}]
  %s1 = inlined_call_operand.vmem [shape: bf16[9,4,32], index: 1, kind: input, shape index: {}]
  %s2 = inlined_call_operand.vmem [shape: f32[1,32], index: 2, kind: input, shape index: {}]
  %s3 = inlined_call_operand.vmem [shape: bf16[2,8,8,32], index: 3, kind: output, shape index: {}]
  %s4 = sld [smem:[#allocation0]]
  $region45: #{gradual_style_block_forward.3} parent=0
    _
  %s6 = ssub.s32 1, %s4
  %s7 = scalar_select 0, %s6, %s4
  loop: start=0, step=1, limit=4
  $region2: #{gradual_style_block_forward.3} parent=0 // loop_pre_header
    _
  $region3: #{gradual_style_block_forward.3} parent=0 // loop_header
    %s9 = sphi 0, %s13
    %p10 = scmp.ge.s32.totalorder %s9, 4
    %s19 = sphi 0, %s21
    %s22 = sphi 0, %s19
    %s23 = sphi 0, %s22
    %s39 = sphi 0, %s23
    %s43 = sphi 0, %s43
    %s45 = sphi 0, %s43
    %s46 = sphi 0, %s45
    %s60 = sphi 0, %s46
    %s64 = sphi 0, %s64
    %s66 = sphi 0, %s64
    %s67 = sphi 0, %s66
    %s81 = sphi 0, %s67
    %s87 = sphi 0, %s89
    %s90 = sphi 0, %s87
    %s91 = sphi 0, %s90
    %s107 = sphi 0, %s91
  $region4: #{gradual_style_block_forward.3} parent=0 // loop_header_branch
    %12 = sbr.rel (%p10) target = $region8
  $region5: #{gradual_style_block_forward.3} parent=0 // loop_body
    %s14 = ssub.s32 %s9, 1
    %s15 = ssub.s32 %s9, 2
    %s16 = sadd.s32 %s9, 1
    %s17 = ssub.s32 %s9, %s16
    %p18 = scmp.eq.s32.totalorder %s17, 0
    %s20 = sadd.s32 %s19, 1
    %s21 = scalar_select %p18, %s19, %s20
    %p24 = pneg %p18
    %p25 = scmp.eq.s32.totalorder %s9, 1
    %p26 = por %p24, %p25
    %p27 = scmp.ne.s32.totalorder %s19, %s22
    %p28 = scmp.eq.s32.totalorder %s9, 0
    %p29 = por %p27, %p28
    %p30 = scmp.ne.s32.totalorder %s19, %s22
    %p31 = scmp.eq.s32.totalorder %s14, 1
    %p32 = por %p30, %p31
    %p33 = scmp.ne.s32.totalorder %s22, %s23
    %p34 = scmp.eq.s32.totalorder %s14, 0
    %p35 = por %p33, %p34
    %p36 = scmp.ne.s32.totalorder %s22, %s23
    %p37 = scmp.eq.s32.totalorder %s15, 1
    %p38 = por %p36, %p37
    %p40 = scmp.ne.s32.totalorder %s23, %s39
    %p41 = scmp.eq.s32.totalorder %s15, 0
    %p42 = por %p40, %p41
    %s44 = sadd.s32 %s43, 1
    %p47 = scmp.eq.s32.totalorder %s9, 1
    %p48 = scmp.ne.s32.totalorder %s43, %s45
    %p49 = scmp.eq.s32.totalorder %s9, 0
    %p50 = por %p48, %p49
    %p51 = scmp.ne.s32.totalorder %s43, %s45
    %p52 = scmp.eq.s32.totalorder %s14, 1
    %p53 = por %p51, %p52
    %p54 = scmp.ne.s32.totalorder %s45, %s46
    %p55 = scmp.eq.s32.totalorder %s14, 0
    %p56 = por %p54, %p55
    %p57 = scmp.ne.s32.totalorder %s45, %s46
    %p58 = scmp.eq.s32.totalorder %s15, 1
    %p59 = por %p57, %p58
    %p61 = scmp.ne.s32.totalorder %s46, %s60
    %p62 = scmp.eq.s32.totalorder %s15, 0
    %p63 = por %p61, %p62
    %s65 = sadd.s32 %s64, 1
    %p68 = scmp.eq.s32.totalorder %s9, 1
    %p69 = scmp.ne.s32.totalorder %s64, %s66
    %p70 = scmp.eq.s32.totalorder %s9, 0
    %p71 = por %p69, %p70
    %p72 = scmp.ne.s32.totalorder %s64, %s66
    %p73 = scmp.eq.s32.totalorder %s14, 1
    %p74 = por %p72, %p73
    %p75 = scmp.ne.s32.totalorder %s66, %s67
    %p76 = scmp.eq.s32.totalorder %s14, 0
    %p77 = por %p75, %p76
    %p78 = scmp.ne.s32.totalorder %s66, %s67
    %p79 = scmp.eq.s32.totalorder %s15, 1
    %p80 = por %p78, %p79
    %p82 = scmp.ne.s32.totalorder %s67, %s81
    %p83 = scmp.eq.s32.totalorder %s15, 0
    %p84 = por %p82, %p83
    %s85 = ssub.s32 %s9, %s16
    %p86 = scmp.eq.s32.totalorder %s85, 0
    %s88 = sadd.s32 %s87, 1
    %s89 = scalar_select %p86, %s87, %s88
    %p92 = pneg %p86
    %p93 = scmp.eq.s32.totalorder %s9, 1
    %p94 = por %p92, %p93
    %p95 = scmp.ne.s32.totalorder %s87, %s90
    %p96 = scmp.eq.s32.totalorder %s9, 0
    %p97 = por %p95, %p96
    %p98 = scmp.ne.s32.totalorder %s87, %s90
    %p99 = scmp.eq.s32.totalorder %s14, 1
    %p100 = por %p98, %p99
    %p101 = scmp.ne.s32.totalorder %s90, %s91
    %p102 = scmp.eq.s32.totalorder %s14, 0
    %p103 = por %p101, %p102
    %p104 = scmp.ne.s32.totalorder %s90, %s91
    %p105 = scmp.eq.s32.totalorder %s15, 1
    %p106 = por %p104, %p105
    %p108 = scmp.ne.s32.totalorder %s91, %s107
    %p109 = scmp.eq.s32.totalorder %s15, 0
    %p110 = por %p108, %p109
    %p111 = scmp.le.s32.totalorder 1, %s9
    %p112 = scmp.lt.s32.totalorder %s9, 3
    %p113 = pnand %p111, %p112
    %p114 = pneg %p113
    // Predicated region
    $region9: #{gradual_style_block_forward.3} parent=5 // pred_check
      _
    $region10: #{gradual_style_block_forward.3} parent=5 // pred_check_branch
      %116 = sbr.rel (%p113) target = $region12
    $region11: #{gradual_style_block_forward.3} parent=5 // pred_region
      %s117 = ssub.s32 %s9, 1
      // Predicated region
      $region13: #{gradual_style_block_forward.3} parent=11 // pred_check
        %p118 = pneg %p56
      $region14: #{gradual_style_block_forward.3} parent=11 // pred_check_branch
        %120 = sbr.rel (%p118) target = $region16
      $region15: #{gradual_style_block_forward.3} parent=11 // pred_region
        _
      $region16: #{gradual_style_block_forward.3} parent=11 // pred_fallthru
        _
      // Predicated region
      $region17: #{gradual_style_block_forward.3} parent=11 // pred_check
        %p121 = pneg %p77
      $region18: #{gradual_style_block_forward.3} parent=11 // pred_check_branch
        %123 = sbr.rel (%p121) target = $region20
      $region19: #{gradual_style_block_forward.3} parent=11 // pred_region
        _
      $region20: #{gradual_style_block_forward.3} parent=11 // pred_fallthru
        _
    $region12: #{gradual_style_block_forward.3} parent=5 // pred_fallthru
      _
    %p124 = scmp.lt.s32.totalorder %s9, 2
    // Predicated region
    $region21: #{gradual_style_block_forward.3} parent=5 // pred_check
      %p125 = pneg %p124
    $region22: #{gradual_style_block_forward.3} parent=5 // pred_check_branch
      %127 = sbr.rel (%p125) target = $region24
    $region23: #{gradual_style_block_forward.3} parent=5 // pred_region
      // Predicated region
      $region25: #{gradual_style_block_forward.3} parent=23 // pred_check
        %p128 = pneg %p29
      $region26: #{gradual_style_block_forward.3} parent=23 // pred_check_branch
        %130 = sbr.rel (%p128) target = $region28
      $region27: #{gradual_style_block_forward.3} parent=23 // pred_region
        %s131 = smul.u32 4, %s9
        %p132 = scmp.lt.s32.totalorder %s131, 7
        %s133 = scalar_select %p132, %s131, 7
        %s134 = smul.addr %s133, 18
        %s135 = smul.addr %s134, 4
        %s136 = scalar_lea.vmem %s0, %s135
        %s137 = smul.u32 4, %s9
      $region28: #{gradual_style_block_forward.3} parent=23 // pred_fallthru
        _
    $region24: #{gradual_style_block_forward.3} parent=5 // pred_fallthru
      _
    %p138 = scmp.le.s32.totalorder 1, %s9
    %p139 = scmp.lt.s32.totalorder %s9, 3
    %p140 = pnand %p138, %p139
    %p141 = pneg %p140
    // Predicated region
    $region29: #{gradual_style_block_forward.3} parent=5 // pred_check
      _
    $region30: #{gradual_style_block_forward.3} parent=5 // pred_check_branch
      %143 = sbr.rel (%p140) target = $region32
    $region31: #{gradual_style_block_forward.3} parent=5 // pred_region
      %s144 = ssub.s32 %s9, 1
      %s145 = smul.u32 4, %s14
      %p146 = scmp.lt.s32.totalorder %s145, 7
      %s147 = scalar_select %p146, %s145, 7
      %s148 = smul.addr %s147, 18
      %s149 = smul.addr %s148, 4
      %s150 = scalar_lea.vmem %s0, %s149
      %p151 = pneg %p35
      %p152 = pneg %p32
      %p153 = pneg %p56
      %p154 = pneg %p53
      %p155 = pneg %p77
      %p156 = pneg %p74
      %p157 = pneg %p103
      %p158 = pneg %p100
      %p159 = scmp.lt.s32.totalorder %s14, 1
      %s160 = scalar_select %p159, %s14, 1
      %s161 = smul.addr %s160, 8
      %s162 = smul.addr %s161, 4
      %s163 = scalar_lea.vmem %s3, %s162
      %s164 = smul.u32 4, %s14
      %p165 = scmp.lt.s32.totalorder %s164, 7
      %s166 = scalar_select %p165, %s164, 7
      %s167 = smul.addr %s166, 18
      %s168 = smul.addr %s167, 4
      %s169 = scalar_lea.vmem %s0, %s168
      %s170 = smul.u32 4, %s14
      %p171 = scmp.lt.s32.totalorder %s14, 1
      %s172 = scalar_select %p171, %s14, 1
      %s173 = smul.addr %s172, 8
      %s174 = smul.addr %s173, 4
      %s175 = scalar_lea.vmem %s3, %s174
      %v177 = vld [vmem:[%s169] sm:$0xf]
      %v178 = vld [vmem:[%s169 + $0x4] sm:$0x1]
      %v179 = vld [vmem:[%s169 + $0x8] sm:$0xf]
      %v180 = vld [vmem:[%s169 + $0xc] sm:$0x1]
      %v181 = vld [vmem:[%s169 + $0x10] sm:$0xf]
      %v182 = vld [vmem:[%s169 + $0x14] sm:$0x1]
      %v183 = vld [vmem:[%s169 + $0x18] sm:$0xf]
      %v184 = vld [vmem:[%s169 + $0x1c] sm:$0x1]
      %v185 = vld [vmem:[%s169 + $0x20] sm:$0xf]
      %v186 = vld [vmem:[%s169 + $0x24] sm:$0x1]
      %v187 = vld [vmem:[%s169 + $0x28] sm:$0xf]
      %v188 = vld [vmem:[%s169 + $0x2c] sm:$0x1]
      %v189 = vld [vmem:[%s169 + $0x30] sm:$0xf]
      %v190 = vld [vmem:[%s169 + $0x34] sm:$0x1]
      %v191 = vld [vmem:[%s169 + $0x38] sm:$0xf]
      %v192 = vld [vmem:[%s169 + $0x3c] sm:$0x1]
      %v193 = vld [vmem:[%s169 + $0x40] sm:$0xf]
      %v194 = vld [vmem:[%s169 + $0x44] sm:$0x1]
      %v195 = vld [vmem:[%s1] sm:$0x3]
      %s196 = scalar_lea.vmem %s169, 72
      %v197 = vld [vmem:[%s196] sm:$0xf]
      %v198 = vld [vmem:[%s196 + $0x8] sm:$0xf]
      %v199 = vld [vmem:[%s196 + $0x10] sm:$0xf]
      %v200 = vld [vmem:[%s196 + $0x18] sm:$0xf]
      %v201 = vld [vmem:[%s196 + $0x20] sm:$0xf]
      %v202 = vld [vmem:[%s196 + $0x28] sm:$0xf]
      %v203 = vld [vmem:[%s196 + $0x30] sm:$0xf]
      %v204 = vld [vmem:[%s196 + $0x38] sm:$0xf]
      %v205 = vld [vmem:[%s196 + $0x40] sm:$0xf]
      %s206 = scalar_lea.vmem %s1, 2
      %v207 = vld [vmem:[%s206] sm:$0x3]
      %v216 = vunpack.c.l.b16 %v197
      %v217 = vunpack.c.l.b16 %v198
      %v218 = vunpack.c.l.b16 %v199
      %v219 = vunpack.c.l.b16 %v200
      %v220 = vunpack.c.l.b16 %v201
      %v221 = vunpack.c.l.b16 %v202
      %v222 = vunpack.c.l.b16 %v203
      %v223 = vunpack.c.l.b16 %v204
      %v224 = vpack.c.b16 %v217, %v216
      %v225 = vpack.c.b16 %v219, %v218
      %v226 = vpack.c.b16 %v221, %v220
      %v227 = vpack.c.b16 %v223, %v222
      %vm228 = vcmask 31744
      %v230 = vsel %vm228, %v224, 0
      %v233 = vsel %vm228, %v225, 0
      %v236 = vsel %vm228, %v226, 0
      %v239 = vsel %vm228, %v227, 0
      %vm241 = vcmask 1041408
      %v243 = vsel %vm241, %v207, 0
      %245 = vmatprep.subr.bf16.mxu0 0
      %246 = vmatpush1.bf16.msra.mxu0 0
      %247 = vmatprep.subr.bf16.mxu0 0
      %248 = vmatpush1.bf16.msra.mxu0 0
      %249 = vmatprep.subr.bf16.mxu0 0
      %250 = vmatpush1.bf16.msra.mxu0 0
      %251 = vmatprep.subr.bf16.mxu0 0
      %252 = vmatpush1.bf16.msra.mxu0 0
      %253 = vmatprep.subr.bf16.mxu0 0
      %254 = vmatpush1.bf16.msra.mxu0 0
      %255 = vmatprep.subr.bf16.mxu0 0
      %256 = vmatpush1.bf16.msra.mxu0 0
      %257 = vmatprep.subr.bf16.mxu0 0
      %258 = vmatpush1.bf16.msra.mxu0 0
      %259 = vmatprep.subr.bf16.mxu0 0
      %260 = vmatpush1.bf16.msra.mxu0 %v243
      %261 = vmatprep.subr.bf16.mxu0 0
      %262 = vmatpush2.bf16.msra.mxu0 0
      %263 = vmatprep.subr.bf16.mxu0 0
      %264 = vmatpush2.bf16.msra.mxu0 0
      %265 = vmatprep.subr.bf16.mxu0 0
      %266 = vmatpush2.bf16.msra.mxu0 0
      %267 = vmatprep.subr.bf16.mxu0 0
      %268 = vmatpush2.bf16.msra.mxu0 0
      %269 = vmatprep.subr.bf16.mxu0 0
      %270 = vmatpush2.bf16.msra.mxu0 0
      %271 = vmatprep.subr.bf16.mxu0 0
      %272 = vmatpush2.bf16.msra.mxu0 0
      %273 = vmatprep.subr.bf16.mxu0 0
      %274 = vmatpush2.bf16.msra.mxu0 0
      %275 = vmatprep.subr.bf16.mxu0 0
      %276 = vmatpush2.bf16.msra.mxu0 0
      %277 = vmatprep.mubr.bf16.mxu0 0
      %278 = vmatmul.mubr.bf16.gmra.mxu0 %v230
      %v279 = vpop.f32.mrf.mxu0
      %v280 = vadd.f32 0.0, %v279
      %v281 = vpop.f32.mrf.mxu0
      %v282 = vpop.f32.mrf.mxu0
      %v283 = vadd.f32 0.0, %v282
      %v284 = vpop.f32.mrf.mxu0
      %285 = vmatprep.mubr.bf16.mxu0 0
      %286 = vmatmul.mubr.bf16.gmra.mxu0 %v233
      %v287 = vpop.f32.mrf.mxu0
      %v288 = vadd.f32 0.0, %v287
      %v289 = vpop.f32.mrf.mxu0
      %v290 = vpop.f32.mrf.mxu0
      %v291 = vadd.f32 0.0, %v290
      %v292 = vpop.f32.mrf.mxu0
      %293 = vmatprep.mubr.bf16.mxu0 0
      %294 = vmatmul.mubr.bf16.gmra.mxu0 %v236
      %v295 = vpop.f32.mrf.mxu0
      %v296 = vadd.f32 0.0, %v295
      %v297 = vpop.f32.mrf.mxu0
      %v298 = vpop.f32.mrf.mxu0
      %v299 = vadd.f32 0.0, %v298
      %v300 = vpop.f32.mrf.mxu0
      %301 = vmatprep.mubr.bf16.mxu0 0
      %302 = vmatmul.mubr.bf16.gmra.mxu0 %v239
      %v303 = vpop.f32.mrf.mxu0
      %v304 = vadd.f32 0.0, %v303
      %v305 = vpop.f32.mrf.mxu0
      %v306 = vpop.f32.mrf.mxu0
      %v307 = vadd.f32 0.0, %v306
      %v308 = vpop.f32.mrf.mxu0
      %309 = vdwg.mxu0
      %v318 = vunpack.c.l.b16 %v177
      %v319 = vunpack.c.l.b16 %v179
      %v320 = vunpack.c.l.b16 %v181
      %v321 = vunpack.c.l.b16 %v183
      %v322 = vunpack.c.l.b16 %v185
      %v323 = vunpack.c.l.b16 %v187
      %v324 = vunpack.c.l.b16 %v189
      %v325 = vunpack.c.l.b16 %v191
      %v326 = vpack.c.b16 %v319, %v318
      %v327 = vpack.c.b16 %v321, %v320
      %v328 = vpack.c.b16 %v323, %v322
      %v329 = vpack.c.b16 %v325, %v324
      %v331 = vsel %vm228, %v326, 0
      %v334 = vsel %vm228, %v327, 0
      %v337 = vsel %vm228, %v328, 0
      %v340 = vsel %vm228, %v329, 0
      %v343 = vsel %vm241, %v195, 0
      %345 = vmatprep.subr.bf16.mxu0 0
      %346 = vmatpush1.bf16.msra.mxu0 0
      %347 = vmatprep.subr.bf16.mxu0 0
      %348 = vmatpush1.bf16.msra.mxu0 0
      %349 = vmatprep.subr.bf16.mxu0 0
      %350 = vmatpush1.bf16.msra.mxu0 0
      %351 = vmatprep.subr.bf16.mxu0 0
      %352 = vmatpush1.bf16.msra.mxu0 0
      %353 = vmatprep.subr.bf16.mxu0 0
      %354 = vmatpush1.bf16.msra.mxu0 0
      %355 = vmatprep.subr.bf16.mxu0 0
      %356 = vmatpush1.bf16.msra.mxu0 0
      %357 = vmatprep.subr.bf16.mxu0 0
      %358 = vmatpush1.bf16.msra.mxu0 0
      %359 = vmatprep.subr.bf16.mxu0 0
      %360 = vmatpush1.bf16.msra.mxu0 %v343
      %361 = vmatprep.subr.bf16.mxu0 0
      %362 = vmatpush2.bf16.msra.mxu0 0
      %363 = vmatprep.subr.bf16.mxu0 0
      %364 = vmatpush2.bf16.msra.mxu0 0
      %365 = vmatprep.subr.bf16.mxu0 0
      %366 = vmatpush2.bf16.msra.mxu0 0
      %367 = vmatprep.subr.bf16.mxu0 0
      %368 = vmatpush2.bf16.msra.mxu0 0
      %369 = vmatprep.subr.bf16.mxu0 0
      %370 = vmatpush2.bf16.msra.mxu0 0
      %371 = vmatprep.subr.bf16.mxu0 0
      %372 = vmatpush2.bf16.msra.mxu0 0
      %373 = vmatprep.subr.bf16.mxu0 0
      %374 = vmatpush2.bf16.msra.mxu0 0
      %375 = vmatprep.subr.bf16.mxu0 0
      %376 = vmatpush2.bf16.msra.mxu0 0
      %377 = vmatprep.mubr.bf16.mxu0 0
      %378 = vmatmul.mubr.bf16.gmra.mxu0 %v331
      %v379 = vpop.f32.mrf.mxu0
      %v380 = vadd.f32 %v280, %v379
      %v381 = vpop.f32.mrf.mxu0
      %v382 = vpop.f32.mrf.mxu0
      %v383 = vadd.f32 %v283, %v382
      %v384 = vpop.f32.mrf.mxu0
      %385 = vmatprep.mubr.bf16.mxu0 0
      %386 = vmatmul.mubr.bf16.gmra.mxu0 %v334
      %v387 = vpop.f32.mrf.mxu0
      %v388 = vadd.f32 %v288, %v387
      %v389 = vpop.f32.mrf.mxu0
      %v390 = vpop.f32.mrf.mxu0
      %v391 = vadd.f32 %v291, %v390
      %v392 = vpop.f32.mrf.mxu0
      %393 = vmatprep.mubr.bf16.mxu0 0
      %394 = vmatmul.mubr.bf16.gmra.mxu0 %v337
      %v395 = vpop.f32.mrf.mxu0
      %v396 = vadd.f32 %v296, %v395
      %v397 = vpop.f32.mrf.mxu0
      %v398 = vpop.f32.mrf.mxu0
      %v399 = vadd.f32 %v299, %v398
      %v400 = vpop.f32.mrf.mxu0
      %401 = vmatprep.mubr.bf16.mxu0 0
      %402 = vmatmul.mubr.bf16.gmra.mxu0 %v340
      %v403 = vpop.f32.mrf.mxu0
      %v404 = vadd.f32 %v304, %v403
      %v405 = vpop.f32.mrf.mxu0
      %v406 = vpop.f32.mrf.mxu0
      %v407 = vadd.f32 %v307, %v406
      %v408 = vpop.f32.mrf.mxu0
      %409 = vdwg.mxu0
      %vm410 = vsmask.f32 3328
      %vm411 = vsmask.f32 7440
      %vm412 = vmor %vm410, %vm411
      %v414 = vshrl.u32 %v177, 16
      %v416 = vrot.slane %v414, 4
      %v417 = vshll.u32 %v177, 16
      %v419 = vrot.slane %v417, 5
      %v420 = vor.u32 %v416, %v419
      %v421 = vrot.slane %v420, 4
      %v423 = vshll.u32 %v178, 16
      %v425 = vrot.slane %v423, 5
      %v426 = vsel %vm412, %v421, %v425
      %v428 = vshrl.u32 %v179, 16
      %v430 = vrot.slane %v428, 4
      %v431 = vshll.u32 %v179, 16
      %v433 = vrot.slane %v431, 5
      %v434 = vor.u32 %v430, %v433
      %v435 = vrot.slane %v434, 4
      %v437 = vshll.u32 %v180, 16
      %v439 = vrot.slane %v437, 5
      %v440 = vsel %vm412, %v435, %v439
      %v442 = vshrl.u32 %v181, 16
      %v444 = vrot.slane %v442, 4
      %v445 = vshll.u32 %v181, 16
      %v447 = vrot.slane %v445, 5
      %v448 = vor.u32 %v444, %v447
      %v449 = vrot.slane %v448, 4
      %v451 = vshll.u32 %v182, 16
      %v453 = vrot.slane %v451, 5
      %v454 = vsel %vm412, %v449, %v453
      %v456 = vshrl.u32 %v183, 16
      %v458 = vrot.slane %v456, 4
      %v459 = vshll.u32 %v183, 16
      %v461 = vrot.slane %v459, 5
      %v462 = vor.u32 %v458, %v461
      %v463 = vrot.slane %v462, 4
      %v465 = vshll.u32 %v184, 16
      %v467 = vrot.slane %v465, 5
      %v468 = vsel %vm412, %v463, %v467
      %v470 = vshrl.u32 %v185, 16
      %v472 = vrot.slane %v470, 4
      %v473 = vshll.u32 %v185, 16
      %v475 = vrot.slane %v473, 5
      %v476 = vor.u32 %v472, %v475
      %v477 = vrot.slane %v476, 4
      %v479 = vshll.u32 %v186, 16
      %v481 = vrot.slane %v479, 5
      %v482 = vsel %vm412, %v477, %v481
      %v484 = vshrl.u32 %v187, 16
      %v486 = vrot.slane %v484, 4
      %v487 = vshll.u32 %v187, 16
      %v489 = vrot.slane %v487, 5
      %v490 = vor.u32 %v486, %v489
      %v491 = vrot.slane %v490, 4
      %v493 = vshll.u32 %v188, 16
      %v495 = vrot.slane %v493, 5
      %v496 = vsel %vm412, %v491, %v495
      %v498 = vshrl.u32 %v189, 16
      %v500 = vrot.slane %v498, 4
      %v501 = vshll.u32 %v189, 16
      %v503 = vrot.slane %v501, 5
      %v504 = vor.u32 %v500, %v503
      %v505 = vrot.slane %v504, 4
      %v507 = vshll.u32 %v190, 16
      %v509 = vrot.slane %v507, 5
      %v510 = vsel %vm412, %v505, %v509
      %v512 = vshrl.u32 %v191, 16
      %v514 = vrot.slane %v512, 4
      %v515 = vshll.u32 %v191, 16
      %v517 = vrot.slane %v515, 5
      %v518 = vor.u32 %v514, %v517
      %v519 = vrot.slane %v518, 4
      %v521 = vshll.u32 %v192, 16
      %v523 = vrot.slane %v521, 5
      %v524 = vsel %vm412, %v519, %v523
      %s525 = scalar_lea.vmem %s1, 4
      %v526 = vld [vmem:[%s525] sm:$0x3]
      %v527 = vunpack.c.l.b16 %v426
      %v528 = vunpack.c.l.b16 %v440
      %v529 = vunpack.c.l.b16 %v454
      %v530 = vunpack.c.l.b16 %v468
      %v531 = vunpack.c.l.b16 %v482
      %v532 = vunpack.c.l.b16 %v496
      %v533 = vunpack.c.l.b16 %v510
      %v534 = vunpack.c.l.b16 %v524
      %v535 = vpack.c.b16 %v528, %v527
      %v536 = vpack.c.b16 %v530, %v529
      %v537 = vpack.c.b16 %v532, %v531
      %v538 = vpack.c.b16 %v534, %v533
      %v540 = vsel %vm228, %v535, 0
      %v543 = vsel %vm228, %v536, 0
      %v546 = vsel %vm228, %v537, 0
      %v549 = vsel %vm228, %v538, 0
      %v552 = vsel %vm241, %v526, 0
      %554 = vmatprep.subr.bf16.mxu0 0
      %555 = vmatpush1.bf16.msra.mxu0 0
      %556 = vmatprep.subr.bf16.mxu0 0
      %557 = vmatpush1.bf16.msra.mxu0 0
      %558 = vmatprep.subr.bf16.mxu0 0
      %559 = vmatpush1.bf16.msra.mxu0 0
      %560 = vmatprep.subr.bf16.mxu0 0
      %561 = vmatpush1.bf16.msra.mxu0 0
      %562 = vmatprep.subr.bf16.mxu0 0
      %563 = vmatpush1.bf16.msra.mxu0 0
      %564 = vmatprep.subr.bf16.mxu0 0
      %565 = vmatpush1.bf16.msra.mxu0 0
      %566 = vmatprep.subr.bf16.mxu0 0
      %567 = vmatpush1.bf16.msra.mxu0 0
      %568 = vmatprep.subr.bf16.mxu0 0
      %569 = vmatpush1.bf16.msra.mxu0 %v552
      %570 = vmatprep.subr.bf16.mxu0 0
      %571 = vmatpush2.bf16.msra.mxu0 0
      %572 = vmatprep.subr.bf16.mxu0 0
      %573 = vmatpush2.bf16.msra.mxu0 0
      %574 = vmatprep.subr.bf16.mxu0 0
      %575 = vmatpush2.bf16.msra.mxu0 0
      %576 = vmatprep.subr.bf16.mxu0 0
      %577 = vmatpush2.bf16.msra.mxu0 0
      %578 = vmatprep.subr.bf16.mxu0 0
      %579 = vmatpush2.bf16.msra.mxu0 0
      %580 = vmatprep.subr.bf16.mxu0 0
      %581 = vmatpush2.bf16.msra.mxu0 0
      %582 = vmatprep.subr.bf16.mxu0 0
      %583 = vmatpush2.bf16.msra.mxu0 0
      %584 = vmatprep.subr.bf16.mxu0 0
      %585 = vmatpush2.bf16.msra.mxu0 0
      %586 = vmatprep.mubr.bf16.mxu0 0
      %587 = vmatmul.mubr.bf16.gmra.mxu0 %v540
      %v588 = vpop.f32.mrf.mxu0
      %v589 = vadd.f32 0.0, %v588
      %v590 = vpop.f32.mrf.mxu0
      %v591 = vpop.f32.mrf.mxu0
      %v592 = vadd.f32 0.0, %v591
      %v593 = vpop.f32.mrf.mxu0
      %594 = vmatprep.mubr.bf16.mxu0 0
      %595 = vmatmul.mubr.bf16.gmra.mxu0 %v543
      %v596 = vpop.f32.mrf.mxu0
      %v597 = vadd.f32 0.0, %v596
      %v598 = vpop.f32.mrf.mxu0
      %v599 = vpop.f32.mrf.mxu0
      %v600 = vadd.f32 0.0, %v599
      %v601 = vpop.f32.mrf.mxu0
      %602 = vmatprep.mubr.bf16.mxu0 0
      %603 = vmatmul.mubr.bf16.gmra.mxu0 %v546
      %v604 = vpop.f32.mrf.mxu0
      %v605 = vadd.f32 0.0, %v604
      %v606 = vpop.f32.mrf.mxu0
      %v607 = vpop.f32.mrf.mxu0
      %v608 = vadd.f32 0.0, %v607
      %v609 = vpop.f32.mrf.mxu0
      %610 = vmatprep.mubr.bf16.mxu0 0
      %611 = vmatmul.mubr.bf16.gmra.mxu0 %v549
      %v612 = vpop.f32.mrf.mxu0
      %v613 = vadd.f32 0.0, %v612
      %v614 = vpop.f32.mrf.mxu0
      %v615 = vpop.f32.mrf.mxu0
      %v616 = vadd.f32 0.0, %v615
      %v617 = vpop.f32.mrf.mxu0
      %618 = vdwg.mxu0
      %v619 = vadd.f32 %v380, %v589
      %v620 = vadd.f32 %v383, %v592
      %v621 = vadd.f32 %v388, %v597
      %v622 = vadd.f32 %v391, %v600
      %v623 = vadd.f32 %v396, %v605
      %v624 = vadd.f32 %v399, %v608
      %v625 = vadd.f32 %v404, %v613
      %v626 = vadd.f32 %v407, %v616
      %s627 = scalar_lea.vmem %s169, 144
      %v628 = vld [vmem:[%s627] sm:$0xf]
      %v629 = vld [vmem:[%s627 + $0x4] sm:$0x1]
      %v630 = vld [vmem:[%s627 + $0x8] sm:$0xf]
      %v631 = vld [vmem:[%s627 + $0xc] sm:$0x1]
      %v632 = vld [vmem:[%s627 + $0x10] sm:$0xf]
      %v633 = vld [vmem:[%s627 + $0x14] sm:$0x1]
      %v634 = vld [vmem:[%s627 + $0x18] sm:$0xf]
      %v635 = vld [vmem:[%s627 + $0x1c] sm:$0x1]
      %v636 = vld [vmem:[%s627 + $0x20] sm:$0xf]
      %v637 = vld [vmem:[%s627 + $0x24] sm:$0x1]
      %v638 = vld [vmem:[%s627 + $0x28] sm:$0xf]
      %v639 = vld [vmem:[%s627 + $0x2c] sm:$0x1]
      %v640 = vld [vmem:[%s627 + $0x30] sm:$0xf]
      %v641 = vld [vmem:[%s627 + $0x34] sm:$0x1]
      %v642 = vld [vmem:[%s627 + $0x38] sm:$0xf]
      %v643 = vld [vmem:[%s627 + $0x3c] sm:$0x1]
      %s644 = scalar_lea.vmem %s1, 6
      %v645 = vld [vmem:[%s644] sm:$0x3]
      %v654 = vunpack.c.l.b16 %v628
      %v655 = vunpack.c.l.b16 %v630
      %v656 = vunpack.c.l.b16 %v632
      %v657 = vunpack.c.l.b16 %v634
      %v658 = vunpack.c.l.b16 %v636
      %v659 = vunpack.c.l.b16 %v638
      %v660 = vunpack.c.l.b16 %v640
      %v661 = vunpack.c.l.b16 %v642
      %v662 = vpack.c.b16 %v655, %v654
      %v663 = vpack.c.b16 %v657, %v656
      %v664 = vpack.c.b16 %v659, %v658
      %v665 = vpack.c.b16 %v661, %v660
      %v667 = vsel %vm228, %v662, 0
      %v670 = vsel %vm228, %v663, 0
      %v673 = vsel %vm228, %v664, 0
      %v676 = vsel %vm228, %v665, 0
      %v679 = vsel %vm241, %v645, 0
      %681 = vmatprep.subr.bf16.mxu0 0
      %682 = vmatpush1.bf16.msra.mxu0 0
      %683 = vmatprep.subr.bf16.mxu0 0
      %684 = vmatpush1.bf16.msra.mxu0 0
      %685 = vmatprep.subr.bf16.mxu0 0
      %686 = vmatpush1.bf16.msra.mxu0 0
      %687 = vmatprep.subr.bf16.mxu0 0
      %688 = vmatpush1.bf16.msra.mxu0 0
      %689 = vmatprep.subr.bf16.mxu0 0
      %690 = vmatpush1.bf16.msra.mxu0 0
      %691 = vmatprep.subr.bf16.mxu0 0
      %692 = vmatpush1.bf16.msra.mxu0 0
      %693 = vmatprep.subr.bf16.mxu0 0
      %694 = vmatpush1.bf16.msra.mxu0 0
      %695 = vmatprep.subr.bf16.mxu0 0
      %696 = vmatpush1.bf16.msra.mxu0 %v679
      %697 = vmatprep.subr.bf16.mxu0 0
      %698 = vmatpush2.bf16.msra.mxu0 0
      %699 = vmatprep.subr.bf16.mxu0 0
      %700 = vmatpush2.bf16.msra.mxu0 0
      %701 = vmatprep.subr.bf16.mxu0 0
      %702 = vmatpush2.bf16.msra.mxu0 0
      %703 = vmatprep.subr.bf16.mxu0 0
      %704 = vmatpush2.bf16.msra.mxu0 0
      %705 = vmatprep.subr.bf16.mxu0 0
      %706 = vmatpush2.bf16.msra.mxu0 0
      %707 = vmatprep.subr.bf16.mxu0 0
      %708 = vmatpush2.bf16.msra.mxu0 0
      %709 = vmatprep.subr.bf16.mxu0 0
      %710 = vmatpush2.bf16.msra.mxu0 0
      %711 = vmatprep.subr.bf16.mxu0 0
      %712 = vmatpush2.bf16.msra.mxu0 0
      %713 = vmatprep.mubr.bf16.mxu0 0
      %714 = vmatmul.mubr.bf16.gmra.mxu0 %v667
      %v715 = vpop.f32.mrf.mxu0
      %v716 = vadd.f32 0.0, %v715
      %v717 = vpop.f32.mrf.mxu0
      %v718 = vpop.f32.mrf.mxu0
      %v719 = vadd.f32 0.0, %v718
      %v720 = vpop.f32.mrf.mxu0
      %721 = vmatprep.mubr.bf16.mxu0 0
      %722 = vmatmul.mubr.bf16.gmra.mxu0 %v670
      %v723 = vpop.f32.mrf.mxu0
      %v724 = vadd.f32 0.0, %v723
      %v725 = vpop.f32.mrf.mxu0
      %v726 = vpop.f32.mrf.mxu0
      %v727 = vadd.f32 0.0, %v726
      %v728 = vpop.f32.mrf.mxu0
      %729 = vmatprep.mubr.bf16.mxu0 0
      %730 = vmatmul.mubr.bf16.gmra.mxu0 %v673
      %v731 = vpop.f32.mrf.mxu0
      %v732 = vadd.f32 0.0, %v731
      %v733 = vpop.f32.mrf.mxu0
      %v734 = vpop.f32.mrf.mxu0
      %v735 = vadd.f32 0.0, %v734
      %v736 = vpop.f32.mrf.mxu0
      %737 = vmatprep.mubr.bf16.mxu0 0
      %738 = vmatmul.mubr.bf16.gmra.mxu0 %v676
      %v739 = vpop.f32.mrf.mxu0
      %v740 = vadd.f32 0.0, %v739
      %v741 = vpop.f32.mrf.mxu0
      %v742 = vpop.f32.mrf.mxu0
      %v743 = vadd.f32 0.0, %v742
      %v744 = vpop.f32.mrf.mxu0
      %745 = vdwg.mxu0
      %v746 = vadd.f32 %v619, %v716
      %v747 = vadd.f32 %v620, %v719
      %v748 = vadd.f32 %v621, %v724
      %v749 = vadd.f32 %v622, %v727
      %v750 = vadd.f32 %v623, %v732
      %v751 = vadd.f32 %v624, %v735
      %v752 = vadd.f32 %v625, %v740
      %v753 = vadd.f32 %v626, %v743
      %s754 = scalar_lea.vmem %s169, 216
      %v755 = vld [vmem:[%s754] sm:$0xf]
      %v756 = vld [vmem:[%s754 + $0x8] sm:$0xf]
      %v757 = vld [vmem:[%s754 + $0x10] sm:$0xf]
      %v758 = vld [vmem:[%s754 + $0x18] sm:$0xf]
      %v759 = vld [vmem:[%s754 + $0x20] sm:$0xf]
      %v760 = vld [vmem:[%s754 + $0x28] sm:$0xf]
      %v761 = vld [vmem:[%s754 + $0x30] sm:$0xf]
      %v762 = vld [vmem:[%s754 + $0x38] sm:$0xf]
      %s763 = scalar_lea.vmem %s1, 8
      %v764 = vld [vmem:[%s763] sm:$0x3]
      %v773 = vunpack.c.l.b16 %v755
      %v774 = vunpack.c.l.b16 %v756
      %v775 = vunpack.c.l.b16 %v757
      %v776 = vunpack.c.l.b16 %v758
      %v777 = vunpack.c.l.b16 %v759
      %v778 = vunpack.c.l.b16 %v760
      %v779 = vunpack.c.l.b16 %v761
      %v780 = vunpack.c.l.b16 %v762
      %v781 = vpack.c.b16 %v774, %v773
      %v782 = vpack.c.b16 %v776, %v775
      %v783 = vpack.c.b16 %v778, %v777
      %v784 = vpack.c.b16 %v780, %v779
      %v786 = vsel %vm228, %v781, 0
      %v789 = vsel %vm228, %v782, 0
      %v792 = vsel %vm228, %v783, 0
      %v795 = vsel %vm228, %v784, 0
      %v798 = vsel %vm241, %v764, 0
      %800 = vmatprep.subr.bf16.mxu0 0
      %801 = vmatpush1.bf16.msra.mxu0 0
      %802 = vmatprep.subr.bf16.mxu0 0
      %803 = vmatpush1.bf16.msra.mxu0 0
      %804 = vmatprep.subr.bf16.mxu0 0
      %805 = vmatpush1.bf16.msra.mxu0 0
      %806 = vmatprep.subr.bf16.mxu0 0
      %807 = vmatpush1.bf16.msra.mxu0 0
      %808 = vmatprep.subr.bf16.mxu0 0
      %809 = vmatpush1.bf16.msra.mxu0 0
      %810 = vmatprep.subr.bf16.mxu0 0
      %811 = vmatpush1.bf16.msra.mxu0 0
      %812 = vmatprep.subr.bf16.mxu0 0
      %813 = vmatpush1.bf16.msra.mxu0 0
      %814 = vmatprep.subr.bf16.mxu0 0
      %815 = vmatpush1.bf16.msra.mxu0 %v798
      %816 = vmatprep.subr.bf16.mxu0 0
      %817 = vmatpush2.bf16.msra.mxu0 0
      %818 = vmatprep.subr.bf16.mxu0 0
      %819 = vmatpush2.bf16.msra.mxu0 0
      %820 = vmatprep.subr.bf16.mxu0 0
      %821 = vmatpush2.bf16.msra.mxu0 0
      %822 = vmatprep.subr.bf16.mxu0 0
      %823 = vmatpush2.bf16.msra.mxu0 0
      %824 = vmatprep.subr.bf16.mxu0 0
      %825 = vmatpush2.bf16.msra.mxu0 0
      %826 = vmatprep.subr.bf16.mxu0 0
      %827 = vmatpush2.bf16.msra.mxu0 0
      %828 = vmatprep.subr.bf16.mxu0 0
      %829 = vmatpush2.bf16.msra.mxu0 0
      %830 = vmatprep.subr.bf16.mxu0 0
      %831 = vmatpush2.bf16.msra.mxu0 0
      %832 = vmatprep.mubr.bf16.mxu0 0
      %833 = vmatmul.mubr.bf16.gmra.mxu0 %v786
      %v834 = vpop.f32.mrf.mxu0
      %v835 = vadd.f32 0.0, %v834
      %v836 = vpop.f32.mrf.mxu0
      %v837 = vpop.f32.mrf.mxu0
      %v838 = vadd.f32 0.0, %v837
      %v839 = vpop.f32.mrf.mxu0
      %840 = vmatprep.mubr.bf16.mxu0 0
      %841 = vmatmul.mubr.bf16.gmra.mxu0 %v789
      %v842 = vpop.f32.mrf.mxu0
      %v843 = vadd.f32 0.0, %v842
      %v844 = vpop.f32.mrf.mxu0
      %v845 = vpop.f32.mrf.mxu0
      %v846 = vadd.f32 0.0, %v845
      %v847 = vpop.f32.mrf.mxu0
      %848 = vmatprep.mubr.bf16.mxu0 0
      %849 = vmatmul.mubr.bf16.gmra.mxu0 %v792
      %v850 = vpop.f32.mrf.mxu0
      %v851 = vadd.f32 0.0, %v850
      %v852 = vpop.f32.mrf.mxu0
      %v853 = vpop.f32.mrf.mxu0
      %v854 = vadd.f32 0.0, %v853
      %v855 = vpop.f32.mrf.mxu0
      %856 = vmatprep.mubr.bf16.mxu0 0
      %857 = vmatmul.mubr.bf16.gmra.mxu0 %v795
      %v858 = vpop.f32.mrf.mxu0
      %v859 = vadd.f32 0.0, %v858
      %v860 = vpop.f32.mrf.mxu0
      %v861 = vpop.f32.mrf.mxu0
      %v862 = vadd.f32 0.0, %v861
      %v863 = vpop.f32.mrf.mxu0
      %864 = vdwg.mxu0
      %v865 = vadd.f32 %v746, %v835
      %v866 = vadd.f32 %v747, %v838
      %v867 = vadd.f32 %v748, %v843
      %v868 = vadd.f32 %v749, %v846
      %v869 = vadd.f32 %v750, %v851
      %v870 = vadd.f32 %v751, %v854
      %v871 = vadd.f32 %v752, %v859
      %v872 = vadd.f32 %v753, %v862
      %v874 = vshrl.u32 %v628, 16
      %v876 = vrot.slane %v874, 4
      %v877 = vshll.u32 %v628, 16
      %v879 = vrot.slane %v877, 5
      %v880 = vor.u32 %v876, %v879
      %v881 = vrot.slane %v880, 4
      %v883 = vshll.u32 %v629, 16
      %v885 = vrot.slane %v883, 5
      %v886 = vsel %vm412, %v881, %v885
      %v888 = vshrl.u32 %v630, 16
      %v890 = vrot.slane %v888, 4
      %v891 = vshll.u32 %v630, 16
      %v893 = vrot.slane %v891, 5
      %v894 = vor.u32 %v890, %v893
      %v895 = vrot.slane %v894, 4
      %v897 = vshll.u32 %v631, 16
      %v899 = vrot.slane %v897, 5
      %v900 = vsel %vm412, %v895, %v899
      %v902 = vshrl.u32 %v632, 16
      %v904 = vrot.slane %v902, 4
      %v905 = vshll.u32 %v632, 16
      %v907 = vrot.slane %v905, 5
      %v908 = vor.u32 %v904, %v907
      %v909 = vrot.slane %v908, 4
      %v911 = vshll.u32 %v633, 16
      %v913 = vrot.slane %v911, 5
      %v914 = vsel %vm412, %v909, %v913
      %v916 = vshrl.u32 %v634, 16
      %v918 = vrot.slane %v916, 4
      %v919 = vshll.u32 %v634, 16
      %v921 = vrot.slane %v919, 5
      %v922 = vor.u32 %v918, %v921
      %v923 = vrot.slane %v922, 4
      %v925 = vshll.u32 %v635, 16
      %v927 = vrot.slane %v925, 5
      %v928 = vsel %vm412, %v923, %v927
      %v930 = vshrl.u32 %v636, 16
      %v932 = vrot.slane %v930, 4
      %v933 = vshll.u32 %v636, 16
      %v935 = vrot.slane %v933, 5
      %v936 = vor.u32 %v932, %v935
      %v937 = vrot.slane %v936, 4
      %v939 = vshll.u32 %v637, 16
      %v941 = vrot.slane %v939, 5
      %v942 = vsel %vm412, %v937, %v941
      %v944 = vshrl.u32 %v638, 16
      %v946 = vrot.slane %v944, 4
      %v947 = vshll.u32 %v638, 16
      %v949 = vrot.slane %v947, 5
      %v950 = vor.u32 %v946, %v949
      %v951 = vrot.slane %v950, 4
      %v953 = vshll.u32 %v639, 16
      %v955 = vrot.slane %v953, 5
      %v956 = vsel %vm412, %v951, %v955
      %v958 = vshrl.u32 %v640, 16
      %v960 = vrot.slane %v958, 4
      %v961 = vshll.u32 %v640, 16
      %v963 = vrot.slane %v961, 5
      %v964 = vor.u32 %v960, %v963
      %v965 = vrot.slane %v964, 4
      %v967 = vshll.u32 %v641, 16
      %v969 = vrot.slane %v967, 5
      %v970 = vsel %vm412, %v965, %v969
      %v972 = vshrl.u32 %v642, 16
      %v974 = vrot.slane %v972, 4
      %v975 = vshll.u32 %v642, 16
      %v977 = vrot.slane %v975, 5
      %v978 = vor.u32 %v974, %v977
      %v979 = vrot.slane %v978, 4
      %v981 = vshll.u32 %v643, 16
      %v983 = vrot.slane %v981, 5
      %v984 = vsel %vm412, %v979, %v983
      %s985 = scalar_lea.vmem %s1, 10
      %v986 = vld [vmem:[%s985] sm:$0x3]
      %v987 = vunpack.c.l.b16 %v886
      %v988 = vunpack.c.l.b16 %v900
      %v989 = vunpack.c.l.b16 %v914
      %v990 = vunpack.c.l.b16 %v928
      %v991 = vunpack.c.l.b16 %v942
      %v992 = vunpack.c.l.b16 %v956
      %v993 = vunpack.c.l.b16 %v970
      %v994 = vunpack.c.l.b16 %v984
      %v995 = vpack.c.b16 %v988, %v987
      %v996 = vpack.c.b16 %v990, %v989
      %v997 = vpack.c.b16 %v992, %v991
      %v998 = vpack.c.b16 %v994, %v993
      %v1000 = vsel %vm228, %v995, 0
      %v1003 = vsel %vm228, %v996, 0
      %v1006 = vsel %vm228, %v997, 0
      %v1009 = vsel %vm228, %v998, 0
      %v1012 = vsel %vm241, %v986, 0
      %1014 = vmatprep.subr.bf16.mxu0 0
      %1015 = vmatpush1.bf16.msra.mxu0 0
      %1016 = vmatprep.subr.bf16.mxu0 0
      %1017 = vmatpush1.bf16.msra.mxu0 0
      %1018 = vmatprep.subr.bf16.mxu0 0
      %1019 = vmatpush1.bf16.msra.mxu0 0
      %1020 = vmatprep.subr.bf16.mxu0 0
      %1021 = vmatpush1.bf16.msra.mxu0 0
      %1022 = vmatprep.subr.bf16.mxu0 0
      %1023 = vmatpush1.bf16.msra.mxu0 0
      %1024 = vmatprep.subr.bf16.mxu0 0
      %1025 = vmatpush1.bf16.msra.mxu0 0
      %1026 = vmatprep.subr.bf16.mxu0 0
      %1027 = vmatpush1.bf16.msra.mxu0 0
      %1028 = vmatprep.subr.bf16.mxu0 0
      %1029 = vmatpush1.bf16.msra.mxu0 %v1012
      %1030 = vmatprep.subr.bf16.mxu0 0
      %1031 = vmatpush2.bf16.msra.mxu0 0
      %1032 = vmatprep.subr.bf16.mxu0 0
      %1033 = vmatpush2.bf16.msra.mxu0 0
      %1034 = vmatprep.subr.bf16.mxu0 0
      %1035 = vmatpush2.bf16.msra.mxu0 0
      %1036 = vmatprep.subr.bf16.mxu0 0
      %1037 = vmatpush2.bf16.msra.mxu0 0
      %1038 = vmatprep.subr.bf16.mxu0 0
      %1039 = vmatpush2.bf16.msra.mxu0 0
      %1040 = vmatprep.subr.bf16.mxu0 0
      %1041 = vmatpush2.bf16.msra.mxu0 0
      %1042 = vmatprep.subr.bf16.mxu0 0
      %1043 = vmatpush2.bf16.msra.mxu0 0
      %1044 = vmatprep.subr.bf16.mxu0 0
      %1045 = vmatpush2.bf16.msra.mxu0 0
      %1046 = vmatprep.mubr.bf16.mxu0 0
      %1047 = vmatmul.mubr.bf16.gmra.mxu0 %v1000
      %v1048 = vpop.f32.mrf.mxu0
      %v1049 = vadd.f32 0.0, %v1048
      %v1050 = vpop.f32.mrf.mxu0
      %v1051 = vpop.f32.mrf.mxu0
      %v1052 = vadd.f32 0.0, %v1051
      %v1053 = vpop.f32.mrf.mxu0
      %1054 = vmatprep.mubr.bf16.mxu0 0
      %1055 = vmatmul.mubr.bf16.gmra.mxu0 %v1003
      %v1056 = vpop.f32.mrf.mxu0
      %v1057 = vadd.f32 0.0, %v1056
      %v1058 = vpop.f32.mrf.mxu0
      %v1059 = vpop.f32.mrf.mxu0
      %v1060 = vadd.f32 0.0, %v1059
      %v1061 = vpop.f32.mrf.mxu0
      %1062 = vmatprep.mubr.bf16.mxu0 0
      %1063 = vmatmul.mubr.bf16.gmra.mxu0 %v1006
      %v1064 = vpop.f32.mrf.mxu0
      %v1065 = vadd.f32 0.0, %v1064
      %v1066 = vpop.f32.mrf.mxu0
      %v1067 = vpop.f32.mrf.mxu0
      %v1068 = vadd.f32 0.0, %v1067
      %v1069 = vpop.f32.mrf.mxu0
      %1070 = vmatprep.mubr.bf16.mxu0 0
      %1071 = vmatmul.mubr.bf16.gmra.mxu0 %v1009
      %v1072 = vpop.f32.mrf.mxu0
      %v1073 = vadd.f32 0.0, %v1072
      %v1074 = vpop.f32.mrf.mxu0
      %v1075 = vpop.f32.mrf.mxu0
      %v1076 = vadd.f32 0.0, %v1075
      %v1077 = vpop.f32.mrf.mxu0
      %1078 = vdwg.mxu0
      %v1079 = vadd.f32 %v865, %v1049
      %v1080 = vadd.f32 %v866, %v1052
      %v1081 = vadd.f32 %v867, %v1057
      %v1082 = vadd.f32 %v868, %v1060
      %v1083 = vadd.f32 %v869, %v1065
      %v1084 = vadd.f32 %v870, %v1068
      %v1085 = vadd.f32 %v871, %v1073
      %v1086 = vadd.f32 %v872, %v1076
      %s1087 = scalar_lea.vmem %s1, 12
      %v1088 = vld [vmem:[%s1087] sm:$0x3]
      %v1090 = vunpack.c.l.b16 %v193
      %v1091 = vpack.c.b16 %v320, %v319
      %v1092 = vpack.c.b16 %v322, %v321
      %v1093 = vpack.c.b16 %v324, %v323
      %v1094 = vpack.c.b16 %v1090, %v325
      %v1096 = vsel %vm228, %v1091, 0
      %v1099 = vsel %vm228, %v1092, 0
      %v1102 = vsel %vm228, %v1093, 0
      %v1105 = vsel %vm228, %v1094, 0
      %v1108 = vsel %vm241, %v1088, 0
      %1110 = vmatprep.subr.bf16.mxu0 0
      %1111 = vmatpush1.bf16.msra.mxu0 0
      %1112 = vmatprep.subr.bf16.mxu0 0
      %1113 = vmatpush1.bf16.msra.mxu0 0
      %1114 = vmatprep.subr.bf16.mxu0 0
      %1115 = vmatpush1.bf16.msra.mxu0 0
      %1116 = vmatprep.subr.bf16.mxu0 0
      %1117 = vmatpush1.bf16.msra.mxu0 0
      %1118 = vmatprep.subr.bf16.mxu0 0
      %1119 = vmatpush1.bf16.msra.mxu0 0
      %1120 = vmatprep.subr.bf16.mxu0 0
      %1121 = vmatpush1.bf16.msra.mxu0 0
      %1122 = vmatprep.subr.bf16.mxu0 0
      %1123 = vmatpush1.bf16.msra.mxu0 0
      %1124 = vmatprep.subr.bf16.mxu0 0
      %1125 = vmatpush1.bf16.msra.mxu0 %v1108
      %1126 = vmatprep.subr.bf16.mxu0 0
      %1127 = vmatpush2.bf16.msra.mxu0 0
      %1128 = vmatprep.subr.bf16.mxu0 0
      %1129 = vmatpush2.bf16.msra.mxu0 0
      %1130 = vmatprep.subr.bf16.mxu0 0
      %1131 = vmatpush2.bf16.msra.mxu0 0
      %1132 = vmatprep.subr.bf16.mxu0 0
      %1133 = vmatpush2.bf16.msra.mxu0 0
      %1134 = vmatprep.subr.bf16.mxu0 0
      %1135 = vmatpush2.bf16.msra.mxu0 0
      %1136 = vmatprep.subr.bf16.mxu0 0
      %1137 = vmatpush2.bf16.msra.mxu0 0
      %1138 = vmatprep.subr.bf16.mxu0 0
      %1139 = vmatpush2.bf16.msra.mxu0 0
      %1140 = vmatprep.subr.bf16.mxu0 0
      %1141 = vmatpush2.bf16.msra.mxu0 0
      %1142 = vmatprep.mubr.bf16.mxu0 0
      %1143 = vmatmul.mubr.bf16.gmra.mxu0 %v1096
      %v1144 = vpop.f32.mrf.mxu0
      %v1145 = vadd.f32 0.0, %v1144
      %v1146 = vpop.f32.mrf.mxu0
      %v1147 = vpop.f32.mrf.mxu0
      %v1148 = vadd.f32 0.0, %v1147
      %v1149 = vpop.f32.mrf.mxu0
      %1150 = vmatprep.mubr.bf16.mxu0 0
      %1151 = vmatmul.mubr.bf16.gmra.mxu0 %v1099
      %v1152 = vpop.f32.mrf.mxu0
      %v1153 = vadd.f32 0.0, %v1152
      %v1154 = vpop.f32.mrf.mxu0
      %v1155 = vpop.f32.mrf.mxu0
      %v1156 = vadd.f32 0.0, %v1155
      %v1157 = vpop.f32.mrf.mxu0
      %1158 = vmatprep.mubr.bf16.mxu0 0
      %1159 = vmatmul.mubr.bf16.gmra.mxu0 %v1102
      %v1160 = vpop.f32.mrf.mxu0
      %v1161 = vadd.f32 0.0, %v1160
      %v1162 = vpop.f32.mrf.mxu0
      %v1163 = vpop.f32.mrf.mxu0
      %v1164 = vadd.f32 0.0, %v1163
      %v1165 = vpop.f32.mrf.mxu0
      %1166 = vmatprep.mubr.bf16.mxu0 0
      %1167 = vmatmul.mubr.bf16.gmra.mxu0 %v1105
      %v1168 = vpop.f32.mrf.mxu0
      %v1169 = vadd.f32 0.0, %v1168
      %v1170 = vpop.f32.mrf.mxu0
      %v1171 = vpop.f32.mrf.mxu0
      %v1172 = vadd.f32 0.0, %v1171
      %v1173 = vpop.f32.mrf.mxu0
      %1174 = vdwg.mxu0
      %v1175 = vadd.f32 %v1079, %v1145
      %v1176 = vadd.f32 %v1080, %v1148
      %v1177 = vadd.f32 %v1081, %v1153
      %v1178 = vadd.f32 %v1082, %v1156
      %v1179 = vadd.f32 %v1083, %v1161
      %v1180 = vadd.f32 %v1084, %v1164
      %v1181 = vadd.f32 %v1085, %v1169
      %v1182 = vadd.f32 %v1086, %v1172
      %s1183 = scalar_lea.vmem %s1, 14
      %v1184 = vld [vmem:[%s1183] sm:$0x3]
      %v1186 = vunpack.c.l.b16 %v205
      %v1187 = vpack.c.b16 %v218, %v217
      %v1188 = vpack.c.b16 %v220, %v219
      %v1189 = vpack.c.b16 %v222, %v221
      %v1190 = vpack.c.b16 %v1186, %v223
      %v1192 = vsel %vm228, %v1187, 0
      %v1195 = vsel %vm228, %v1188, 0
      %v1198 = vsel %vm228, %v1189, 0
      %v1201 = vsel %vm228, %v1190, 0
      %v1204 = vsel %vm241, %v1184, 0
      %1206 = vmatprep.subr.bf16.mxu0 0
      %1207 = vmatpush1.bf16.msra.mxu0 0
      %1208 = vmatprep.subr.bf16.mxu0 0
      %1209 = vmatpush1.bf16.msra.mxu0 0
      %1210 = vmatprep.subr.bf16.mxu0 0
      %1211 = vmatpush1.bf16.msra.mxu0 0
      %1212 = vmatprep.subr.bf16.mxu0 0
      %1213 = vmatpush1.bf16.msra.mxu0 0
      %1214 = vmatprep.subr.bf16.mxu0 0
      %1215 = vmatpush1.bf16.msra.mxu0 0
      %1216 = vmatprep.subr.bf16.mxu0 0
      %1217 = vmatpush1.bf16.msra.mxu0 0
      %1218 = vmatprep.subr.bf16.mxu0 0
      %1219 = vmatpush1.bf16.msra.mxu0 0
      %1220 = vmatprep.subr.bf16.mxu0 0
      %1221 = vmatpush1.bf16.msra.mxu0 %v1204
      %1222 = vmatprep.subr.bf16.mxu0 0
      %1223 = vmatpush2.bf16.msra.mxu0 0
      %1224 = vmatprep.subr.bf16.mxu0 0
      %1225 = vmatpush2.bf16.msra.mxu0 0
      %1226 = vmatprep.subr.bf16.mxu0 0
      %1227 = vmatpush2.bf16.msra.mxu0 0
      %1228 = vmatprep.subr.bf16.mxu0 0
      %1229 = vmatpush2.bf16.msra.mxu0 0
      %1230 = vmatprep.subr.bf16.mxu0 0
      %1231 = vmatpush2.bf16.msra.mxu0 0
      %1232 = vmatprep.subr.bf16.mxu0 0
      %1233 = vmatpush2.bf16.msra.mxu0 0
      %1234 = vmatprep.subr.bf16.mxu0 0
      %1235 = vmatpush2.bf16.msra.mxu0 0
      %1236 = vmatprep.subr.bf16.mxu0 0
      %1237 = vmatpush2.bf16.msra.mxu0 0
      %1238 = vmatprep.mubr.bf16.mxu0 0
      %1239 = vmatmul.mubr.bf16.gmra.mxu0 %v1192
      %v1240 = vpop.f32.mrf.mxu0
      %v1241 = vadd.f32 0.0, %v1240
      %v1242 = vpop.f32.mrf.mxu0
      %v1243 = vpop.f32.mrf.mxu0
      %v1244 = vadd.f32 0.0, %v1243
      %v1245 = vpop.f32.mrf.mxu0
      %1246 = vmatprep.mubr.bf16.mxu0 0
      %1247 = vmatmul.mubr.bf16.gmra.mxu0 %v1195
      %v1248 = vpop.f32.mrf.mxu0
      %v1249 = vadd.f32 0.0, %v1248
      %v1250 = vpop.f32.mrf.mxu0
      %v1251 = vpop.f32.mrf.mxu0
      %v1252 = vadd.f32 0.0, %v1251
      %v1253 = vpop.f32.mrf.mxu0
      %1254 = vmatprep.mubr.bf16.mxu0 0
      %1255 = vmatmul.mubr.bf16.gmra.mxu0 %v1198
      %v1256 = vpop.f32.mrf.mxu0
      %v1257 = vadd.f32 0.0, %v1256
      %v1258 = vpop.f32.mrf.mxu0
      %v1259 = vpop.f32.mrf.mxu0
      %v1260 = vadd.f32 0.0, %v1259
      %v1261 = vpop.f32.mrf.mxu0
      %1262 = vmatprep.mubr.bf16.mxu0 0
      %1263 = vmatmul.mubr.bf16.gmra.mxu0 %v1201
      %v1264 = vpop.f32.mrf.mxu0
      %v1265 = vadd.f32 0.0, %v1264
      %v1266 = vpop.f32.mrf.mxu0
      %v1267 = vpop.f32.mrf.mxu0
      %v1268 = vadd.f32 0.0, %v1267
      %v1269 = vpop.f32.mrf.mxu0
      %1270 = vdwg.mxu0
      %v1271 = vadd.f32 %v1175, %v1241
      %v1272 = vadd.f32 %v1176, %v1244
      %v1273 = vadd.f32 %v1177, %v1249
      %v1274 = vadd.f32 %v1178, %v1252
      %v1275 = vadd.f32 %v1179, %v1257
      %v1276 = vadd.f32 %v1180, %v1260
      %v1277 = vadd.f32 %v1181, %v1265
      %v1278 = vadd.f32 %v1182, %v1268
      %v1280 = vshrl.u32 %v193, 16
      %v1282 = vrot.slane %v1280, 4
      %v1283 = vshll.u32 %v193, 16
      %v1285 = vrot.slane %v1283, 5
      %v1286 = vor.u32 %v1282, %v1285
      %v1287 = vrot.slane %v1286, 4
      %v1289 = vshll.u32 %v194, 16
      %v1291 = vrot.slane %v1289, 5
      %v1292 = vsel %vm412, %v1287, %v1291
      %s1293 = scalar_lea.vmem %s1, 16
      %v1294 = vld [vmem:[%s1293] sm:$0x3]
      %v1295 = vunpack.c.l.b16 %v1292
      %v1296 = vpack.c.b16 %v529, %v528
      %v1297 = vpack.c.b16 %v531, %v530
      %v1298 = vpack.c.b16 %v533, %v532
      %v1299 = vpack.c.b16 %v1295, %v534
      %v1301 = vsel %vm228, %v1296, 0
      %v1304 = vsel %vm228, %v1297, 0
      %v1307 = vsel %vm228, %v1298, 0
      %v1310 = vsel %vm228, %v1299, 0
      %v1313 = vsel %vm241, %v1294, 0
      %1315 = vmatprep.subr.bf16.mxu0 0
      %1316 = vmatpush1.bf16.msra.mxu0 0
      %1317 = vmatprep.subr.bf16.mxu0 0
      %1318 = vmatpush1.bf16.msra.mxu0 0
      %1319 = vmatprep.subr.bf16.mxu0 0
      %1320 = vmatpush1.bf16.msra.mxu0 0
      %1321 = vmatprep.subr.bf16.mxu0 0
      %1322 = vmatpush1.bf16.msra.mxu0 0
      %1323 = vmatprep.subr.bf16.mxu0 0
      %1324 = vmatpush1.bf16.msra.mxu0 0
      %1325 = vmatprep.subr.bf16.mxu0 0
      %1326 = vmatpush1.bf16.msra.mxu0 0
      %1327 = vmatprep.subr.bf16.mxu0 0
      %1328 = vmatpush1.bf16.msra.mxu0 0
      %1329 = vmatprep.subr.bf16.mxu0 0
      %1330 = vmatpush1.bf16.msra.mxu0 %v1313
      %1331 = vmatprep.subr.bf16.mxu0 0
      %1332 = vmatpush2.bf16.msra.mxu0 0
      %1333 = vmatprep.subr.bf16.mxu0 0
      %1334 = vmatpush2.bf16.msra.mxu0 0
      %1335 = vmatprep.subr.bf16.mxu0 0
      %1336 = vmatpush2.bf16.msra.mxu0 0
      %1337 = vmatprep.subr.bf16.mxu0 0
      %1338 = vmatpush2.bf16.msra.mxu0 0
      %1339 = vmatprep.subr.bf16.mxu0 0
      %1340 = vmatpush2.bf16.msra.mxu0 0
      %1341 = vmatprep.subr.bf16.mxu0 0
      %1342 = vmatpush2.bf16.msra.mxu0 0
      %1343 = vmatprep.subr.bf16.mxu0 0
      %1344 = vmatpush2.bf16.msra.mxu0 0
      %1345 = vmatprep.subr.bf16.mxu0 0
      %1346 = vmatpush2.bf16.msra.mxu0 0
      %1347 = vmatprep.mubr.bf16.mxu0 0
      %1348 = vmatmul.mubr.bf16.gmra.mxu0 %v1301
      %v1349 = vpop.f32.mrf.mxu0
      %v1350 = vadd.f32 0.0, %v1349
      %v1351 = vpop.f32.mrf.mxu0
      %v1352 = vpop.f32.mrf.mxu0
      %v1353 = vadd.f32 0.0, %v1352
      %v1354 = vpop.f32.mrf.mxu0
      %1355 = vmatprep.mubr.bf16.mxu0 0
      %1356 = vmatmul.mubr.bf16.gmra.mxu0 %v1304
      %v1357 = vpop.f32.mrf.mxu0
      %v1358 = vadd.f32 0.0, %v1357
      %v1359 = vpop.f32.mrf.mxu0
      %v1360 = vpop.f32.mrf.mxu0
      %v1361 = vadd.f32 0.0, %v1360
      %v1362 = vpop.f32.mrf.mxu0
      %1363 = vmatprep.mubr.bf16.mxu0 0
      %1364 = vmatmul.mubr.bf16.gmra.mxu0 %v1307
      %v1365 = vpop.f32.mrf.mxu0
      %v1366 = vadd.f32 0.0, %v1365
      %v1367 = vpop.f32.mrf.mxu0
      %v1368 = vpop.f32.mrf.mxu0
      %v1369 = vadd.f32 0.0, %v1368
      %v1370 = vpop.f32.mrf.mxu0
      %1371 = vmatprep.mubr.bf16.mxu0 0
      %1372 = vmatmul.mubr.bf16.gmra.mxu0 %v1310
      %v1373 = vpop.f32.mrf.mxu0
      %v1374 = vadd.f32 0.0, %v1373
      %v1375 = vpop.f32.mrf.mxu0
      %v1376 = vpop.f32.mrf.mxu0
      %v1377 = vadd.f32 0.0, %v1376
      %v1378 = vpop.f32.mrf.mxu0
      %1379 = vdwg.mxu0
      %v1380 = vadd.f32 %v1271, %v1350
      %v1381 = vadd.f32 %v1272, %v1353
      %v1382 = vadd.f32 %v1273, %v1358
      %v1383 = vadd.f32 %v1274, %v1361
      %v1384 = vadd.f32 %v1275, %v1366
      %v1385 = vadd.f32 %v1276, %v1369
      %v1386 = vadd.f32 %v1277, %v1374
      %v1387 = vadd.f32 %v1278, %v1377
      %v1388 = vld [vmem:[%s2] sm:$0x1]
      %v1390 = vlaneseq
      %v1391 = vshrl.u32 %v1390, 7
      %v1392 = vsub.s32 0, %v1391
      %v1393 = vrot.slane %v1388, %v1392
      %v1395 = vadd.f32 %v1380, %v1393
      %v1396 = vadd.f32 %v1381, %v1393
      %v1397 = vadd.f32 %v1382, %v1393
      %v1398 = vadd.f32 %v1383, %v1393
      %v1399 = vadd.f32 %v1384, %v1393
      %v1400 = vadd.f32 %v1385, %v1393
      %v1401 = vadd.f32 %v1386, %v1393
      %v1402 = vadd.f32 %v1387, %v1393
      %vm1403 = vcmp.ge.f32.partialorder %v1395, 0.0
      %vm1404 = vcmp.ge.f32.partialorder %v1396, 0.0
      %vm1405 = vcmp.ge.f32.partialorder %v1397, 0.0
      %vm1406 = vcmp.ge.f32.partialorder %v1398, 0.0
      %vm1407 = vcmp.ge.f32.partialorder %v1399, 0.0
      %vm1408 = vcmp.ge.f32.partialorder %v1400, 0.0
      %vm1409 = vcmp.ge.f32.partialorder %v1401, 0.0
      %vm1410 = vcmp.ge.f32.partialorder %v1402, 0.0
      %v1411 = vmul.f32 %v1395, 0.01
      %v1412 = vmul.f32 %v1396, 0.01
      %v1413 = vmul.f32 %v1397, 0.01
      %v1414 = vmul.f32 %v1398, 0.01
      %v1415 = vmul.f32 %v1399, 0.01
      %v1416 = vmul.f32 %v1400, 0.01
      %v1417 = vmul.f32 %v1401, 0.01
      %v1418 = vmul.f32 %v1402, 0.01
      %v1419 = vsel %vm1403, %v1395, %v1411
      %v1420 = vsel %vm1404, %v1396, %v1412
      %v1421 = vsel %vm1405, %v1397, %v1413
      %v1422 = vsel %vm1406, %v1398, %v1414
      %v1423 = vsel %vm1407, %v1399, %v1415
      %v1424 = vsel %vm1408, %v1400, %v1416
      %v1425 = vsel %vm1409, %v1401, %v1417
      %v1426 = vsel %vm1410, %v1402, %v1418
      %v1427 = vpack.c.bf16 %v1419, %v1419
      %v1428 = vpack.c.bf16 %v1420, %v1420
      %v1429 = vpack.c.bf16 %v1421, %v1421
      %v1430 = vpack.c.bf16 %v1422, %v1422
      %v1431 = vpack.c.bf16 %v1423, %v1423
      %v1432 = vpack.c.bf16 %v1424, %v1424
      %v1433 = vpack.c.bf16 %v1425, %v1425
      %v1434 = vpack.c.bf16 %v1426, %v1426
      %vm1435 = vcmask 257024
      %1436 = vst.msk [vmem:[%s175] sm:$0xf] %vm1435, %v1427
      %1437 = vst.msk [vmem:[%s175 + $0x4] sm:$0xf] %vm1435, %v1428
      %1438 = vst.msk [vmem:[%s175 + $0x8] sm:$0xf] %vm1435, %v1429
      %1439 = vst.msk [vmem:[%s175 + $0xc] sm:$0xf] %vm1435, %v1430
      %1440 = vst.msk [vmem:[%s175 + $0x10] sm:$0xf] %vm1435, %v1431
      %1441 = vst.msk [vmem:[%s175 + $0x14] sm:$0xf] %vm1435, %v1432
      %1442 = vst.msk [vmem:[%s175 + $0x18] sm:$0xf] %vm1435, %v1433
      %1443 = vst.msk [vmem:[%s175 + $0x1c] sm:$0xf] %vm1435, %v1434
      %p1444 = scmp.lt.s32.totalorder %s14, 1
      %s1445 = scalar_select %p1444, %s14, 1
      %s1446 = smul.addr %s1445, 8
      %s1447 = smul.addr %s1446, 4
      %s1448 = scalar_lea.vmem %s3, %s1447
      // Predicated region
      $region33: #{gradual_style_block_forward.3} parent=31 // pred_check
        %p1449 = pneg %p100
      $region34: #{gradual_style_block_forward.3} parent=31 // pred_check_branch
        %1451 = sbr.rel (%p1449) target = $region36
      $region35: #{gradual_style_block_forward.3} parent=31 // pred_region
        _
      $region36: #{gradual_style_block_forward.3} parent=31 // pred_fallthru
        _
    $region32: #{gradual_style_block_forward.3} parent=5 // pred_fallthru
      _
    %p1452 = scmp.le.s32.totalorder 2, %s9
    // Predicated region
    $region37: #{gradual_style_block_forward.3} parent=5 // pred_check
      %p1453 = pneg %p1452
    $region38: #{gradual_style_block_forward.3} parent=5 // pred_check_branch
      %1455 = sbr.rel (%p1453) target = $region40
    $region39: #{gradual_style_block_forward.3} parent=5 // pred_region
      %s1456 = ssub.s32 %s9, 2
      // Predicated region
      $region41: #{gradual_style_block_forward.3} parent=39 // pred_check
        %p1457 = pneg %p106
      $region42: #{gradual_style_block_forward.3} parent=39 // pred_check_branch
        %1459 = sbr.rel (%p1457) target = $region44
      $region43: #{gradual_style_block_forward.3} parent=39 // pred_region
        %p1460 = scmp.lt.s32.totalorder %s15, 1
        %s1461 = scalar_select %p1460, %s15, 1
        %s1462 = smul.addr %s1461, 8
        %s1463 = smul.addr %s1462, 4
        %s1464 = scalar_lea.vmem %s3, %s1463
      $region44: #{gradual_style_block_forward.3} parent=39 // pred_fallthru
        _
    $region40: #{gradual_style_block_forward.3} parent=5 // pred_fallthru
      _
  $region6: #{gradual_style_block_forward.3} parent=0 // loop_footer
    %s13 = sadd.s32 1, %s9
  $region7: #{gradual_style_block_forward.3} parent=0 // loop_footer_branch
    %8 = sbr.rel target = $region3
  $region8: #{gradual_style_block_forward.3} parent=0 // loop_exit
    _

// kernel: gradual_style_block_forward.4
$region0: #{gradual_style_block_forward.4}
  #allocation0 [shape = 'u32[]', space=smem, size = 0x4, offset = 0x4, fixed_abs, tag = 'smem constant byte address 0x4 - core index']
  #allocation1 [shape = 'u32[144,128]{1,0:T(1,128)}', space=vmem, size = 0x12000, scoped, tag = 'internal scratch']
  %s0 = inlined_call_operand.vmem [shape: bf16[8,5,5,32], index: 0, kind: input, shape index: {}]
  %s1 = inlined_call_operand.vmem [shape: bf16[9,32,32], index: 1, kind: input, shape index: {}]
  %s2 = inlined_call_operand.vmem [shape: f32[1,32], index: 2, kind: input, shape index: {}]
  %s3 = inlined_call_operand.vmem [shape: bf16[2,4,4,32], index: 3, kind: output, shape index: {}]
  %s4 = sld [smem:[#allocation0]]
  $region45: #{gradual_style_block_forward.4} parent=0
    _
  %s6 = ssub.s32 1, %s4
  %s7 = scalar_select 0, %s6, %s4
  loop: start=0, step=1, limit=4
  $region2: #{gradual_style_block_forward.4} parent=0 // loop_pre_header
    _
  $region3: #{gradual_style_block_forward.4} parent=0 // loop_header
    %s9 = sphi 0, %s13
    %p10 = scmp.ge.s32.totalorder %s9, 4
    %s19 = sphi 0, %s21
    %s22 = sphi 0, %s19
    %s23 = sphi 0, %s22
    %s39 = sphi 0, %s23
    %s43 = sphi 0, %s43
    %s45 = sphi 0, %s43
    %s46 = sphi 0, %s45
    %s60 = sphi 0, %s46
    %s64 = sphi 0, %s64
    %s66 = sphi 0, %s64
    %s67 = sphi 0, %s66
    %s81 = sphi 0, %s67
    %s87 = sphi 0, %s89
    %s90 = sphi 0, %s87
    %s91 = sphi 0, %s90
    %s107 = sphi 0, %s91
  $region4: #{gradual_style_block_forward.4} parent=0 // loop_header_branch
    %12 = sbr.rel (%p10) target = $region8
  $region5: #{gradual_style_block_forward.4} parent=0 // loop_body
    %s14 = ssub.s32 %s9, 1
    %s15 = ssub.s32 %s9, 2
    %s16 = sadd.s32 %s9, 1
    %s17 = ssub.s32 %s9, %s16
    %p18 = scmp.eq.s32.totalorder %s17, 0
    %s20 = sadd.s32 %s19, 1
    %s21 = scalar_select %p18, %s19, %s20
    %p24 = pneg %p18
    %p25 = scmp.eq.s32.totalorder %s9, 1
    %p26 = por %p24, %p25
    %p27 = scmp.ne.s32.totalorder %s19, %s22
    %p28 = scmp.eq.s32.totalorder %s9, 0
    %p29 = por %p27, %p28
    %p30 = scmp.ne.s32.totalorder %s19, %s22
    %p31 = scmp.eq.s32.totalorder %s14, 1
    %p32 = por %p30, %p31
    %p33 = scmp.ne.s32.totalorder %s22, %s23
    %p34 = scmp.eq.s32.totalorder %s14, 0
    %p35 = por %p33, %p34
    %p36 = scmp.ne.s32.totalorder %s22, %s23
    %p37 = scmp.eq.s32.totalorder %s15, 1
    %p38 = por %p36, %p37
    %p40 = scmp.ne.s32.totalorder %s23, %s39
    %p41 = scmp.eq.s32.totalorder %s15, 0
    %p42 = por %p40, %p41
    %s44 = sadd.s32 %s43, 1
    %p47 = scmp.eq.s32.totalorder %s9, 1
    %p48 = scmp.ne.s32.totalorder %s43, %s45
    %p49 = scmp.eq.s32.totalorder %s9, 0
    %p50 = por %p48, %p49
    %p51 = scmp.ne.s32.totalorder %s43, %s45
    %p52 = scmp.eq.s32.totalorder %s14, 1
    %p53 = por %p51, %p52
    %p54 = scmp.ne.s32.totalorder %s45, %s46
    %p55 = scmp.eq.s32.totalorder %s14, 0
    %p56 = por %p54, %p55
    %p57 = scmp.ne.s32.totalorder %s45, %s46
    %p58 = scmp.eq.s32.totalorder %s15, 1
    %p59 = por %p57, %p58
    %p61 = scmp.ne.s32.totalorder %s46, %s60
    %p62 = scmp.eq.s32.totalorder %s15, 0
    %p63 = por %p61, %p62
    %s65 = sadd.s32 %s64, 1
    %p68 = scmp.eq.s32.totalorder %s9, 1
    %p69 = scmp.ne.s32.totalorder %s64, %s66
    %p70 = scmp.eq.s32.totalorder %s9, 0
    %p71 = por %p69, %p70
    %p72 = scmp.ne.s32.totalorder %s64, %s66
    %p73 = scmp.eq.s32.totalorder %s14, 1
    %p74 = por %p72, %p73
    %p75 = scmp.ne.s32.totalorder %s66, %s67
    %p76 = scmp.eq.s32.totalorder %s14, 0
    %p77 = por %p75, %p76
    %p78 = scmp.ne.s32.totalorder %s66, %s67
    %p79 = scmp.eq.s32.totalorder %s15, 1
    %p80 = por %p78, %p79
    %p82 = scmp.ne.s32.totalorder %s67, %s81
    %p83 = scmp.eq.s32.totalorder %s15, 0
    %p84 = por %p82, %p83
    %s85 = ssub.s32 %s9, %s16
    %p86 = scmp.eq.s32.totalorder %s85, 0
    %s88 = sadd.s32 %s87, 1
    %s89 = scalar_select %p86, %s87, %s88
    %p92 = pneg %p86
    %p93 = scmp.eq.s32.totalorder %s9, 1
    %p94 = por %p92, %p93
    %p95 = scmp.ne.s32.totalorder %s87, %s90
    %p96 = scmp.eq.s32.totalorder %s9, 0
    %p97 = por %p95, %p96
    %p98 = scmp.ne.s32.totalorder %s87, %s90
    %p99 = scmp.eq.s32.totalorder %s14, 1
    %p100 = por %p98, %p99
    %p101 = scmp.ne.s32.totalorder %s90, %s91
    %p102 = scmp.eq.s32.totalorder %s14, 0
    %p103 = por %p101, %p102
    %p104 = scmp.ne.s32.totalorder %s90, %s91
    %p105 = scmp.eq.s32.totalorder %s15, 1
    %p106 = por %p104, %p105
    %p108 = scmp.ne.s32.totalorder %s91, %s107
    %p109 = scmp.eq.s32.totalorder %s15, 0
    %p110 = por %p108, %p109
    %p111 = scmp.le.s32.totalorder 1, %s9
    %p112 = scmp.lt.s32.totalorder %s9, 3
    %p113 = pnand %p111, %p112
    %p114 = pneg %p113
    // Predicated region
    $region9: #{gradual_style_block_forward.4} parent=5 // pred_check
      _
    $region10: #{gradual_style_block_forward.4} parent=5 // pred_check_branch
      %116 = sbr.rel (%p113) target = $region12
    $region11: #{gradual_style_block_forward.4} parent=5 // pred_region
      %s117 = ssub.s32 %s9, 1
      // Predicated region
      $region13: #{gradual_style_block_forward.4} parent=11 // pred_check
        %p118 = pneg %p56
      $region14: #{gradual_style_block_forward.4} parent=11 // pred_check_branch
        %120 = sbr.rel (%p118) target = $region16
      $region15: #{gradual_style_block_forward.4} parent=11 // pred_region
        _
      $region16: #{gradual_style_block_forward.4} parent=11 // pred_fallthru
        _
      // Predicated region
      $region17: #{gradual_style_block_forward.4} parent=11 // pred_check
        %p121 = pneg %p77
      $region18: #{gradual_style_block_forward.4} parent=11 // pred_check_branch
        %123 = sbr.rel (%p121) target = $region20
      $region19: #{gradual_style_block_forward.4} parent=11 // pred_region
        _
      $region20: #{gradual_style_block_forward.4} parent=11 // pred_fallthru
        _
    $region12: #{gradual_style_block_forward.4} parent=5 // pred_fallthru
      _
    %p124 = scmp.lt.s32.totalorder %s9, 2
    // Predicated region
    $region21: #{gradual_style_block_forward.4} parent=5 // pred_check
      %p125 = pneg %p124
    $region22: #{gradual_style_block_forward.4} parent=5 // pred_check_branch
      %127 = sbr.rel (%p125) target = $region24
    $region23: #{gradual_style_block_forward.4} parent=5 // pred_region
      // Predicated region
      $region25: #{gradual_style_block_forward.4} parent=23 // pred_check
        %p128 = pneg %p29
      $region26: #{gradual_style_block_forward.4} parent=23 // pred_check_branch
        %130 = sbr.rel (%p128) target = $region28
      $region27: #{gradual_style_block_forward.4} parent=23 // pred_region
        %s131 = smul.u32 4, %s9
        %p132 = scmp.lt.s32.totalorder %s131, 7
        %s133 = scalar_select %p132, %s131, 7
        %s134 = smul.addr %s133, 5
        %s135 = smul.addr %s134, 4
        %s136 = scalar_lea.vmem %s0, %s135
        %s137 = smul.u32 4, %s9
      $region28: #{gradual_style_block_forward.4} parent=23 // pred_fallthru
        _
    $region24: #{gradual_style_block_forward.4} parent=5 // pred_fallthru
      _
    %p138 = scmp.le.s32.totalorder 1, %s9
    %p139 = scmp.lt.s32.totalorder %s9, 3
    %p140 = pnand %p138, %p139
    %p141 = pneg %p140
    // Predicated region
    $region29: #{gradual_style_block_forward.4} parent=5 // pred_check
      _
    $region30: #{gradual_style_block_forward.4} parent=5 // pred_check_branch
      %143 = sbr.rel (%p140) target = $region32
    $region31: #{gradual_style_block_forward.4} parent=5 // pred_region
      %s144 = ssub.s32 %s9, 1
      %s145 = smul.u32 4, %s14
      %p146 = scmp.lt.s32.totalorder %s145, 7
      %s147 = scalar_select %p146, %s145, 7
      %s148 = smul.addr %s147, 5
      %s149 = smul.addr %s148, 4
      %s150 = scalar_lea.vmem %s0, %s149
      %p151 = pneg %p35
      %p152 = pneg %p32
      %p153 = pneg %p56
      %p154 = pneg %p53
      %p155 = pneg %p77
      %p156 = pneg %p74
      %p157 = pneg %p103
      %p158 = pneg %p100
      %p159 = scmp.lt.s32.totalorder %s14, 1
      %s160 = scalar_select %p159, %s14, 1
      %s161 = smul.addr %s160, 4
      %s162 = smul.addr %s161, 2
      %s163 = scalar_lea.vmem %s3, %s162
      %s164 = smul.u32 4, %s14
      %p165 = scmp.lt.s32.totalorder %s164, 7
      %s166 = scalar_select %p165, %s164, 7
      %s167 = smul.addr %s166, 5
      %s168 = smul.addr %s167, 4
      %s169 = scalar_lea.vmem %s0, %s168
      %s170 = smul.u32 4, %s14
      %p171 = scmp.lt.s32.totalorder %s14, 1
      %s172 = scalar_select %p171, %s14, 1
      %s173 = smul.addr %s172, 4
      %s174 = smul.addr %s173, 2
      %s175 = scalar_lea.vmem %s3, %s174
      %v177 = vld [vmem:[%s169] sm:$0x7]
      %v178 = vld [vmem:[%s169 + $0x4] sm:$0x7]
      %v179 = vld [vmem:[%s169 + $0x8] sm:$0x7]
      %v180 = vld [vmem:[%s169 + $0xc] sm:$0x7]
      %v181 = vld [vmem:[%s169 + $0x10] sm:$0x7]
      %v182 = vld [vmem:[%s1] sm:$0xf]
      %v183 = vld [vmem:[%s1 + $0x4] sm:$0xf]
      %v184 = vld [vmem:[%s1 + $0x8] sm:$0xf]
      %v185 = vld [vmem:[%s1 + $0xc] sm:$0xf]
      %s186 = scalar_lea.vmem %s169, 20
      %v187 = vld [vmem:[%s186] sm:$0x7]
      %v188 = vld [vmem:[%s186 + $0x4] sm:$0x7]
      %v189 = vld [vmem:[%s186 + $0x8] sm:$0x7]
      %v190 = vld [vmem:[%s186 + $0xc] sm:$0x7]
      %v191 = vld [vmem:[%s186 + $0x10] sm:$0x7]
      %s192 = scalar_lea.vmem %s1, 16
      %v193 = vld [vmem:[%s192] sm:$0xf]
      %v194 = vld [vmem:[%s192 + $0x4] sm:$0xf]
      %v195 = vld [vmem:[%s192 + $0x8] sm:$0xf]
      %v196 = vld [vmem:[%s192 + $0xc] sm:$0xf]
      %v201 = vcombine.low %v187, %v188
      %v202 = vcombine.low %v189, %v190
      %v204 = vunpack.c.l.s4 1983009808
      %v205 = vunpack.c.0.s8 %v204
      %v206 = vlaneseq
      %v207 = vshrl.u32 %v206, 7
      %v208 = vsub.s32 %v205, %v207
      %v209 = vrot.slane %v201, %v208
      %v211 = vunpack.c.l.s4 1983009808
      %v212 = vunpack.c.0.s8 %v211
      %v213 = vlaneseq
      %v214 = vshrl.u32 %v213, 7
      %v215 = vsub.s32 %v212, %v214
      %v216 = vrot.slane %v202, %v215
      %v217 = vcombine.low %v209, %v216
      %v222 = vunpack.c.l.b16 %v193
      %v223 = vunpack.c.l.b16 %v194
      %v224 = vunpack.c.l.b16 %v195
      %v225 = vunpack.c.l.b16 %v196
      %v226 = vpack.c.b16 %v223, %v222
      %v227 = vpack.c.b16 %v225, %v224
      %vm230 = vcmask 261120
      %v232 = vsel %vm230, %v217, 0
      %234 = vmatprep.subr.bf16.mxu0 0
      %235 = vmatpush1.bf16.msra.mxu0 0
      %236 = vmatprep.subr.bf16.mxu0 0
      %237 = vmatpush1.bf16.msra.mxu0 0
      %238 = vmatprep.subr.bf16.mxu0 0
      %239 = vmatpush1.bf16.msra.mxu0 0
      %240 = vmatprep.subr.bf16.mxu0 0
      %241 = vmatpush1.bf16.msra.mxu0 0
      %242 = vmatprep.subr.bf16.mxu0 0
      %243 = vmatpush1.bf16.msra.mxu0 0
      %244 = vmatprep.subr.bf16.mxu0 0
      %245 = vmatpush1.bf16.msra.mxu0 0
      %246 = vmatprep.subr.bf16.mxu0 0
      %247 = vmatpush1.bf16.msra.mxu0 %v227
      %248 = vmatprep.subr.bf16.mxu0 0
      %249 = vmatpush1.bf16.msra.mxu0 %v226
      %250 = vmatprep.subr.bf16.mxu0 0
      %251 = vmatpush2.bf16.msra.mxu0 0
      %252 = vmatprep.subr.bf16.mxu0 0
      %253 = vmatpush2.bf16.msra.mxu0 0
      %254 = vmatprep.subr.bf16.mxu0 0
      %255 = vmatpush2.bf16.msra.mxu0 0
      %256 = vmatprep.subr.bf16.mxu0 0
      %257 = vmatpush2.bf16.msra.mxu0 0
      %258 = vmatprep.subr.bf16.mxu0 0
      %259 = vmatpush2.bf16.msra.mxu0 0
      %260 = vmatprep.subr.bf16.mxu0 0
      %261 = vmatpush2.bf16.msra.mxu0 0
      %262 = vmatprep.subr.bf16.mxu0 0
      %263 = vmatpush2.bf16.msra.mxu0 0
      %264 = vmatprep.subr.bf16.mxu0 0
      %265 = vmatpush2.bf16.msra.mxu0 0
      %266 = vmatprep.mubr.bf16.mxu0 0
      %267 = vmatmul.mubr.bf16.gmra.mxu0 %v232
      %v268 = vpop.f32.mrf.mxu0
      %v269 = vadd.f32 0.0, %v268
      %v270 = vpop.f32.mrf.mxu0
      %v271 = vpop.f32.mrf.mxu0
      %v272 = vadd.f32 0.0, %v271
      %v273 = vpop.f32.mrf.mxu0
      %274 = vdwg.mxu0
      %v279 = vcombine.low %v177, %v178
      %v280 = vcombine.low %v179, %v180
      %v282 = vunpack.c.l.s4 1983009808
      %v283 = vunpack.c.0.s8 %v282
      %v284 = vlaneseq
      %v285 = vshrl.u32 %v284, 7
      %v286 = vsub.s32 %v283, %v285
      %v287 = vrot.slane %v279, %v286
      %v289 = vunpack.c.l.s4 1983009808
      %v290 = vunpack.c.0.s8 %v289
      %v291 = vlaneseq
      %v292 = vshrl.u32 %v291, 7
      %v293 = vsub.s32 %v290, %v292
      %v294 = vrot.slane %v280, %v293
      %v295 = vcombine.low %v287, %v294
      %v300 = vunpack.c.l.b16 %v182
      %v301 = vunpack.c.l.b16 %v183
      %v302 = vunpack.c.l.b16 %v184
      %v303 = vunpack.c.l.b16 %v185
      %v304 = vpack.c.b16 %v301, %v300
      %v305 = vpack.c.b16 %v303, %v302
      %v309 = vsel %vm230, %v295, 0
      %311 = vmatprep.subr.bf16.mxu0 0
      %312 = vmatpush1.bf16.msra.mxu0 0
      %313 = vmatprep.subr.bf16.mxu0 0
      %314 = vmatpush1.bf16.msra.mxu0 0
      %315 = vmatprep.subr.bf16.mxu0 0
      %316 = vmatpush1.bf16.msra.mxu0 0
      %317 = vmatprep.subr.bf16.mxu0 0
      %318 = vmatpush1.bf16.msra.mxu0 0
      %319 = vmatprep.subr.bf16.mxu0 0
      %320 = vmatpush1.bf16.msra.mxu0 0
      %321 = vmatprep.subr.bf16.mxu0 0
      %322 = vmatpush1.bf16.msra.mxu0 0
      %323 = vmatprep.subr.bf16.mxu0 0
      %324 = vmatpush1.bf16.msra.mxu0 %v305
      %325 = vmatprep.subr.bf16.mxu0 0
      %326 = vmatpush1.bf16.msra.mxu0 %v304
      %327 = vmatprep.subr.bf16.mxu0 0
      %328 = vmatpush2.bf16.msra.mxu0 0
      %329 = vmatprep.subr.bf16.mxu0 0
      %330 = vmatpush2.bf16.msra.mxu0 0
      %331 = vmatprep.subr.bf16.mxu0 0
      %332 = vmatpush2.bf16.msra.mxu0 0
      %333 = vmatprep.subr.bf16.mxu0 0
      %334 = vmatpush2.bf16.msra.mxu0 0
      %335 = vmatprep.subr.bf16.mxu0 0
      %336 = vmatpush2.bf16.msra.mxu0 0
      %337 = vmatprep.subr.bf16.mxu0 0
      %338 = vmatpush2.bf16.msra.mxu0 0
      %339 = vmatprep.subr.bf16.mxu0 0
      %340 = vmatpush2.bf16.msra.mxu0 0
      %341 = vmatprep.subr.bf16.mxu0 0
      %342 = vmatpush2.bf16.msra.mxu0 0
      %343 = vmatprep.mubr.bf16.mxu0 0
      %344 = vmatmul.mubr.bf16.gmra.mxu0 %v309
      %v345 = vpop.f32.mrf.mxu0
      %v346 = vadd.f32 %v269, %v345
      %v347 = vpop.f32.mrf.mxu0
      %v348 = vpop.f32.mrf.mxu0
      %v349 = vadd.f32 %v272, %v348
      %v350 = vpop.f32.mrf.mxu0
      %351 = vdwg.mxu0
      %v353 = vunpack.c.l.s4 1983009808
      %v354 = vunpack.c.0.s8 %v353
      %v355 = vlaneseq
      %v356 = vshrl.u32 %v355, 7
      %v357 = vsub.s32 %v354, %v356
      %v358 = vrot.slane %v177, %v357
      %v359 = vcombine.high %v358, %v358
      %v361 = vunpack.c.l.s4 1983009808
      %v362 = vunpack.c.0.s8 %v361
      %v363 = vlaneseq
      %v364 = vshrl.u32 %v363, 7
      %v365 = vsub.s32 %v362, %v364
      %v366 = vrot.slane %v178, %v365
      %v367 = vcombine.high %v366, %v366
      %v369 = vunpack.c.l.s4 1983009808
      %v370 = vunpack.c.0.s8 %v369
      %v371 = vlaneseq
      %v372 = vshrl.u32 %v371, 7
      %v373 = vsub.s32 %v370, %v372
      %v374 = vrot.slane %v179, %v373
      %v375 = vcombine.high %v374, %v374
      %v377 = vunpack.c.l.s4 1983009808
      %v378 = vunpack.c.0.s8 %v377
      %v379 = vlaneseq
      %v380 = vshrl.u32 %v379, 7
      %v381 = vsub.s32 %v378, %v380
      %v382 = vrot.slane %v180, %v381
      %v383 = vcombine.high %v382, %v382
      %vm384 = vsmask.f32 1280
      %vm385 = vsmask.f32 3336
      %vm386 = vmor %vm384, %vm385
      %vm387 = vsmask.f32 5392
      %vm388 = vmor %vm386, %vm387
      %vm389 = vsmask.f32 7448
      %vm390 = vmor %vm388, %vm389
      %v392 = vshrl.u32 %v358, 16
      %v394 = vrot.slane %v392, 6
      %v395 = vshll.u32 %v358, 16
      %v397 = vrot.slane %v395, 7
      %v398 = vor.u32 %v394, %v397
      %v399 = vrot.slane %v398, 2
      %v401 = vshll.u32 %v359, 16
      %v403 = vrot.slane %v401, 7
      %v404 = vsel %vm390, %v399, %v403
      %v406 = vshrl.u32 %v366, 16
      %v408 = vrot.slane %v406, 6
      %v409 = vshll.u32 %v366, 16
      %v411 = vrot.slane %v409, 7
      %v412 = vor.u32 %v408, %v411
      %v413 = vrot.slane %v412, 2
      %v415 = vshll.u32 %v367, 16
      %v417 = vrot.slane %v415, 7
      %v418 = vsel %vm390, %v413, %v417
      %v420 = vshrl.u32 %v374, 16
      %v422 = vrot.slane %v420, 6
      %v423 = vshll.u32 %v374, 16
      %v425 = vrot.slane %v423, 7
      %v426 = vor.u32 %v422, %v425
      %v427 = vrot.slane %v426, 2
      %v429 = vshll.u32 %v375, 16
      %v431 = vrot.slane %v429, 7
      %v432 = vsel %vm390, %v427, %v431
      %v434 = vshrl.u32 %v382, 16
      %v436 = vrot.slane %v434, 6
      %v437 = vshll.u32 %v382, 16
      %v439 = vrot.slane %v437, 7
      %v440 = vor.u32 %v436, %v439
      %v441 = vrot.slane %v440, 2
      %v443 = vshll.u32 %v383, 16
      %v445 = vrot.slane %v443, 7
      %v446 = vsel %vm390, %v441, %v445
      %s447 = scalar_lea.vmem %s1, 32
      %v448 = vld [vmem:[%s447] sm:$0xf]
      %v449 = vld [vmem:[%s447 + $0x4] sm:$0xf]
      %v450 = vld [vmem:[%s447 + $0x8] sm:$0xf]
      %v451 = vld [vmem:[%s447 + $0xc] sm:$0xf]
      %v452 = vcombine.low %v404, %v418
      %v453 = vcombine.low %v432, %v446
      %v455 = vunpack.c.l.s4 1983009808
      %v456 = vunpack.c.0.s8 %v455
      %v457 = vlaneseq
      %v458 = vshrl.u32 %v457, 7
      %v459 = vsub.s32 %v456, %v458
      %v460 = vrot.slane %v452, %v459
      %v462 = vunpack.c.l.s4 1983009808
      %v463 = vunpack.c.0.s8 %v462
      %v464 = vlaneseq
      %v465 = vshrl.u32 %v464, 7
      %v466 = vsub.s32 %v463, %v465
      %v467 = vrot.slane %v453, %v466
      %v468 = vcombine.low %v460, %v467
      %v473 = vunpack.c.l.b16 %v448
      %v474 = vunpack.c.l.b16 %v449
      %v475 = vunpack.c.l.b16 %v450
      %v476 = vunpack.c.l.b16 %v451
      %v477 = vpack.c.b16 %v474, %v473
      %v478 = vpack.c.b16 %v476, %v475
      %v482 = vsel %vm230, %v468, 0
      %484 = vmatprep.subr.bf16.mxu0 0
      %485 = vmatpush1.bf16.msra.mxu0 0
      %486 = vmatprep.subr.bf16.mxu0 0
      %487 = vmatpush1.bf16.msra.mxu0 0
      %488 = vmatprep.subr.bf16.mxu0 0
      %489 = vmatpush1.bf16.msra.mxu0 0
      %490 = vmatprep.subr.bf16.mxu0 0
      %491 = vmatpush1.bf16.msra.mxu0 0
      %492 = vmatprep.subr.bf16.mxu0 0
      %493 = vmatpush1.bf16.msra.mxu0 0
      %494 = vmatprep.subr.bf16.mxu0 0
      %495 = vmatpush1.bf16.msra.mxu0 0
      %496 = vmatprep.subr.bf16.mxu0 0
      %497 = vmatpush1.bf16.msra.mxu0 %v478
      %498 = vmatprep.subr.bf16.mxu0 0
      %499 = vmatpush1.bf16.msra.mxu0 %v477
      %500 = vmatprep.subr.bf16.mxu0 0
      %501 = vmatpush2.bf16.msra.mxu0 0
      %502 = vmatprep.subr.bf16.mxu0 0
      %503 = vmatpush2.bf16.msra.mxu0 0
      %504 = vmatprep.subr.bf16.mxu0 0
      %505 = vmatpush2.bf16.msra.mxu0 0
      %506 = vmatprep.subr.bf16.mxu0 0
      %507 = vmatpush2.bf16.msra.mxu0 0
      %508 = vmatprep.subr.bf16.mxu0 0
      %509 = vmatpush2.bf16.msra.mxu0 0
      %510 = vmatprep.subr.bf16.mxu0 0
      %511 = vmatpush2.bf16.msra.mxu0 0
      %512 = vmatprep.subr.bf16.mxu0 0
      %513 = vmatpush2.bf16.msra.mxu0 0
      %514 = vmatprep.subr.bf16.mxu0 0
      %515 = vmatpush2.bf16.msra.mxu0 0
      %516 = vmatprep.mubr.bf16.mxu0 0
      %517 = vmatmul.mubr.bf16.gmra.mxu0 %v482
      %v518 = vpop.f32.mrf.mxu0
      %v519 = vadd.f32 0.0, %v518
      %v520 = vpop.f32.mrf.mxu0
      %v521 = vpop.f32.mrf.mxu0
      %v522 = vadd.f32 0.0, %v521
      %v523 = vpop.f32.mrf.mxu0
      %524 = vdwg.mxu0
      %v525 = vadd.f32 %v346, %v519
      %v526 = vadd.f32 %v349, %v522
      %s527 = scalar_lea.vmem %s169, 40
      %v528 = vld [vmem:[%s527] sm:$0x7]
      %v529 = vld [vmem:[%s527 + $0x4] sm:$0x7]
      %v530 = vld [vmem:[%s527 + $0x8] sm:$0x7]
      %v531 = vld [vmem:[%s527 + $0xc] sm:$0x7]
      %s532 = scalar_lea.vmem %s1, 48
      %v533 = vld [vmem:[%s532] sm:$0xf]
      %v534 = vld [vmem:[%s532 + $0x4] sm:$0xf]
      %v535 = vld [vmem:[%s532 + $0x8] sm:$0xf]
      %v536 = vld [vmem:[%s532 + $0xc] sm:$0xf]
      %v541 = vcombine.low %v528, %v529
      %v542 = vcombine.low %v530, %v531
      %v544 = vunpack.c.l.s4 1983009808
      %v545 = vunpack.c.0.s8 %v544
      %v546 = vlaneseq
      %v547 = vshrl.u32 %v546, 7
      %v548 = vsub.s32 %v545, %v547
      %v549 = vrot.slane %v541, %v548
      %v551 = vunpack.c.l.s4 1983009808
      %v552 = vunpack.c.0.s8 %v551
      %v553 = vlaneseq
      %v554 = vshrl.u32 %v553, 7
      %v555 = vsub.s32 %v552, %v554
      %v556 = vrot.slane %v542, %v555
      %v557 = vcombine.low %v549, %v556
      %v562 = vunpack.c.l.b16 %v533
      %v563 = vunpack.c.l.b16 %v534
      %v564 = vunpack.c.l.b16 %v535
      %v565 = vunpack.c.l.b16 %v536
      %v566 = vpack.c.b16 %v563, %v562
      %v567 = vpack.c.b16 %v565, %v564
      %v571 = vsel %vm230, %v557, 0
      %573 = vmatprep.subr.bf16.mxu0 0
      %574 = vmatpush1.bf16.msra.mxu0 0
      %575 = vmatprep.subr.bf16.mxu0 0
      %576 = vmatpush1.bf16.msra.mxu0 0
      %577 = vmatprep.subr.bf16.mxu0 0
      %578 = vmatpush1.bf16.msra.mxu0 0
      %579 = vmatprep.subr.bf16.mxu0 0
      %580 = vmatpush1.bf16.msra.mxu0 0
      %581 = vmatprep.subr.bf16.mxu0 0
      %582 = vmatpush1.bf16.msra.mxu0 0
      %583 = vmatprep.subr.bf16.mxu0 0
      %584 = vmatpush1.bf16.msra.mxu0 0
      %585 = vmatprep.subr.bf16.mxu0 0
      %586 = vmatpush1.bf16.msra.mxu0 %v567
      %587 = vmatprep.subr.bf16.mxu0 0
      %588 = vmatpush1.bf16.msra.mxu0 %v566
      %589 = vmatprep.subr.bf16.mxu0 0
      %590 = vmatpush2.bf16.msra.mxu0 0
      %591 = vmatprep.subr.bf16.mxu0 0
      %592 = vmatpush2.bf16.msra.mxu0 0
      %593 = vmatprep.subr.bf16.mxu0 0
      %594 = vmatpush2.bf16.msra.mxu0 0
      %595 = vmatprep.subr.bf16.mxu0 0
      %596 = vmatpush2.bf16.msra.mxu0 0
      %597 = vmatprep.subr.bf16.mxu0 0
      %598 = vmatpush2.bf16.msra.mxu0 0
      %599 = vmatprep.subr.bf16.mxu0 0
      %600 = vmatpush2.bf16.msra.mxu0 0
      %601 = vmatprep.subr.bf16.mxu0 0
      %602 = vmatpush2.bf16.msra.mxu0 0
      %603 = vmatprep.subr.bf16.mxu0 0
      %604 = vmatpush2.bf16.msra.mxu0 0
      %605 = vmatprep.mubr.bf16.mxu0 0
      %606 = vmatmul.mubr.bf16.gmra.mxu0 %v571
      %v607 = vpop.f32.mrf.mxu0
      %v608 = vadd.f32 0.0, %v607
      %v609 = vpop.f32.mrf.mxu0
      %v610 = vpop.f32.mrf.mxu0
      %v611 = vadd.f32 0.0, %v610
      %v612 = vpop.f32.mrf.mxu0
      %613 = vdwg.mxu0
      %v614 = vadd.f32 %v525, %v608
      %v615 = vadd.f32 %v526, %v611
      %s616 = scalar_lea.vmem %s169, 60
      %v617 = vld [vmem:[%s616] sm:$0x7]
      %v618 = vld [vmem:[%s616 + $0x4] sm:$0x7]
      %v619 = vld [vmem:[%s616 + $0x8] sm:$0x7]
      %v620 = vld [vmem:[%s616 + $0xc] sm:$0x7]
      %s621 = scalar_lea.vmem %s1, 64
      %v622 = vld [vmem:[%s621] sm:$0xf]
      %v623 = vld [vmem:[%s621 + $0x4] sm:$0xf]
      %v624 = vld [vmem:[%s621 + $0x8] sm:$0xf]
      %v625 = vld [vmem:[%s621 + $0xc] sm:$0xf]
      %v630 = vcombine.low %v617, %v618
      %v631 = vcombine.low %v619, %v620
      %v633 = vunpack.c.l.s4 1983009808
      %v634 = vunpack.c.0.s8 %v633
      %v635 = vlaneseq
      %v636 = vshrl.u32 %v635, 7
      %v637 = vsub.s32 %v634, %v636
      %v638 = vrot.slane %v630, %v637
      %v640 = vunpack.c.l.s4 1983009808
      %v641 = vunpack.c.0.s8 %v640
      %v642 = vlaneseq
      %v643 = vshrl.u32 %v642, 7
      %v644 = vsub.s32 %v641, %v643
      %v645 = vrot.slane %v631, %v644
      %v646 = vcombine.low %v638, %v645
      %v651 = vunpack.c.l.b16 %v622
      %v652 = vunpack.c.l.b16 %v623
      %v653 = vunpack.c.l.b16 %v624
      %v654 = vunpack.c.l.b16 %v625
      %v655 = vpack.c.b16 %v652, %v651
      %v656 = vpack.c.b16 %v654, %v653
      %v660 = vsel %vm230, %v646, 0
      %662 = vmatprep.subr.bf16.mxu0 0
      %663 = vmatpush1.bf16.msra.mxu0 0
      %664 = vmatprep.subr.bf16.mxu0 0
      %665 = vmatpush1.bf16.msra.mxu0 0
      %666 = vmatprep.subr.bf16.mxu0 0
      %667 = vmatpush1.bf16.msra.mxu0 0
      %668 = vmatprep.subr.bf16.mxu0 0
      %669 = vmatpush1.bf16.msra.mxu0 0
      %670 = vmatprep.subr.bf16.mxu0 0
      %671 = vmatpush1.bf16.msra.mxu0 0
      %672 = vmatprep.subr.bf16.mxu0 0
      %673 = vmatpush1.bf16.msra.mxu0 0
      %674 = vmatprep.subr.bf16.mxu0 0
      %675 = vmatpush1.bf16.msra.mxu0 %v656
      %676 = vmatprep.subr.bf16.mxu0 0
      %677 = vmatpush1.bf16.msra.mxu0 %v655
      %678 = vmatprep.subr.bf16.mxu0 0
      %679 = vmatpush2.bf16.msra.mxu0 0
      %680 = vmatprep.subr.bf16.mxu0 0
      %681 = vmatpush2.bf16.msra.mxu0 0
      %682 = vmatprep.subr.bf16.mxu0 0
      %683 = vmatpush2.bf16.msra.mxu0 0
      %684 = vmatprep.subr.bf16.mxu0 0
      %685 = vmatpush2.bf16.msra.mxu0 0
      %686 = vmatprep.subr.bf16.mxu0 0
      %687 = vmatpush2.bf16.msra.mxu0 0
      %688 = vmatprep.subr.bf16.mxu0 0
      %689 = vmatpush2.bf16.msra.mxu0 0
      %690 = vmatprep.subr.bf16.mxu0 0
      %691 = vmatpush2.bf16.msra.mxu0 0
      %692 = vmatprep.subr.bf16.mxu0 0
      %693 = vmatpush2.bf16.msra.mxu0 0
      %694 = vmatprep.mubr.bf16.mxu0 0
      %695 = vmatmul.mubr.bf16.gmra.mxu0 %v660
      %v696 = vpop.f32.mrf.mxu0
      %v697 = vadd.f32 0.0, %v696
      %v698 = vpop.f32.mrf.mxu0
      %v699 = vpop.f32.mrf.mxu0
      %v700 = vadd.f32 0.0, %v699
      %v701 = vpop.f32.mrf.mxu0
      %702 = vdwg.mxu0
      %v703 = vadd.f32 %v614, %v697
      %v704 = vadd.f32 %v615, %v700
      %v706 = vunpack.c.l.s4 1983009808
      %v707 = vunpack.c.0.s8 %v706
      %v708 = vlaneseq
      %v709 = vshrl.u32 %v708, 7
      %v710 = vsub.s32 %v707, %v709
      %v711 = vrot.slane %v528, %v710
      %v712 = vcombine.high %v711, %v711
      %v714 = vunpack.c.l.s4 1983009808
      %v715 = vunpack.c.0.s8 %v714
      %v716 = vlaneseq
      %v717 = vshrl.u32 %v716, 7
      %v718 = vsub.s32 %v715, %v717
      %v719 = vrot.slane %v529, %v718
      %v720 = vcombine.high %v719, %v719
      %v722 = vunpack.c.l.s4 1983009808
      %v723 = vunpack.c.0.s8 %v722
      %v724 = vlaneseq
      %v725 = vshrl.u32 %v724, 7
      %v726 = vsub.s32 %v723, %v725
      %v727 = vrot.slane %v530, %v726
      %v728 = vcombine.high %v727, %v727
      %v730 = vunpack.c.l.s4 1983009808
      %v731 = vunpack.c.0.s8 %v730
      %v732 = vlaneseq
      %v733 = vshrl.u32 %v732, 7
      %v734 = vsub.s32 %v731, %v733
      %v735 = vrot.slane %v531, %v734
      %v736 = vcombine.high %v735, %v735
      %v738 = vshrl.u32 %v711, 16
      %v740 = vrot.slane %v738, 6
      %v741 = vshll.u32 %v711, 16
      %v743 = vrot.slane %v741, 7
      %v744 = vor.u32 %v740, %v743
      %v745 = vrot.slane %v744, 2
      %v747 = vshll.u32 %v712, 16
      %v749 = vrot.slane %v747, 7
      %v750 = vsel %vm390, %v745, %v749
      %v752 = vshrl.u32 %v719, 16
      %v754 = vrot.slane %v752, 6
      %v755 = vshll.u32 %v719, 16
      %v757 = vrot.slane %v755, 7
      %v758 = vor.u32 %v754, %v757
      %v759 = vrot.slane %v758, 2
      %v761 = vshll.u32 %v720, 16
      %v763 = vrot.slane %v761, 7
      %v764 = vsel %vm390, %v759, %v763
      %v766 = vshrl.u32 %v727, 16
      %v768 = vrot.slane %v766, 6
      %v769 = vshll.u32 %v727, 16
      %v771 = vrot.slane %v769, 7
      %v772 = vor.u32 %v768, %v771
      %v773 = vrot.slane %v772, 2
      %v775 = vshll.u32 %v728, 16
      %v777 = vrot.slane %v775, 7
      %v778 = vsel %vm390, %v773, %v777
      %v780 = vshrl.u32 %v735, 16
      %v782 = vrot.slane %v780, 6
      %v783 = vshll.u32 %v735, 16
      %v785 = vrot.slane %v783, 7
      %v786 = vor.u32 %v782, %v785
      %v787 = vrot.slane %v786, 2
      %v789 = vshll.u32 %v736, 16
      %v791 = vrot.slane %v789, 7
      %v792 = vsel %vm390, %v787, %v791
      %s793 = scalar_lea.vmem %s1, 80
      %v794 = vld [vmem:[%s793] sm:$0xf]
      %v795 = vld [vmem:[%s793 + $0x4] sm:$0xf]
      %v796 = vld [vmem:[%s793 + $0x8] sm:$0xf]
      %v797 = vld [vmem:[%s793 + $0xc] sm:$0xf]
      %v798 = vcombine.low %v750, %v764
      %v799 = vcombine.low %v778, %v792
      %v801 = vunpack.c.l.s4 1983009808
      %v802 = vunpack.c.0.s8 %v801
      %v803 = vlaneseq
      %v804 = vshrl.u32 %v803, 7
      %v805 = vsub.s32 %v802, %v804
      %v806 = vrot.slane %v798, %v805
      %v808 = vunpack.c.l.s4 1983009808
      %v809 = vunpack.c.0.s8 %v808
      %v810 = vlaneseq
      %v811 = vshrl.u32 %v810, 7
      %v812 = vsub.s32 %v809, %v811
      %v813 = vrot.slane %v799, %v812
      %v814 = vcombine.low %v806, %v813
      %v819 = vunpack.c.l.b16 %v794
      %v820 = vunpack.c.l.b16 %v795
      %v821 = vunpack.c.l.b16 %v796
      %v822 = vunpack.c.l.b16 %v797
      %v823 = vpack.c.b16 %v820, %v819
      %v824 = vpack.c.b16 %v822, %v821
      %v828 = vsel %vm230, %v814, 0
      %830 = vmatprep.subr.bf16.mxu0 0
      %831 = vmatpush1.bf16.msra.mxu0 0
      %832 = vmatprep.subr.bf16.mxu0 0
      %833 = vmatpush1.bf16.msra.mxu0 0
      %834 = vmatprep.subr.bf16.mxu0 0
      %835 = vmatpush1.bf16.msra.mxu0 0
      %836 = vmatprep.subr.bf16.mxu0 0
      %837 = vmatpush1.bf16.msra.mxu0 0
      %838 = vmatprep.subr.bf16.mxu0 0
      %839 = vmatpush1.bf16.msra.mxu0 0
      %840 = vmatprep.subr.bf16.mxu0 0
      %841 = vmatpush1.bf16.msra.mxu0 0
      %842 = vmatprep.subr.bf16.mxu0 0
      %843 = vmatpush1.bf16.msra.mxu0 %v824
      %844 = vmatprep.subr.bf16.mxu0 0
      %845 = vmatpush1.bf16.msra.mxu0 %v823
      %846 = vmatprep.subr.bf16.mxu0 0
      %847 = vmatpush2.bf16.msra.mxu0 0
      %848 = vmatprep.subr.bf16.mxu0 0
      %849 = vmatpush2.bf16.msra.mxu0 0
      %850 = vmatprep.subr.bf16.mxu0 0
      %851 = vmatpush2.bf16.msra.mxu0 0
      %852 = vmatprep.subr.bf16.mxu0 0
      %853 = vmatpush2.bf16.msra.mxu0 0
      %854 = vmatprep.subr.bf16.mxu0 0
      %855 = vmatpush2.bf16.msra.mxu0 0
      %856 = vmatprep.subr.bf16.mxu0 0
      %857 = vmatpush2.bf16.msra.mxu0 0
      %858 = vmatprep.subr.bf16.mxu0 0
      %859 = vmatpush2.bf16.msra.mxu0 0
      %860 = vmatprep.subr.bf16.mxu0 0
      %861 = vmatpush2.bf16.msra.mxu0 0
      %862 = vmatprep.mubr.bf16.mxu0 0
      %863 = vmatmul.mubr.bf16.gmra.mxu0 %v828
      %v864 = vpop.f32.mrf.mxu0
      %v865 = vadd.f32 0.0, %v864
      %v866 = vpop.f32.mrf.mxu0
      %v867 = vpop.f32.mrf.mxu0
      %v868 = vadd.f32 0.0, %v867
      %v869 = vpop.f32.mrf.mxu0
      %870 = vdwg.mxu0
      %v871 = vadd.f32 %v703, %v865
      %v872 = vadd.f32 %v704, %v868
      %s873 = scalar_lea.vmem %s1, 96
      %v874 = vld [vmem:[%s873] sm:$0xf]
      %v875 = vld [vmem:[%s873 + $0x4] sm:$0xf]
      %v876 = vld [vmem:[%s873 + $0x8] sm:$0xf]
      %v877 = vld [vmem:[%s873 + $0xc] sm:$0xf]
      %v879 = vcombine.low %v178, %v179
      %v880 = vcombine.low %v180, %v181
      %v882 = vunpack.c.l.s4 1983009808
      %v883 = vunpack.c.0.s8 %v882
      %v884 = vlaneseq
      %v885 = vshrl.u32 %v884, 7
      %v886 = vsub.s32 %v883, %v885
      %v887 = vrot.slane %v879, %v886
      %v889 = vunpack.c.l.s4 1983009808
      %v890 = vunpack.c.0.s8 %v889
      %v891 = vlaneseq
      %v892 = vshrl.u32 %v891, 7
      %v893 = vsub.s32 %v890, %v892
      %v894 = vrot.slane %v880, %v893
      %v895 = vcombine.low %v887, %v894
      %v900 = vunpack.c.l.b16 %v874
      %v901 = vunpack.c.l.b16 %v875
      %v902 = vunpack.c.l.b16 %v876
      %v903 = vunpack.c.l.b16 %v877
      %v904 = vpack.c.b16 %v901, %v900
      %v905 = vpack.c.b16 %v903, %v902
      %v909 = vsel %vm230, %v895, 0
      %911 = vmatprep.subr.bf16.mxu0 0
      %912 = vmatpush1.bf16.msra.mxu0 0
      %913 = vmatprep.subr.bf16.mxu0 0
      %914 = vmatpush1.bf16.msra.mxu0 0
      %915 = vmatprep.subr.bf16.mxu0 0
      %916 = vmatpush1.bf16.msra.mxu0 0
      %917 = vmatprep.subr.bf16.mxu0 0
      %918 = vmatpush1.bf16.msra.mxu0 0
      %919 = vmatprep.subr.bf16.mxu0 0
      %920 = vmatpush1.bf16.msra.mxu0 0
      %921 = vmatprep.subr.bf16.mxu0 0
      %922 = vmatpush1.bf16.msra.mxu0 0
      %923 = vmatprep.subr.bf16.mxu0 0
      %924 = vmatpush1.bf16.msra.mxu0 %v905
      %925 = vmatprep.subr.bf16.mxu0 0
      %926 = vmatpush1.bf16.msra.mxu0 %v904
      %927 = vmatprep.subr.bf16.mxu0 0
      %928 = vmatpush2.bf16.msra.mxu0 0
      %929 = vmatprep.subr.bf16.mxu0 0
      %930 = vmatpush2.bf16.msra.mxu0 0
      %931 = vmatprep.subr.bf16.mxu0 0
      %932 = vmatpush2.bf16.msra.mxu0 0
      %933 = vmatprep.subr.bf16.mxu0 0
      %934 = vmatpush2.bf16.msra.mxu0 0
      %935 = vmatprep.subr.bf16.mxu0 0
      %936 = vmatpush2.bf16.msra.mxu0 0
      %937 = vmatprep.subr.bf16.mxu0 0
      %938 = vmatpush2.bf16.msra.mxu0 0
      %939 = vmatprep.subr.bf16.mxu0 0
      %940 = vmatpush2.bf16.msra.mxu0 0
      %941 = vmatprep.subr.bf16.mxu0 0
      %942 = vmatpush2.bf16.msra.mxu0 0
      %943 = vmatprep.mubr.bf16.mxu0 0
      %944 = vmatmul.mubr.bf16.gmra.mxu0 %v909
      %v945 = vpop.f32.mrf.mxu0
      %v946 = vadd.f32 0.0, %v945
      %v947 = vpop.f32.mrf.mxu0
      %v948 = vpop.f32.mrf.mxu0
      %v949 = vadd.f32 0.0, %v948
      %v950 = vpop.f32.mrf.mxu0
      %951 = vdwg.mxu0
      %v952 = vadd.f32 %v871, %v946
      %v953 = vadd.f32 %v872, %v949
      %s954 = scalar_lea.vmem %s1, 112
      %v955 = vld [vmem:[%s954] sm:$0xf]
      %v956 = vld [vmem:[%s954 + $0x4] sm:$0xf]
      %v957 = vld [vmem:[%s954 + $0x8] sm:$0xf]
      %v958 = vld [vmem:[%s954 + $0xc] sm:$0xf]
      %v960 = vcombine.low %v188, %v189
      %v961 = vcombine.low %v190, %v191
      %v963 = vunpack.c.l.s4 1983009808
      %v964 = vunpack.c.0.s8 %v963
      %v965 = vlaneseq
      %v966 = vshrl.u32 %v965, 7
      %v967 = vsub.s32 %v964, %v966
      %v968 = vrot.slane %v960, %v967
      %v970 = vunpack.c.l.s4 1983009808
      %v971 = vunpack.c.0.s8 %v970
      %v972 = vlaneseq
      %v973 = vshrl.u32 %v972, 7
      %v974 = vsub.s32 %v971, %v973
      %v975 = vrot.slane %v961, %v974
      %v976 = vcombine.low %v968, %v975
      %v981 = vunpack.c.l.b16 %v955
      %v982 = vunpack.c.l.b16 %v956
      %v983 = vunpack.c.l.b16 %v957
      %v984 = vunpack.c.l.b16 %v958
      %v985 = vpack.c.b16 %v982, %v981
      %v986 = vpack.c.b16 %v984, %v983
      %v990 = vsel %vm230, %v976, 0
      %992 = vmatprep.subr.bf16.mxu0 0
      %993 = vmatpush1.bf16.msra.mxu0 0
      %994 = vmatprep.subr.bf16.mxu0 0
      %995 = vmatpush1.bf16.msra.mxu0 0
      %996 = vmatprep.subr.bf16.mxu0 0
      %997 = vmatpush1.bf16.msra.mxu0 0
      %998 = vmatprep.subr.bf16.mxu0 0
      %999 = vmatpush1.bf16.msra.mxu0 0
      %1000 = vmatprep.subr.bf16.mxu0 0
      %1001 = vmatpush1.bf16.msra.mxu0 0
      %1002 = vmatprep.subr.bf16.mxu0 0
      %1003 = vmatpush1.bf16.msra.mxu0 0
      %1004 = vmatprep.subr.bf16.mxu0 0
      %1005 = vmatpush1.bf16.msra.mxu0 %v986
      %1006 = vmatprep.subr.bf16.mxu0 0
      %1007 = vmatpush1.bf16.msra.mxu0 %v985
      %1008 = vmatprep.subr.bf16.mxu0 0
      %1009 = vmatpush2.bf16.msra.mxu0 0
      %1010 = vmatprep.subr.bf16.mxu0 0
      %1011 = vmatpush2.bf16.msra.mxu0 0
      %1012 = vmatprep.subr.bf16.mxu0 0
      %1013 = vmatpush2.bf16.msra.mxu0 0
      %1014 = vmatprep.subr.bf16.mxu0 0
      %1015 = vmatpush2.bf16.msra.mxu0 0
      %1016 = vmatprep.subr.bf16.mxu0 0
      %1017 = vmatpush2.bf16.msra.mxu0 0
      %1018 = vmatprep.subr.bf16.mxu0 0
      %1019 = vmatpush2.bf16.msra.mxu0 0
      %1020 = vmatprep.subr.bf16.mxu0 0
      %1021 = vmatpush2.bf16.msra.mxu0 0
      %1022 = vmatprep.subr.bf16.mxu0 0
      %1023 = vmatpush2.bf16.msra.mxu0 0
      %1024 = vmatprep.mubr.bf16.mxu0 0
      %1025 = vmatmul.mubr.bf16.gmra.mxu0 %v990
      %v1026 = vpop.f32.mrf.mxu0
      %v1027 = vadd.f32 0.0, %v1026
      %v1028 = vpop.f32.mrf.mxu0
      %v1029 = vpop.f32.mrf.mxu0
      %v1030 = vadd.f32 0.0, %v1029
      %v1031 = vpop.f32.mrf.mxu0
      %1032 = vdwg.mxu0
      %v1033 = vadd.f32 %v952, %v1027
      %v1034 = vadd.f32 %v953, %v1030
      %v1036 = vunpack.c.l.s4 1983009808
      %v1037 = vunpack.c.0.s8 %v1036
      %v1038 = vlaneseq
      %v1039 = vshrl.u32 %v1038, 7
      %v1040 = vsub.s32 %v1037, %v1039
      %v1041 = vrot.slane %v181, %v1040
      %v1042 = vcombine.high %v1041, %v1041
      %v1044 = vshrl.u32 %v1041, 16
      %v1046 = vrot.slane %v1044, 6
      %v1047 = vshll.u32 %v1041, 16
      %v1049 = vrot.slane %v1047, 7
      %v1050 = vor.u32 %v1046, %v1049
      %v1051 = vrot.slane %v1050, 2
      %v1053 = vshll.u32 %v1042, 16
      %v1055 = vrot.slane %v1053, 7
      %v1056 = vsel %vm390, %v1051, %v1055
      %s1057 = scalar_lea.vmem %s1, 128
      %v1058 = vld [vmem:[%s1057] sm:$0xf]
      %v1059 = vld [vmem:[%s1057 + $0x4] sm:$0xf]
      %v1060 = vld [vmem:[%s1057 + $0x8] sm:$0xf]
      %v1061 = vld [vmem:[%s1057 + $0xc] sm:$0xf]
      %v1062 = vcombine.low %v418, %v432
      %v1063 = vcombine.low %v446, %v1056
      %v1065 = vunpack.c.l.s4 1983009808
      %v1066 = vunpack.c.0.s8 %v1065
      %v1067 = vlaneseq
      %v1068 = vshrl.u32 %v1067, 7
      %v1069 = vsub.s32 %v1066, %v1068
      %v1070 = vrot.slane %v1062, %v1069
      %v1072 = vunpack.c.l.s4 1983009808
      %v1073 = vunpack.c.0.s8 %v1072
      %v1074 = vlaneseq
      %v1075 = vshrl.u32 %v1074, 7
      %v1076 = vsub.s32 %v1073, %v1075
      %v1077 = vrot.slane %v1063, %v1076
      %v1078 = vcombine.low %v1070, %v1077
      %v1083 = vunpack.c.l.b16 %v1058
      %v1084 = vunpack.c.l.b16 %v1059
      %v1085 = vunpack.c.l.b16 %v1060
      %v1086 = vunpack.c.l.b16 %v1061
      %v1087 = vpack.c.b16 %v1084, %v1083
      %v1088 = vpack.c.b16 %v1086, %v1085
      %v1092 = vsel %vm230, %v1078, 0
      %1094 = vmatprep.subr.bf16.mxu0 0
      %1095 = vmatpush1.bf16.msra.mxu0 0
      %1096 = vmatprep.subr.bf16.mxu0 0
      %1097 = vmatpush1.bf16.msra.mxu0 0
      %1098 = vmatprep.subr.bf16.mxu0 0
      %1099 = vmatpush1.bf16.msra.mxu0 0
      %1100 = vmatprep.subr.bf16.mxu0 0
      %1101 = vmatpush1.bf16.msra.mxu0 0
      %1102 = vmatprep.subr.bf16.mxu0 0
      %1103 = vmatpush1.bf16.msra.mxu0 0
      %1104 = vmatprep.subr.bf16.mxu0 0
      %1105 = vmatpush1.bf16.msra.mxu0 0
      %1106 = vmatprep.subr.bf16.mxu0 0
      %1107 = vmatpush1.bf16.msra.mxu0 %v1088
      %1108 = vmatprep.subr.bf16.mxu0 0
      %1109 = vmatpush1.bf16.msra.mxu0 %v1087
      %1110 = vmatprep.subr.bf16.mxu0 0
      %1111 = vmatpush2.bf16.msra.mxu0 0
      %1112 = vmatprep.subr.bf16.mxu0 0
      %1113 = vmatpush2.bf16.msra.mxu0 0
      %1114 = vmatprep.subr.bf16.mxu0 0
      %1115 = vmatpush2.bf16.msra.mxu0 0
      %1116 = vmatprep.subr.bf16.mxu0 0
      %1117 = vmatpush2.bf16.msra.mxu0 0
      %1118 = vmatprep.subr.bf16.mxu0 0
      %1119 = vmatpush2.bf16.msra.mxu0 0
      %1120 = vmatprep.subr.bf16.mxu0 0
      %1121 = vmatpush2.bf16.msra.mxu0 0
      %1122 = vmatprep.subr.bf16.mxu0 0
      %1123 = vmatpush2.bf16.msra.mxu0 0
      %1124 = vmatprep.subr.bf16.mxu0 0
      %1125 = vmatpush2.bf16.msra.mxu0 0
      %1126 = vmatprep.mubr.bf16.mxu0 0
      %1127 = vmatmul.mubr.bf16.gmra.mxu0 %v1092
      %v1128 = vpop.f32.mrf.mxu0
      %v1129 = vadd.f32 0.0, %v1128
      %v1130 = vpop.f32.mrf.mxu0
      %v1131 = vpop.f32.mrf.mxu0
      %v1132 = vadd.f32 0.0, %v1131
      %v1133 = vpop.f32.mrf.mxu0
      %1134 = vdwg.mxu0
      %v1135 = vadd.f32 %v1033, %v1129
      %v1136 = vadd.f32 %v1034, %v1132
      %v1137 = vld [vmem:[%s2] sm:$0x1]
      %v1139 = vlaneseq
      %v1140 = vshrl.u32 %v1139, 7
      %v1141 = vsub.s32 0, %v1140
      %v1142 = vrot.slane %v1137, %v1141
      %v1144 = vadd.f32 %v1135, %v1142
      %v1145 = vadd.f32 %v1136, %v1142
      %vm1146 = vcmp.ge.f32.partialorder %v1144, 0.0
      %vm1147 = vcmp.ge.f32.partialorder %v1145, 0.0
      %v1148 = vmul.f32 %v1144, 0.01
      %v1149 = vmul.f32 %v1145, 0.01
      %v1150 = vsel %vm1146, %v1144, %v1148
      %v1151 = vsel %vm1147, %v1145, %v1149
      %v1154 = vcombine.high %v1150, %v1150
      %v1155 = vcombine.high %v1151, %v1151
      %v1158 = vpack.c.bf16 %v1150, %v1150
      %v1159 = vpack.c.bf16 %v1154, %v1154
      %v1160 = vpack.c.bf16 %v1151, %v1151
      %v1161 = vpack.c.bf16 %v1155, %v1155
      %vm1162 = vcmask 254976
      %1163 = vst.msk [vmem:[%s175] sm:$0x3] %vm1162, %v1158
      %1164 = vst.msk [vmem:[%s175 + $0x2] sm:$0x3] %vm1162, %v1159
      %1165 = vst.msk [vmem:[%s175 + $0x4] sm:$0x3] %vm1162, %v1160
      %1166 = vst.msk [vmem:[%s175 + $0x6] sm:$0x3] %vm1162, %v1161
      %p1167 = scmp.lt.s32.totalorder %s14, 1
      %s1168 = scalar_select %p1167, %s14, 1
      %s1169 = smul.addr %s1168, 4
      %s1170 = smul.addr %s1169, 2
      %s1171 = scalar_lea.vmem %s3, %s1170
      // Predicated region
      $region33: #{gradual_style_block_forward.4} parent=31 // pred_check
        %p1172 = pneg %p100
      $region34: #{gradual_style_block_forward.4} parent=31 // pred_check_branch
        %1174 = sbr.rel (%p1172) target = $region36
      $region35: #{gradual_style_block_forward.4} parent=31 // pred_region
        _
      $region36: #{gradual_style_block_forward.4} parent=31 // pred_fallthru
        _
    $region32: #{gradual_style_block_forward.4} parent=5 // pred_fallthru
      _
    %p1175 = scmp.le.s32.totalorder 2, %s9
    // Predicated region
    $region37: #{gradual_style_block_forward.4} parent=5 // pred_check
      %p1176 = pneg %p1175
    $region38: #{gradual_style_block_forward.4} parent=5 // pred_check_branch
      %1178 = sbr.rel (%p1176) target = $region40
    $region39: #{gradual_style_block_forward.4} parent=5 // pred_region
      %s1179 = ssub.s32 %s9, 2
      // Predicated region
      $region41: #{gradual_style_block_forward.4} parent=39 // pred_check
        %p1180 = pneg %p106
      $region42: #{gradual_style_block_forward.4} parent=39 // pred_check_branch
        %1182 = sbr.rel (%p1180) target = $region44
      $region43: #{gradual_style_block_forward.4} parent=39 // pred_region
        %p1183 = scmp.lt.s32.totalorder %s15, 1
        %s1184 = scalar_select %p1183, %s15, 1
        %s1185 = smul.addr %s1184, 4
        %s1186 = smul.addr %s1185, 2
        %s1187 = scalar_lea.vmem %s3, %s1186
      $region44: #{gradual_style_block_forward.4} parent=39 // pred_fallthru
        _
    $region40: #{gradual_style_block_forward.4} parent=5 // pred_fallthru
      _
  $region6: #{gradual_style_block_forward.4} parent=0 // loop_footer
    %s13 = sadd.s32 1, %s9
  $region7: #{gradual_style_block_forward.4} parent=0 // loop_footer_branch
    %8 = sbr.rel target = $region3
  $region8: #{gradual_style_block_forward.4} parent=0 // loop_exit
    _

// kernel: gradual_style_block_forward.5
$region0: #{gradual_style_block_forward.5}
  #allocation0 [shape = 'u32[]', space=smem, size = 0x4, offset = 0x4, fixed_abs, tag = 'smem constant byte address 0x4 - core index']
  #allocation1 [shape = 'u32[144,128]{1,0:T(1,128)}', space=vmem, size = 0x12000, scoped, tag = 'internal scratch']
  %s0 = inlined_call_operand.vmem [shape: bf16[8,3,3,32], index: 0, kind: input, shape index: {}]
  %s1 = inlined_call_operand.vmem [shape: bf16[9,32,32], index: 1, kind: input, shape index: {}]
  %s2 = inlined_call_operand.vmem [shape: f32[1,32], index: 2, kind: input, shape index: {}]
  %s3 = inlined_call_operand.vmem [shape: f32[4,32,32], index: 3, kind: input, shape index: {}]
  %s4 = inlined_call_operand.vmem [shape: f32[1,32], index: 4, kind: input, shape index: {}]
  %s5 = inlined_call_operand.vmem [shape: f32[32,32], index: 5, kind: input, shape index: {}]
  %s6 = inlined_call_operand.vmem [shape: f32[1,32], index: 6, kind: input, shape index: {}]
  %s7 = inlined_call_operand.hbm [shape: f32[2,1,32], index: 7, kind: output, shape index: {}]
  %s8 = sld [smem:[#allocation0]]
  $region61: #{gradual_style_block_forward.5} parent=0
    _
  %s10 = ssub.s32 1, %s8
  %s11 = scalar_select 0, %s10, %s8
  $region1: #{gradual_style_block_forward.5} parent=0
    #allocation2 [shape = 'u8[1024]{0}', space=vmem, size = 0x400, scoped, tag = 'output window, operand 0']
    #allocation3 [shape = 's32[2]{0}', space=sflag, size = 0x8, scoped, tag = 'scoped memory for gradual_style_block_forward.5']
    %12 = vsyncpa [#allocation3], 0
    %s13 = scalar_lea.sflag [#allocation3], 1
    %14 = vsyncpa %s13, 0
    loop: start=0, step=1, limit=4
    $region2: #{gradual_style_block_forward.5} parent=1 // loop_pre_header
      _
    $region3: #{gradual_style_block_forward.5} parent=1 // loop_header
      %s16 = sphi 0, %s20
      %p17 = scmp.ge.s32.totalorder %s16, 4
      %s26 = sphi 0, %s28
      %s29 = sphi 0, %s26
      %s30 = sphi 0, %s29
      %s46 = sphi 0, %s30
      %s50 = sphi 0, %s50
      %s52 = sphi 0, %s50
      %s53 = sphi 0, %s52
      %s67 = sphi 0, %s53
      %s71 = sphi 0, %s71
      %s73 = sphi 0, %s71
      %s74 = sphi 0, %s73
      %s88 = sphi 0, %s74
      %s92 = sphi 0, %s92
      %s94 = sphi 0, %s92
      %s95 = sphi 0, %s94
      %s109 = sphi 0, %s95
      %s113 = sphi 0, %s113
      %s115 = sphi 0, %s113
      %s116 = sphi 0, %s115
      %s130 = sphi 0, %s116
      %s134 = sphi 0, %s134
      %s136 = sphi 0, %s134
      %s137 = sphi 0, %s136
      %s151 = sphi 0, %s137
      %s155 = sphi 0, %s155
      %s157 = sphi 0, %s155
      %s158 = sphi 0, %s157
      %s172 = sphi 0, %s158
      %s178 = sphi 0, %s180
      %s181 = sphi 0, %s178
      %s182 = sphi 0, %s181
      %s198 = sphi 0, %s182
    $region4: #{gradual_style_block_forward.5} parent=1 // loop_header_branch
      %19 = sbr.rel (%p17) target = $region8
    $region5: #{gradual_style_block_forward.5} parent=1 // loop_body
      %s21 = ssub.s32 %s16, 1
      %s22 = ssub.s32 %s16, 2
      %s23 = sadd.s32 %s16, 1
      %s24 = ssub.s32 %s16, %s23
      %p25 = scmp.eq.s32.totalorder %s24, 0
      %s27 = sadd.s32 %s26, 1
      %s28 = scalar_select %p25, %s26, %s27
      %p31 = pneg %p25
      %p32 = scmp.eq.s32.totalorder %s16, 1
      %p33 = por %p31, %p32
      %p34 = scmp.ne.s32.totalorder %s26, %s29
      %p35 = scmp.eq.s32.totalorder %s16, 0
      %p36 = por %p34, %p35
      %p37 = scmp.ne.s32.totalorder %s26, %s29
      %p38 = scmp.eq.s32.totalorder %s21, 1
      %p39 = por %p37, %p38
      %p40 = scmp.ne.s32.totalorder %s29, %s30
      %p41 = scmp.eq.s32.totalorder %s21, 0
      %p42 = por %p40, %p41
      %p43 = scmp.ne.s32.totalorder %s29, %s30
      %p44 = scmp.eq.s32.totalorder %s22, 1
      %p45 = por %p43, %p44
      %p47 = scmp.ne.s32.totalorder %s30, %s46
      %p48 = scmp.eq.s32.totalorder %s22, 0
      %p49 = por %p47, %p48
      %s51 = sadd.s32 %s50, 1
      %p54 = scmp.eq.s32.totalorder %s16, 1
      %p55 = scmp.ne.s32.totalorder %s50, %s52
      %p56 = scmp.eq.s32.totalorder %s16, 0
      %p57 = por %p55, %p56
      %p58 = scmp.ne.s32.totalorder %s50, %s52
      %p59 = scmp.eq.s32.totalorder %s21, 1
      %p60 = por %p58, %p59
      %p61 = scmp.ne.s32.totalorder %s52, %s53
      %p62 = scmp.eq.s32.totalorder %s21, 0
      %p63 = por %p61, %p62
      %p64 = scmp.ne.s32.totalorder %s52, %s53
      %p65 = scmp.eq.s32.totalorder %s22, 1
      %p66 = por %p64, %p65
      %p68 = scmp.ne.s32.totalorder %s53, %s67
      %p69 = scmp.eq.s32.totalorder %s22, 0
      %p70 = por %p68, %p69
      %s72 = sadd.s32 %s71, 1
      %p75 = scmp.eq.s32.totalorder %s16, 1
      %p76 = scmp.ne.s32.totalorder %s71, %s73
      %p77 = scmp.eq.s32.totalorder %s16, 0
      %p78 = por %p76, %p77
      %p79 = scmp.ne.s32.totalorder %s71, %s73
      %p80 = scmp.eq.s32.totalorder %s21, 1
      %p81 = por %p79, %p80
      %p82 = scmp.ne.s32.totalorder %s73, %s74
      %p83 = scmp.eq.s32.totalorder %s21, 0
      %p84 = por %p82, %p83
      %p85 = scmp.ne.s32.totalorder %s73, %s74
      %p86 = scmp.eq.s32.totalorder %s22, 1
      %p87 = por %p85, %p86
      %p89 = scmp.ne.s32.totalorder %s74, %s88
      %p90 = scmp.eq.s32.totalorder %s22, 0
      %p91 = por %p89, %p90
      %s93 = sadd.s32 %s92, 1
      %p96 = scmp.eq.s32.totalorder %s16, 1
      %p97 = scmp.ne.s32.totalorder %s92, %s94
      %p98 = scmp.eq.s32.totalorder %s16, 0
      %p99 = por %p97, %p98
      %p100 = scmp.ne.s32.totalorder %s92, %s94
      %p101 = scmp.eq.s32.totalorder %s21, 1
      %p102 = por %p100, %p101
      %p103 = scmp.ne.s32.totalorder %s94, %s95
      %p104 = scmp.eq.s32.totalorder %s21, 0
      %p105 = por %p103, %p104
      %p106 = scmp.ne.s32.totalorder %s94, %s95
      %p107 = scmp.eq.s32.totalorder %s22, 1
      %p108 = por %p106, %p107
      %p110 = scmp.ne.s32.totalorder %s95, %s109
      %p111 = scmp.eq.s32.totalorder %s22, 0
      %p112 = por %p110, %p111
      %s114 = sadd.s32 %s113, 1
      %p117 = scmp.eq.s32.totalorder %s16, 1
      %p118 = scmp.ne.s32.totalorder %s113, %s115
      %p119 = scmp.eq.s32.totalorder %s16, 0
      %p120 = por %p118, %p119
      %p121 = scmp.ne.s32.totalorder %s113, %s115
      %p122 = scmp.eq.s32.totalorder %s21, 1
      %p123 = por %p121, %p122
      %p124 = scmp.ne.s32.totalorder %s115, %s116
      %p125 = scmp.eq.s32.totalorder %s21, 0
      %p126 = por %p124, %p125
      %p127 = scmp.ne.s32.totalorder %s115, %s116
      %p128 = scmp.eq.s32.totalorder %s22, 1
      %p129 = por %p127, %p128
      %p131 = scmp.ne.s32.totalorder %s116, %s130
      %p132 = scmp.eq.s32.totalorder %s22, 0
      %p133 = por %p131, %p132
      %s135 = sadd.s32 %s134, 1
      %p138 = scmp.eq.s32.totalorder %s16, 1
      %p139 = scmp.ne.s32.totalorder %s134, %s136
      %p140 = scmp.eq.s32.totalorder %s16, 0
      %p141 = por %p139, %p140
      %p142 = scmp.ne.s32.totalorder %s134, %s136
      %p143 = scmp.eq.s32.totalorder %s21, 1
      %p144 = por %p142, %p143
      %p145 = scmp.ne.s32.totalorder %s136, %s137
      %p146 = scmp.eq.s32.totalorder %s21, 0
      %p147 = por %p145, %p146
      %p148 = scmp.ne.s32.totalorder %s136, %s137
      %p149 = scmp.eq.s32.totalorder %s22, 1
      %p150 = por %p148, %p149
      %p152 = scmp.ne.s32.totalorder %s137, %s151
      %p153 = scmp.eq.s32.totalorder %s22, 0
      %p154 = por %p152, %p153
      %s156 = sadd.s32 %s155, 1
      %p159 = scmp.eq.s32.totalorder %s16, 1
      %p160 = scmp.ne.s32.totalorder %s155, %s157
      %p161 = scmp.eq.s32.totalorder %s16, 0
      %p162 = por %p160, %p161
      %p163 = scmp.ne.s32.totalorder %s155, %s157
      %p164 = scmp.eq.s32.totalorder %s21, 1
      %p165 = por %p163, %p164
      %p166 = scmp.ne.s32.totalorder %s157, %s158
      %p167 = scmp.eq.s32.totalorder %s21, 0
      %p168 = por %p166, %p167
      %p169 = scmp.ne.s32.totalorder %s157, %s158
      %p170 = scmp.eq.s32.totalorder %s22, 1
      %p171 = por %p169, %p170
      %p173 = scmp.ne.s32.totalorder %s158, %s172
      %p174 = scmp.eq.s32.totalorder %s22, 0
      %p175 = por %p173, %p174
      %s176 = ssub.s32 %s16, %s23
      %p177 = scmp.eq.s32.totalorder %s176, 0
      %s179 = sadd.s32 %s178, 1
      %s180 = scalar_select %p177, %s178, %s179
      %p183 = pneg %p177
      %p184 = scmp.eq.s32.totalorder %s16, 1
      %p185 = por %p183, %p184
      %p186 = scmp.ne.s32.totalorder %s178, %s181
      %p187 = scmp.eq.s32.totalorder %s16, 0
      %p188 = por %p186, %p187
      %p189 = scmp.ne.s32.totalorder %s178, %s181
      %p190 = scmp.eq.s32.totalorder %s21, 1
      %p191 = por %p189, %p190
      %p192 = scmp.ne.s32.totalorder %s181, %s182
      %p193 = scmp.eq.s32.totalorder %s21, 0
      %p194 = por %p192, %p193
      %p195 = scmp.ne.s32.totalorder %s181, %s182
      %p196 = scmp.eq.s32.totalorder %s22, 1
      %p197 = por %p195, %p196
      %p199 = scmp.ne.s32.totalorder %s182, %s198
      %p200 = scmp.eq.s32.totalorder %s22, 0
      %p201 = por %p199, %p200
      %p202 = scmp.le.s32.totalorder 1, %s16
      %p203 = scmp.lt.s32.totalorder %s16, 3
      %p204 = pnand %p202, %p203
      %p205 = pneg %p204
      // Predicated region
      $region9: #{gradual_style_block_forward.5} parent=5 // pred_check
        _
      $region10: #{gradual_style_block_forward.5} parent=5 // pred_check_branch
        %207 = sbr.rel (%p204) target = $region12
      $region11: #{gradual_style_block_forward.5} parent=5 // pred_region
        %s208 = ssub.s32 %s16, 1
        // Predicated region
        $region13: #{gradual_style_block_forward.5} parent=11 // pred_check
          %p209 = pneg %p63
        $region14: #{gradual_style_block_forward.5} parent=11 // pred_check_branch
          %211 = sbr.rel (%p209) target = $region16
        $region15: #{gradual_style_block_forward.5} parent=11 // pred_region
          _
        $region16: #{gradual_style_block_forward.5} parent=11 // pred_fallthru
          _
        // Predicated region
        $region17: #{gradual_style_block_forward.5} parent=11 // pred_check
          %p212 = pneg %p84
        $region18: #{gradual_style_block_forward.5} parent=11 // pred_check_branch
          %214 = sbr.rel (%p212) target = $region20
        $region19: #{gradual_style_block_forward.5} parent=11 // pred_region
          _
        $region20: #{gradual_style_block_forward.5} parent=11 // pred_fallthru
          _
        // Predicated region
        $region21: #{gradual_style_block_forward.5} parent=11 // pred_check
          %p215 = pneg %p105
        $region22: #{gradual_style_block_forward.5} parent=11 // pred_check_branch
          %217 = sbr.rel (%p215) target = $region24
        $region23: #{gradual_style_block_forward.5} parent=11 // pred_region
          _
        $region24: #{gradual_style_block_forward.5} parent=11 // pred_fallthru
          _
        // Predicated region
        $region25: #{gradual_style_block_forward.5} parent=11 // pred_check
          %p218 = pneg %p126
        $region26: #{gradual_style_block_forward.5} parent=11 // pred_check_branch
          %220 = sbr.rel (%p218) target = $region28
        $region27: #{gradual_style_block_forward.5} parent=11 // pred_region
          _
        $region28: #{gradual_style_block_forward.5} parent=11 // pred_fallthru
          _
        // Predicated region
        $region29: #{gradual_style_block_forward.5} parent=11 // pred_check
          %p221 = pneg %p147
        $region30: #{gradual_style_block_forward.5} parent=11 // pred_check_branch
          %223 = sbr.rel (%p221) target = $region32
        $region31: #{gradual_style_block_forward.5} parent=11 // pred_region
          _
        $region32: #{gradual_style_block_forward.5} parent=11 // pred_fallthru
          _
        // Predicated region
        $region33: #{gradual_style_block_forward.5} parent=11 // pred_check
          %p224 = pneg %p168
        $region34: #{gradual_style_block_forward.5} parent=11 // pred_check_branch
          %226 = sbr.rel (%p224) target = $region36
        $region35: #{gradual_style_block_forward.5} parent=11 // pred_region
          _
        $region36: #{gradual_style_block_forward.5} parent=11 // pred_fallthru
          _
      $region12: #{gradual_style_block_forward.5} parent=5 // pred_fallthru
        _
      %p227 = scmp.lt.s32.totalorder %s16, 2
      // Predicated region
      $region37: #{gradual_style_block_forward.5} parent=5 // pred_check
        %p228 = pneg %p227
      $region38: #{gradual_style_block_forward.5} parent=5 // pred_check_branch
        %230 = sbr.rel (%p228) target = $region40
      $region39: #{gradual_style_block_forward.5} parent=5 // pred_region
        // Predicated region
        $region41: #{gradual_style_block_forward.5} parent=39 // pred_check
          %p231 = pneg %p36
        $region42: #{gradual_style_block_forward.5} parent=39 // pred_check_branch
          %233 = sbr.rel (%p231) target = $region44
        $region43: #{gradual_style_block_forward.5} parent=39 // pred_region
          %s234 = smul.u32 4, %s16
          %p235 = scmp.lt.s32.totalorder %s234, 7
          %s236 = scalar_select %p235, %s234, 7
          %s237 = smul.addr %s236, 3
          %s238 = smul.addr %s237, 2
          %s239 = scalar_lea.vmem %s0, %s238
          %s240 = smul.u32 4, %s16
        $region44: #{gradual_style_block_forward.5} parent=39 // pred_fallthru
          _
      $region40: #{gradual_style_block_forward.5} parent=5 // pred_fallthru
        _
      %p241 = scmp.le.s32.totalorder 1, %s16
      %p242 = scmp.lt.s32.totalorder %s16, 3
      %p243 = pnand %p241, %p242
      %p244 = pneg %p243
      // Predicated region
      $region45: #{gradual_style_block_forward.5} parent=5 // pred_check
        _
      $region46: #{gradual_style_block_forward.5} parent=5 // pred_check_branch
        %246 = sbr.rel (%p243) target = $region48
      $region47: #{gradual_style_block_forward.5} parent=5 // pred_region
        %s247 = ssub.s32 %s16, 1
        %s248 = smul.u32 4, %s21
        %p249 = scmp.lt.s32.totalorder %s248, 7
        %s250 = scalar_select %p249, %s248, 7
        %s251 = smul.addr %s250, 3
        %s252 = smul.addr %s251, 2
        %s253 = scalar_lea.vmem %s0, %s252
        %p254 = pneg %p42
        %p255 = pneg %p39
        %p256 = pneg %p63
        %p257 = pneg %p60
        %p258 = pneg %p84
        %p259 = pneg %p81
        %p260 = pneg %p105
        %p261 = pneg %p102
        %p262 = pneg %p126
        %p263 = pneg %p123
        %p264 = pneg %p147
        %p265 = pneg %p144
        %p266 = pneg %p168
        %p267 = pneg %p165
        %p268 = pneg %p194
        %p269 = pneg %p191
        %s270 = sand.u32 %s181, 1
        %s271 = scalar_lea.sflag [#allocation3], %s270
        %s272 = sand.u32 %s181, 1
        %s273 = scalar_lea.vmem [#allocation2], %s272
        %s274 = smul.u32 4, %s21
        %p275 = scmp.lt.s32.totalorder %s274, 7
        %s276 = scalar_select %p275, %s274, 7
        %s277 = smul.addr %s276, 3
        %s278 = smul.addr %s277, 2
        %s279 = scalar_lea.vmem %s0, %s278
        %s280 = smul.u32 4, %s21
        %v282 = vld [vmem:[%s279] sm:$0x3]
        %v283 = vld [vmem:[%s279 + $0x2] sm:$0x3]
        %v284 = vld [vmem:[%s279 + $0x4] sm:$0x3]
        %v285 = vld [vmem:[%s1] sm:$0xf]
        %v286 = vld [vmem:[%s1 + $0x4] sm:$0xf]
        %v287 = vld [vmem:[%s1 + $0x8] sm:$0xf]
        %v288 = vld [vmem:[%s1 + $0xc] sm:$0xf]
        %s289 = scalar_lea.vmem %s279, 6
        %v290 = vld [vmem:[%s289] sm:$0x3]
        %v291 = vld [vmem:[%s289 + $0x2] sm:$0x3]
        %v292 = vld [vmem:[%s289 + $0x4] sm:$0x3]
        %s293 = scalar_lea.vmem %s1, 16
        %v294 = vld [vmem:[%s293] sm:$0xf]
        %v295 = vld [vmem:[%s293 + $0x4] sm:$0xf]
        %v296 = vld [vmem:[%s293 + $0x8] sm:$0xf]
        %v297 = vld [vmem:[%s293 + $0xc] sm:$0xf]
        %v300 = vcombine.low %v290, %v291
        %v302 = vunpack.c.l.s4 1966171168
        %v303 = vunpack.c.0.s8 %v302
        %v304 = vlaneseq
        %v305 = vshrl.u32 %v304, 7
        %v306 = vsub.s32 %v303, %v305
        %v307 = vrot.slane %v300, %v306
        %v309 = vunpack.c.l.s4 1966171168
        %v310 = vunpack.c.0.s8 %v309
        %v311 = vlaneseq
        %v312 = vshrl.u32 %v311, 7
        %v313 = vsub.s32 %v310, %v312
        %v314 = vrot.slane %v307, %v313
        %v319 = vunpack.c.l.b16 %v294
        %v320 = vunpack.c.l.b16 %v295
        %v321 = vunpack.c.l.b16 %v296
        %v322 = vunpack.c.l.b16 %v297
        %v323 = vpack.c.b16 %v320, %v319
        %v324 = vpack.c.b16 %v322, %v321
        %vm327 = vcmask 261120
        %v329 = vsel %vm327, %v314, 0
        %331 = vmatprep.subr.bf16.mxu0 0
        %332 = vmatpush1.bf16.msra.mxu0 0
        %333 = vmatprep.subr.bf16.mxu0 0
        %334 = vmatpush1.bf16.msra.mxu0 0
        %335 = vmatprep.subr.bf16.mxu0 0
        %336 = vmatpush1.bf16.msra.mxu0 0
        %337 = vmatprep.subr.bf16.mxu0 0
        %338 = vmatpush1.bf16.msra.mxu0 0
        %339 = vmatprep.subr.bf16.mxu0 0
        %340 = vmatpush1.bf16.msra.mxu0 0
        %341 = vmatprep.subr.bf16.mxu0 0
        %342 = vmatpush1.bf16.msra.mxu0 0
        %343 = vmatprep.subr.bf16.mxu0 0
        %344 = vmatpush1.bf16.msra.mxu0 %v324
        %345 = vmatprep.subr.bf16.mxu0 0
        %346 = vmatpush1.bf16.msra.mxu0 %v323
        %347 = vmatprep.subr.bf16.mxu0 0
        %348 = vmatpush2.bf16.msra.mxu0 0
        %349 = vmatprep.subr.bf16.mxu0 0
        %350 = vmatpush2.bf16.msra.mxu0 0
        %351 = vmatprep.subr.bf16.mxu0 0
        %352 = vmatpush2.bf16.msra.mxu0 0
        %353 = vmatprep.subr.bf16.mxu0 0
        %354 = vmatpush2.bf16.msra.mxu0 0
        %355 = vmatprep.subr.bf16.mxu0 0
        %356 = vmatpush2.bf16.msra.mxu0 0
        %357 = vmatprep.subr.bf16.mxu0 0
        %358 = vmatpush2.bf16.msra.mxu0 0
        %359 = vmatprep.subr.bf16.mxu0 0
        %360 = vmatpush2.bf16.msra.mxu0 0
        %361 = vmatprep.subr.bf16.mxu0 0
        %362 = vmatpush2.bf16.msra.mxu0 0
        %363 = vmatprep.mubr.bf16.mxu0 0
        %364 = vmatmul.mubr.bf16.gmra.mxu0 %v329
        %v365 = vpop.f32.mrf.mxu0
        %v366 = vadd.f32 0.0, %v365
        %v367 = vpop.f32.mrf.mxu0
        %v368 = vpop.f32.mrf.mxu0
        %v369 = vpop.f32.mrf.mxu0
        %370 = vdwg.mxu0
        %v373 = vcombine.low %v282, %v283
        %v375 = vunpack.c.l.s4 1966171168
        %v376 = vunpack.c.0.s8 %v375
        %v377 = vlaneseq
        %v378 = vshrl.u32 %v377, 7
        %v379 = vsub.s32 %v376, %v378
        %v380 = vrot.slane %v373, %v379
        %v382 = vunpack.c.l.s4 1966171168
        %v383 = vunpack.c.0.s8 %v382
        %v384 = vlaneseq
        %v385 = vshrl.u32 %v384, 7
        %v386 = vsub.s32 %v383, %v385
        %v387 = vrot.slane %v380, %v386
        %v392 = vunpack.c.l.b16 %v285
        %v393 = vunpack.c.l.b16 %v286
        %v394 = vunpack.c.l.b16 %v287
        %v395 = vunpack.c.l.b16 %v288
        %v396 = vpack.c.b16 %v393, %v392
        %v397 = vpack.c.b16 %v395, %v394
        %v401 = vsel %vm327, %v387, 0
        %403 = vmatprep.subr.bf16.mxu0 0
        %404 = vmatpush1.bf16.msra.mxu0 0
        %405 = vmatprep.subr.bf16.mxu0 0
        %406 = vmatpush1.bf16.msra.mxu0 0
        %407 = vmatprep.subr.bf16.mxu0 0
        %408 = vmatpush1.bf16.msra.mxu0 0
        %409 = vmatprep.subr.bf16.mxu0 0
        %410 = vmatpush1.bf16.msra.mxu0 0
        %411 = vmatprep.subr.bf16.mxu0 0
        %412 = vmatpush1.bf16.msra.mxu0 0
        %413 = vmatprep.subr.bf16.mxu0 0
        %414 = vmatpush1.bf16.msra.mxu0 0
        %415 = vmatprep.subr.bf16.mxu0 0
        %416 = vmatpush1.bf16.msra.mxu0 %v397
        %417 = vmatprep.subr.bf16.mxu0 0
        %418 = vmatpush1.bf16.msra.mxu0 %v396
        %419 = vmatprep.subr.bf16.mxu0 0
        %420 = vmatpush2.bf16.msra.mxu0 0
        %421 = vmatprep.subr.bf16.mxu0 0
        %422 = vmatpush2.bf16.msra.mxu0 0
        %423 = vmatprep.subr.bf16.mxu0 0
        %424 = vmatpush2.bf16.msra.mxu0 0
        %425 = vmatprep.subr.bf16.mxu0 0
        %426 = vmatpush2.bf16.msra.mxu0 0
        %427 = vmatprep.subr.bf16.mxu0 0
        %428 = vmatpush2.bf16.msra.mxu0 0
        %429 = vmatprep.subr.bf16.mxu0 0
        %430 = vmatpush2.bf16.msra.mxu0 0
        %431 = vmatprep.subr.bf16.mxu0 0
        %432 = vmatpush2.bf16.msra.mxu0 0
        %433 = vmatprep.subr.bf16.mxu0 0
        %434 = vmatpush2.bf16.msra.mxu0 0
        %435 = vmatprep.mubr.bf16.mxu0 0
        %436 = vmatmul.mubr.bf16.gmra.mxu0 %v401
        %v437 = vpop.f32.mrf.mxu0
        %v438 = vadd.f32 %v366, %v437
        %v439 = vpop.f32.mrf.mxu0
        %v440 = vpop.f32.mrf.mxu0
        %v441 = vpop.f32.mrf.mxu0
        %442 = vdwg.mxu0
        %v444 = vunpack.c.l.s4 1966171168
        %v445 = vunpack.c.0.s8 %v444
        %v446 = vlaneseq
        %v447 = vshrl.u32 %v446, 7
        %v448 = vsub.s32 %v445, %v447
        %v449 = vrot.slane %v282, %v448
        %v450 = vcombine.high %v449, %v449
        %v452 = vunpack.c.l.s4 1966171168
        %v453 = vunpack.c.0.s8 %v452
        %v454 = vlaneseq
        %v455 = vshrl.u32 %v454, 7
        %v456 = vsub.s32 %v453, %v455
        %v457 = vrot.slane %v283, %v456
        %v458 = vcombine.high %v457, %v457
        %vm459 = vsmask.f32 256
        %vm460 = vsmask.f32 1284
        %vm461 = vmor %vm459, %vm460
        %vm462 = vsmask.f32 2312
        %vm463 = vmor %vm461, %vm462
        %vm464 = vsmask.f32 3340
        %vm465 = vmor %vm463, %vm464
        %vm466 = vsmask.f32 4368
        %vm467 = vmor %vm465, %vm466
        %vm468 = vsmask.f32 5396
        %vm469 = vmor %vm467, %vm468
        %vm470 = vsmask.f32 6424
        %vm471 = vmor %vm469, %vm470
        %vm472 = vsmask.f32 7452
        %vm473 = vmor %vm471, %vm472
        %v475 = vshrl.u32 %v449, 16
        %v477 = vrot.slane %v475, 7
        %v478 = vrot.slane %v477, 1
        %v480 = vshll.u32 %v450, 16
        %v482 = vsel %vm473, %v478, %v480
        %v484 = vshrl.u32 %v457, 16
        %v486 = vrot.slane %v484, 7
        %v487 = vrot.slane %v486, 1
        %v489 = vshll.u32 %v458, 16
        %v491 = vsel %vm473, %v487, %v489
        %s492 = scalar_lea.vmem %s1, 32
        %v493 = vld [vmem:[%s492] sm:$0xf]
        %v494 = vld [vmem:[%s492 + $0x4] sm:$0xf]
        %v495 = vld [vmem:[%s492 + $0x8] sm:$0xf]
        %v496 = vld [vmem:[%s492 + $0xc] sm:$0xf]
        %v497 = vcombine.low %v482, %v491
        %v499 = vunpack.c.l.s4 1966171168
        %v500 = vunpack.c.0.s8 %v499
        %v501 = vlaneseq
        %v502 = vshrl.u32 %v501, 7
        %v503 = vsub.s32 %v500, %v502
        %v504 = vrot.slane %v497, %v503
        %v506 = vunpack.c.l.s4 1966171168
        %v507 = vunpack.c.0.s8 %v506
        %v508 = vlaneseq
        %v509 = vshrl.u32 %v508, 7
        %v510 = vsub.s32 %v507, %v509
        %v511 = vrot.slane %v504, %v510
        %v516 = vunpack.c.l.b16 %v493
        %v517 = vunpack.c.l.b16 %v494
        %v518 = vunpack.c.l.b16 %v495
        %v519 = vunpack.c.l.b16 %v496
        %v520 = vpack.c.b16 %v517, %v516
        %v521 = vpack.c.b16 %v519, %v518
        %v525 = vsel %vm327, %v511, 0
        %527 = vmatprep.subr.bf16.mxu0 0
        %528 = vmatpush1.bf16.msra.mxu0 0
        %529 = vmatprep.subr.bf16.mxu0 0
        %530 = vmatpush1.bf16.msra.mxu0 0
        %531 = vmatprep.subr.bf16.mxu0 0
        %532 = vmatpush1.bf16.msra.mxu0 0
        %533 = vmatprep.subr.bf16.mxu0 0
        %534 = vmatpush1.bf16.msra.mxu0 0
        %535 = vmatprep.subr.bf16.mxu0 0
        %536 = vmatpush1.bf16.msra.mxu0 0
        %537 = vmatprep.subr.bf16.mxu0 0
        %538 = vmatpush1.bf16.msra.mxu0 0
        %539 = vmatprep.subr.bf16.mxu0 0
        %540 = vmatpush1.bf16.msra.mxu0 %v521
        %541 = vmatprep.subr.bf16.mxu0 0
        %542 = vmatpush1.bf16.msra.mxu0 %v520
        %543 = vmatprep.subr.bf16.mxu0 0
        %544 = vmatpush2.bf16.msra.mxu0 0
        %545 = vmatprep.subr.bf16.mxu0 0
        %546 = vmatpush2.bf16.msra.mxu0 0
        %547 = vmatprep.subr.bf16.mxu0 0
        %548 = vmatpush2.bf16.msra.mxu0 0
        %549 = vmatprep.subr.bf16.mxu0 0
        %550 = vmatpush2.bf16.msra.mxu0 0
        %551 = vmatprep.subr.bf16.mxu0 0
        %552 = vmatpush2.bf16.msra.mxu0 0
        %553 = vmatprep.subr.bf16.mxu0 0
        %554 = vmatpush2.bf16.msra.mxu0 0
        %555 = vmatprep.subr.bf16.mxu0 0
        %556 = vmatpush2.bf16.msra.mxu0 0
        %557 = vmatprep.subr.bf16.mxu0 0
        %558 = vmatpush2.bf16.msra.mxu0 0
        %559 = vmatprep.mubr.bf16.mxu0 0
        %560 = vmatmul.mubr.bf16.gmra.mxu0 %v525
        %v561 = vpop.f32.mrf.mxu0
        %v562 = vadd.f32 0.0, %v561
        %v563 = vpop.f32.mrf.mxu0
        %v564 = vpop.f32.mrf.mxu0
        %v565 = vpop.f32.mrf.mxu0
        %566 = vdwg.mxu0
        %v567 = vadd.f32 %v438, %v562
        %s568 = scalar_lea.vmem %s279, 12
        %v569 = vld [vmem:[%s568] sm:$0x3]
        %v570 = vld [vmem:[%s568 + $0x2] sm:$0x3]
        %s571 = scalar_lea.vmem %s1, 48
        %v572 = vld [vmem:[%s571] sm:$0xf]
        %v573 = vld [vmem:[%s571 + $0x4] sm:$0xf]
        %v574 = vld [vmem:[%s571 + $0x8] sm:$0xf]
        %v575 = vld [vmem:[%s571 + $0xc] sm:$0xf]
        %v578 = vcombine.low %v569, %v570
        %v580 = vunpack.c.l.s4 1966171168
        %v581 = vunpack.c.0.s8 %v580
        %v582 = vlaneseq
        %v583 = vshrl.u32 %v582, 7
        %v584 = vsub.s32 %v581, %v583
        %v585 = vrot.slane %v578, %v584
        %v587 = vunpack.c.l.s4 1966171168
        %v588 = vunpack.c.0.s8 %v587
        %v589 = vlaneseq
        %v590 = vshrl.u32 %v589, 7
        %v591 = vsub.s32 %v588, %v590
        %v592 = vrot.slane %v585, %v591
        %v597 = vunpack.c.l.b16 %v572
        %v598 = vunpack.c.l.b16 %v573
        %v599 = vunpack.c.l.b16 %v574
        %v600 = vunpack.c.l.b16 %v575
        %v601 = vpack.c.b16 %v598, %v597
        %v602 = vpack.c.b16 %v600, %v599
        %v606 = vsel %vm327, %v592, 0
        %608 = vmatprep.subr.bf16.mxu0 0
        %609 = vmatpush1.bf16.msra.mxu0 0
        %610 = vmatprep.subr.bf16.mxu0 0
        %611 = vmatpush1.bf16.msra.mxu0 0
        %612 = vmatprep.subr.bf16.mxu0 0
        %613 = vmatpush1.bf16.msra.mxu0 0
        %614 = vmatprep.subr.bf16.mxu0 0
        %615 = vmatpush1.bf16.msra.mxu0 0
        %616 = vmatprep.subr.bf16.mxu0 0
        %617 = vmatpush1.bf16.msra.mxu0 0
        %618 = vmatprep.subr.bf16.mxu0 0
        %619 = vmatpush1.bf16.msra.mxu0 0
        %620 = vmatprep.subr.bf16.mxu0 0
        %621 = vmatpush1.bf16.msra.mxu0 %v602
        %622 = vmatprep.subr.bf16.mxu0 0
        %623 = vmatpush1.bf16.msra.mxu0 %v601
        %624 = vmatprep.subr.bf16.mxu0 0
        %625 = vmatpush2.bf16.msra.mxu0 0
        %626 = vmatprep.subr.bf16.mxu0 0
        %627 = vmatpush2.bf16.msra.mxu0 0
        %628 = vmatprep.subr.bf16.mxu0 0
        %629 = vmatpush2.bf16.msra.mxu0 0
        %630 = vmatprep.subr.bf16.mxu0 0
        %631 = vmatpush2.bf16.msra.mxu0 0
        %632 = vmatprep.subr.bf16.mxu0 0
        %633 = vmatpush2.bf16.msra.mxu0 0
        %634 = vmatprep.subr.bf16.mxu0 0
        %635 = vmatpush2.bf16.msra.mxu0 0
        %636 = vmatprep.subr.bf16.mxu0 0
        %637 = vmatpush2.bf16.msra.mxu0 0
        %638 = vmatprep.subr.bf16.mxu0 0
        %639 = vmatpush2.bf16.msra.mxu0 0
        %640 = vmatprep.mubr.bf16.mxu0 0
        %641 = vmatmul.mubr.bf16.gmra.mxu0 %v606
        %v642 = vpop.f32.mrf.mxu0
        %v643 = vadd.f32 0.0, %v642
        %v644 = vpop.f32.mrf.mxu0
        %v645 = vpop.f32.mrf.mxu0
        %v646 = vpop.f32.mrf.mxu0
        %647 = vdwg.mxu0
        %v648 = vadd.f32 %v567, %v643
        %s649 = scalar_lea.vmem %s279, 18
        %v650 = vld [vmem:[%s649] sm:$0x3]
        %v651 = vld [vmem:[%s649 + $0x2] sm:$0x3]
        %s652 = scalar_lea.vmem %s1, 64
        %v653 = vld [vmem:[%s652] sm:$0xf]
        %v654 = vld [vmem:[%s652 + $0x4] sm:$0xf]
        %v655 = vld [vmem:[%s652 + $0x8] sm:$0xf]
        %v656 = vld [vmem:[%s652 + $0xc] sm:$0xf]
        %v659 = vcombine.low %v650, %v651
        %v661 = vunpack.c.l.s4 1966171168
        %v662 = vunpack.c.0.s8 %v661
        %v663 = vlaneseq
        %v664 = vshrl.u32 %v663, 7
        %v665 = vsub.s32 %v662, %v664
        %v666 = vrot.slane %v659, %v665
        %v668 = vunpack.c.l.s4 1966171168
        %v669 = vunpack.c.0.s8 %v668
        %v670 = vlaneseq
        %v671 = vshrl.u32 %v670, 7
        %v672 = vsub.s32 %v669, %v671
        %v673 = vrot.slane %v666, %v672
        %v678 = vunpack.c.l.b16 %v653
        %v679 = vunpack.c.l.b16 %v654
        %v680 = vunpack.c.l.b16 %v655
        %v681 = vunpack.c.l.b16 %v656
        %v682 = vpack.c.b16 %v679, %v678
        %v683 = vpack.c.b16 %v681, %v680
        %v687 = vsel %vm327, %v673, 0
        %689 = vmatprep.subr.bf16.mxu0 0
        %690 = vmatpush1.bf16.msra.mxu0 0
        %691 = vmatprep.subr.bf16.mxu0 0
        %692 = vmatpush1.bf16.msra.mxu0 0
        %693 = vmatprep.subr.bf16.mxu0 0
        %694 = vmatpush1.bf16.msra.mxu0 0
        %695 = vmatprep.subr.bf16.mxu0 0
        %696 = vmatpush1.bf16.msra.mxu0 0
        %697 = vmatprep.subr.bf16.mxu0 0
        %698 = vmatpush1.bf16.msra.mxu0 0
        %699 = vmatprep.subr.bf16.mxu0 0
        %700 = vmatpush1.bf16.msra.mxu0 0
        %701 = vmatprep.subr.bf16.mxu0 0
        %702 = vmatpush1.bf16.msra.mxu0 %v683
        %703 = vmatprep.subr.bf16.mxu0 0
        %704 = vmatpush1.bf16.msra.mxu0 %v682
        %705 = vmatprep.subr.bf16.mxu0 0
        %706 = vmatpush2.bf16.msra.mxu0 0
        %707 = vmatprep.subr.bf16.mxu0 0
        %708 = vmatpush2.bf16.msra.mxu0 0
        %709 = vmatprep.subr.bf16.mxu0 0
        %710 = vmatpush2.bf16.msra.mxu0 0
        %711 = vmatprep.subr.bf16.mxu0 0
        %712 = vmatpush2.bf16.msra.mxu0 0
        %713 = vmatprep.subr.bf16.mxu0 0
        %714 = vmatpush2.bf16.msra.mxu0 0
        %715 = vmatprep.subr.bf16.mxu0 0
        %716 = vmatpush2.bf16.msra.mxu0 0
        %717 = vmatprep.subr.bf16.mxu0 0
        %718 = vmatpush2.bf16.msra.mxu0 0
        %719 = vmatprep.subr.bf16.mxu0 0
        %720 = vmatpush2.bf16.msra.mxu0 0
        %721 = vmatprep.mubr.bf16.mxu0 0
        %722 = vmatmul.mubr.bf16.gmra.mxu0 %v687
        %v723 = vpop.f32.mrf.mxu0
        %v724 = vadd.f32 0.0, %v723
        %v725 = vpop.f32.mrf.mxu0
        %v726 = vpop.f32.mrf.mxu0
        %v727 = vpop.f32.mrf.mxu0
        %728 = vdwg.mxu0
        %v729 = vadd.f32 %v648, %v724
        %v731 = vunpack.c.l.s4 1966171168
        %v732 = vunpack.c.0.s8 %v731
        %v733 = vlaneseq
        %v734 = vshrl.u32 %v733, 7
        %v735 = vsub.s32 %v732, %v734
        %v736 = vrot.slane %v569, %v735
        %v737 = vcombine.high %v736, %v736
        %v739 = vunpack.c.l.s4 1966171168
        %v740 = vunpack.c.0.s8 %v739
        %v741 = vlaneseq
        %v742 = vshrl.u32 %v741, 7
        %v743 = vsub.s32 %v740, %v742
        %v744 = vrot.slane %v570, %v743
        %v745 = vcombine.high %v744, %v744
        %v747 = vshrl.u32 %v736, 16
        %v749 = vrot.slane %v747, 7
        %v750 = vrot.slane %v749, 1
        %v752 = vshll.u32 %v737, 16
        %v754 = vsel %vm473, %v750, %v752
        %v756 = vshrl.u32 %v744, 16
        %v758 = vrot.slane %v756, 7
        %v759 = vrot.slane %v758, 1
        %v761 = vshll.u32 %v745, 16
        %v763 = vsel %vm473, %v759, %v761
        %s764 = scalar_lea.vmem %s1, 80
        %v765 = vld [vmem:[%s764] sm:$0xf]
        %v766 = vld [vmem:[%s764 + $0x4] sm:$0xf]
        %v767 = vld [vmem:[%s764 + $0x8] sm:$0xf]
        %v768 = vld [vmem:[%s764 + $0xc] sm:$0xf]
        %v769 = vcombine.low %v754, %v763
        %v771 = vunpack.c.l.s4 1966171168
        %v772 = vunpack.c.0.s8 %v771
        %v773 = vlaneseq
        %v774 = vshrl.u32 %v773, 7
        %v775 = vsub.s32 %v772, %v774
        %v776 = vrot.slane %v769, %v775
        %v778 = vunpack.c.l.s4 1966171168
        %v779 = vunpack.c.0.s8 %v778
        %v780 = vlaneseq
        %v781 = vshrl.u32 %v780, 7
        %v782 = vsub.s32 %v779, %v781
        %v783 = vrot.slane %v776, %v782
        %v788 = vunpack.c.l.b16 %v765
        %v789 = vunpack.c.l.b16 %v766
        %v790 = vunpack.c.l.b16 %v767
        %v791 = vunpack.c.l.b16 %v768
        %v792 = vpack.c.b16 %v789, %v788
        %v793 = vpack.c.b16 %v791, %v790
        %v797 = vsel %vm327, %v783, 0
        %799 = vmatprep.subr.bf16.mxu0 0
        %800 = vmatpush1.bf16.msra.mxu0 0
        %801 = vmatprep.subr.bf16.mxu0 0
        %802 = vmatpush1.bf16.msra.mxu0 0
        %803 = vmatprep.subr.bf16.mxu0 0
        %804 = vmatpush1.bf16.msra.mxu0 0
        %805 = vmatprep.subr.bf16.mxu0 0
        %806 = vmatpush1.bf16.msra.mxu0 0
        %807 = vmatprep.subr.bf16.mxu0 0
        %808 = vmatpush1.bf16.msra.mxu0 0
        %809 = vmatprep.subr.bf16.mxu0 0
        %810 = vmatpush1.bf16.msra.mxu0 0
        %811 = vmatprep.subr.bf16.mxu0 0
        %812 = vmatpush1.bf16.msra.mxu0 %v793
        %813 = vmatprep.subr.bf16.mxu0 0
        %814 = vmatpush1.bf16.msra.mxu0 %v792
        %815 = vmatprep.subr.bf16.mxu0 0
        %816 = vmatpush2.bf16.msra.mxu0 0
        %817 = vmatprep.subr.bf16.mxu0 0
        %818 = vmatpush2.bf16.msra.mxu0 0
        %819 = vmatprep.subr.bf16.mxu0 0
        %820 = vmatpush2.bf16.msra.mxu0 0
        %821 = vmatprep.subr.bf16.mxu0 0
        %822 = vmatpush2.bf16.msra.mxu0 0
        %823 = vmatprep.subr.bf16.mxu0 0
        %824 = vmatpush2.bf16.msra.mxu0 0
        %825 = vmatprep.subr.bf16.mxu0 0
        %826 = vmatpush2.bf16.msra.mxu0 0
        %827 = vmatprep.subr.bf16.mxu0 0
        %828 = vmatpush2.bf16.msra.mxu0 0
        %829 = vmatprep.subr.bf16.mxu0 0
        %830 = vmatpush2.bf16.msra.mxu0 0
        %831 = vmatprep.mubr.bf16.mxu0 0
        %832 = vmatmul.mubr.bf16.gmra.mxu0 %v797
        %v833 = vpop.f32.mrf.mxu0
        %v834 = vadd.f32 0.0, %v833
        %v835 = vpop.f32.mrf.mxu0
        %v836 = vpop.f32.mrf.mxu0
        %v837 = vpop.f32.mrf.mxu0
        %838 = vdwg.mxu0
        %v839 = vadd.f32 %v729, %v834
        %s840 = scalar_lea.vmem %s1, 96
        %v841 = vld [vmem:[%s840] sm:$0xf]
        %v842 = vld [vmem:[%s840 + $0x4] sm:$0xf]
        %v843 = vld [vmem:[%s840 + $0x8] sm:$0xf]
        %v844 = vld [vmem:[%s840 + $0xc] sm:$0xf]
        %v846 = vcombine.low %v283, %v284
        %v848 = vunpack.c.l.s4 1966171168
        %v849 = vunpack.c.0.s8 %v848
        %v850 = vlaneseq
        %v851 = vshrl.u32 %v850, 7
        %v852 = vsub.s32 %v849, %v851
        %v853 = vrot.slane %v846, %v852
        %v855 = vunpack.c.l.s4 1966171168
        %v856 = vunpack.c.0.s8 %v855
        %v857 = vlaneseq
        %v858 = vshrl.u32 %v857, 7
        %v859 = vsub.s32 %v856, %v858
        %v860 = vrot.slane %v853, %v859
        %v865 = vunpack.c.l.b16 %v841
        %v866 = vunpack.c.l.b16 %v842
        %v867 = vunpack.c.l.b16 %v843
        %v868 = vunpack.c.l.b16 %v844
        %v869 = vpack.c.b16 %v866, %v865
        %v870 = vpack.c.b16 %v868, %v867
        %v874 = vsel %vm327, %v860, 0
        %876 = vmatprep.subr.bf16.mxu0 0
        %877 = vmatpush1.bf16.msra.mxu0 0
        %878 = vmatprep.subr.bf16.mxu0 0
        %879 = vmatpush1.bf16.msra.mxu0 0
        %880 = vmatprep.subr.bf16.mxu0 0
        %881 = vmatpush1.bf16.msra.mxu0 0
        %882 = vmatprep.subr.bf16.mxu0 0
        %883 = vmatpush1.bf16.msra.mxu0 0
        %884 = vmatprep.subr.bf16.mxu0 0
        %885 = vmatpush1.bf16.msra.mxu0 0
        %886 = vmatprep.subr.bf16.mxu0 0
        %887 = vmatpush1.bf16.msra.mxu0 0
        %888 = vmatprep.subr.bf16.mxu0 0
        %889 = vmatpush1.bf16.msra.mxu0 %v870
        %890 = vmatprep.subr.bf16.mxu0 0
        %891 = vmatpush1.bf16.msra.mxu0 %v869
        %892 = vmatprep.subr.bf16.mxu0 0
        %893 = vmatpush2.bf16.msra.mxu0 0
        %894 = vmatprep.subr.bf16.mxu0 0
        %895 = vmatpush2.bf16.msra.mxu0 0
        %896 = vmatprep.subr.bf16.mxu0 0
        %897 = vmatpush2.bf16.msra.mxu0 0
        %898 = vmatprep.subr.bf16.mxu0 0
        %899 = vmatpush2.bf16.msra.mxu0 0
        %900 = vmatprep.subr.bf16.mxu0 0
        %901 = vmatpush2.bf16.msra.mxu0 0
        %902 = vmatprep.subr.bf16.mxu0 0
        %903 = vmatpush2.bf16.msra.mxu0 0
        %904 = vmatprep.subr.bf16.mxu0 0
        %905 = vmatpush2.bf16.msra.mxu0 0
        %906 = vmatprep.subr.bf16.mxu0 0
        %907 = vmatpush2.bf16.msra.mxu0 0
        %908 = vmatprep.mubr.bf16.mxu0 0
        %909 = vmatmul.mubr.bf16.gmra.mxu0 %v874
        %v910 = vpop.f32.mrf.mxu0
        %v911 = vadd.f32 0.0, %v910
        %v912 = vpop.f32.mrf.mxu0
        %v913 = vpop.f32.mrf.mxu0
        %v914 = vpop.f32.mrf.mxu0
        %915 = vdwg.mxu0
        %v916 = vadd.f32 %v839, %v911
        %s917 = scalar_lea.vmem %s1, 112
        %v918 = vld [vmem:[%s917] sm:$0xf]
        %v919 = vld [vmem:[%s917 + $0x4] sm:$0xf]
        %v920 = vld [vmem:[%s917 + $0x8] sm:$0xf]
        %v921 = vld [vmem:[%s917 + $0xc] sm:$0xf]
        %v923 = vcombine.low %v291, %v292
        %v925 = vunpack.c.l.s4 1966171168
        %v926 = vunpack.c.0.s8 %v925
        %v927 = vlaneseq
        %v928 = vshrl.u32 %v927, 7
        %v929 = vsub.s32 %v926, %v928
        %v930 = vrot.slane %v923, %v929
        %v932 = vunpack.c.l.s4 1966171168
        %v933 = vunpack.c.0.s8 %v932
        %v934 = vlaneseq
        %v935 = vshrl.u32 %v934, 7
        %v936 = vsub.s32 %v933, %v935
        %v937 = vrot.slane %v930, %v936
        %v942 = vunpack.c.l.b16 %v918
        %v943 = vunpack.c.l.b16 %v919
        %v944 = vunpack.c.l.b16 %v920
        %v945 = vunpack.c.l.b16 %v921
        %v946 = vpack.c.b16 %v943, %v942
        %v947 = vpack.c.b16 %v945, %v944
        %v951 = vsel %vm327, %v937, 0
        %953 = vmatprep.subr.bf16.mxu0 0
        %954 = vmatpush1.bf16.msra.mxu0 0
        %955 = vmatprep.subr.bf16.mxu0 0
        %956 = vmatpush1.bf16.msra.mxu0 0
        %957 = vmatprep.subr.bf16.mxu0 0
        %958 = vmatpush1.bf16.msra.mxu0 0
        %959 = vmatprep.subr.bf16.mxu0 0
        %960 = vmatpush1.bf16.msra.mxu0 0
        %961 = vmatprep.subr.bf16.mxu0 0
        %962 = vmatpush1.bf16.msra.mxu0 0
        %963 = vmatprep.subr.bf16.mxu0 0
        %964 = vmatpush1.bf16.msra.mxu0 0
        %965 = vmatprep.subr.bf16.mxu0 0
        %966 = vmatpush1.bf16.msra.mxu0 %v947
        %967 = vmatprep.subr.bf16.mxu0 0
        %968 = vmatpush1.bf16.msra.mxu0 %v946
        %969 = vmatprep.subr.bf16.mxu0 0
        %970 = vmatpush2.bf16.msra.mxu0 0
        %971 = vmatprep.subr.bf16.mxu0 0
        %972 = vmatpush2.bf16.msra.mxu0 0
        %973 = vmatprep.subr.bf16.mxu0 0
        %974 = vmatpush2.bf16.msra.mxu0 0
        %975 = vmatprep.subr.bf16.mxu0 0
        %976 = vmatpush2.bf16.msra.mxu0 0
        %977 = vmatprep.subr.bf16.mxu0 0
        %978 = vmatpush2.bf16.msra.mxu0 0
        %979 = vmatprep.subr.bf16.mxu0 0
        %980 = vmatpush2.bf16.msra.mxu0 0
        %981 = vmatprep.subr.bf16.mxu0 0
        %982 = vmatpush2.bf16.msra.mxu0 0
        %983 = vmatprep.subr.bf16.mxu0 0
        %984 = vmatpush2.bf16.msra.mxu0 0
        %985 = vmatprep.mubr.bf16.mxu0 0
        %986 = vmatmul.mubr.bf16.gmra.mxu0 %v951
        %v987 = vpop.f32.mrf.mxu0
        %v988 = vadd.f32 0.0, %v987
        %v989 = vpop.f32.mrf.mxu0
        %v990 = vpop.f32.mrf.mxu0
        %v991 = vpop.f32.mrf.mxu0
        %992 = vdwg.mxu0
        %v993 = vadd.f32 %v916, %v988
        %v995 = vunpack.c.l.s4 1966171168
        %v996 = vunpack.c.0.s8 %v995
        %v997 = vlaneseq
        %v998 = vshrl.u32 %v997, 7
        %v999 = vsub.s32 %v996, %v998
        %v1000 = vrot.slane %v284, %v999
        %v1001 = vcombine.high %v1000, %v1000
        %v1003 = vshrl.u32 %v1000, 16
        %v1005 = vrot.slane %v1003, 7
        %v1006 = vrot.slane %v1005, 1
        %v1008 = vshll.u32 %v1001, 16
        %v1010 = vsel %vm473, %v1006, %v1008
        %s1011 = scalar_lea.vmem %s1, 128
        %v1012 = vld [vmem:[%s1011] sm:$0xf]
        %v1013 = vld [vmem:[%s1011 + $0x4] sm:$0xf]
        %v1014 = vld [vmem:[%s1011 + $0x8] sm:$0xf]
        %v1015 = vld [vmem:[%s1011 + $0xc] sm:$0xf]
        %v1016 = vcombine.low %v491, %v1010
        %v1018 = vunpack.c.l.s4 1966171168
        %v1019 = vunpack.c.0.s8 %v1018
        %v1020 = vlaneseq
        %v1021 = vshrl.u32 %v1020, 7
        %v1022 = vsub.s32 %v1019, %v1021
        %v1023 = vrot.slane %v1016, %v1022
        %v1025 = vunpack.c.l.s4 1966171168
        %v1026 = vunpack.c.0.s8 %v1025
        %v1027 = vlaneseq
        %v1028 = vshrl.u32 %v1027, 7
        %v1029 = vsub.s32 %v1026, %v1028
        %v1030 = vrot.slane %v1023, %v1029
        %v1035 = vunpack.c.l.b16 %v1012
        %v1036 = vunpack.c.l.b16 %v1013
        %v1037 = vunpack.c.l.b16 %v1014
        %v1038 = vunpack.c.l.b16 %v1015
        %v1039 = vpack.c.b16 %v1036, %v1035
        %v1040 = vpack.c.b16 %v1038, %v1037
        %v1044 = vsel %vm327, %v1030, 0
        %1046 = vmatprep.subr.bf16.mxu0 0
        %1047 = vmatpush1.bf16.msra.mxu0 0
        %1048 = vmatprep.subr.bf16.mxu0 0
        %1049 = vmatpush1.bf16.msra.mxu0 0
        %1050 = vmatprep.subr.bf16.mxu0 0
        %1051 = vmatpush1.bf16.msra.mxu0 0
        %1052 = vmatprep.subr.bf16.mxu0 0
        %1053 = vmatpush1.bf16.msra.mxu0 0
        %1054 = vmatprep.subr.bf16.mxu0 0
        %1055 = vmatpush1.bf16.msra.mxu0 0
        %1056 = vmatprep.subr.bf16.mxu0 0
        %1057 = vmatpush1.bf16.msra.mxu0 0
        %1058 = vmatprep.subr.bf16.mxu0 0
        %1059 = vmatpush1.bf16.msra.mxu0 %v1040
        %1060 = vmatprep.subr.bf16.mxu0 0
        %1061 = vmatpush1.bf16.msra.mxu0 %v1039
        %1062 = vmatprep.subr.bf16.mxu0 0
        %1063 = vmatpush2.bf16.msra.mxu0 0
        %1064 = vmatprep.subr.bf16.mxu0 0
        %1065 = vmatpush2.bf16.msra.mxu0 0
        %1066 = vmatprep.subr.bf16.mxu0 0
        %1067 = vmatpush2.bf16.msra.mxu0 0
        %1068 = vmatprep.subr.bf16.mxu0 0
        %1069 = vmatpush2.bf16.msra.mxu0 0
        %1070 = vmatprep.subr.bf16.mxu0 0
        %1071 = vmatpush2.bf16.msra.mxu0 0
        %1072 = vmatprep.subr.bf16.mxu0 0
        %1073 = vmatpush2.bf16.msra.mxu0 0
        %1074 = vmatprep.subr.bf16.mxu0 0
        %1075 = vmatpush2.bf16.msra.mxu0 0
        %1076 = vmatprep.subr.bf16.mxu0 0
        %1077 = vmatpush2.bf16.msra.mxu0 0
        %1078 = vmatprep.mubr.bf16.mxu0 0
        %1079 = vmatmul.mubr.bf16.gmra.mxu0 %v1044
        %v1080 = vpop.f32.mrf.mxu0
        %v1081 = vadd.f32 0.0, %v1080
        %v1082 = vpop.f32.mrf.mxu0
        %v1083 = vpop.f32.mrf.mxu0
        %v1084 = vpop.f32.mrf.mxu0
        %1085 = vdwg.mxu0
        %v1086 = vadd.f32 %v993, %v1081
        %v1087 = vld [vmem:[%s2] sm:$0x1]
        %v1089 = vlaneseq
        %v1090 = vshrl.u32 %v1089, 7
        %v1091 = vsub.s32 0, %v1090
        %v1092 = vrot.slane %v1087, %v1091
        %v1094 = vadd.f32 %v1086, %v1092
        %vm1095 = vcmp.ge.f32.partialorder %v1094, 0.0
        %v1096 = vmul.f32 %v1094, 0.01
        %v1097 = vsel %vm1095, %v1094, %v1096
        %v1098 = vld [vmem:[%s3] sm:$0xff]
        %v1099 = vld [vmem:[%s3 + $0x8] sm:$0xff]
        %v1100 = vld [vmem:[%s3 + $0x10] sm:$0xff]
        %v1101 = vld [vmem:[%s3 + $0x18] sm:$0xff]
        %s1102 = scalar_lea.vmem %s3, 32
        %v1103 = vld [vmem:[%s1102] sm:$0xff]
        %v1104 = vld [vmem:[%s1102 + $0x8] sm:$0xff]
        %v1105 = vld [vmem:[%s1102 + $0x10] sm:$0xff]
        %v1106 = vld [vmem:[%s1102 + $0x18] sm:$0xff]
        %v1108 = vrot.slane %v1097, 1
        %v1109 = vsel %vm327, %v1108, 0
        %1111 = vmatprep.subr.mxu0 0.0
        %1112 = vmatpush1.msra.mxu0 0.0
        %1113 = vmatprep.subr.mxu0 0.0
        %1114 = vmatpush1.msra.mxu0 0.0
        %1115 = vmatprep.subr.mxu0 0.0
        %1116 = vmatpush1.msra.mxu0 0.0
        %1117 = vmatprep.subr.mxu0 0.0
        %1118 = vmatpush1.msra.mxu0 0.0
        %1119 = vmatprep.subr.mxu0 0.0
        %1120 = vmatpush1.msra.mxu0 0.0
        %1121 = vmatprep.subr.mxu0 0.0
        %1122 = vmatpush1.msra.mxu0 0.0
        %1123 = vmatprep.subr.mxu0 0.0
        %1124 = vmatpush1.msra.mxu0 0.0
        %1125 = vmatprep.subr.mxu0 0.0
        %1126 = vmatpush1.msra.mxu0 0.0
        %1127 = vmatprep.subr.mxu0 0.0
        %1128 = vmatpush1.msra.mxu0 0.0
        %1129 = vmatprep.subr.mxu0 0.0
        %1130 = vmatpush1.msra.mxu0 0.0
        %1131 = vmatprep.subr.mxu0 0.0
        %1132 = vmatpush1.msra.mxu0 0.0
        %1133 = vmatprep.subr.mxu0 0.0
        %1134 = vmatpush1.msra.mxu0 0.0
        %1135 = vmatprep.subr.mxu0 0.0
        %1136 = vmatpush1.msra.mxu0 %v1106
        %1137 = vmatprep.subr.mxu0 0.0
        %1138 = vmatpush1.msra.mxu0 %v1105
        %1139 = vmatprep.subr.mxu0 0.0
        %1140 = vmatpush1.msra.mxu0 %v1104
        %1141 = vmatprep.subr.mxu0 0.0
        %1142 = vmatpush1.msra.mxu0 %v1103
        %1143 = vmatprep.subr.mxu0 0.0
        %1144 = vmatpush2.msra.mxu0 0.0
        %1145 = vmatprep.subr.mxu0 0.0
        %1146 = vmatpush2.msra.mxu0 0.0
        %1147 = vmatprep.subr.mxu0 0.0
        %1148 = vmatpush2.msra.mxu0 0.0
        %1149 = vmatprep.subr.mxu0 0.0
        %1150 = vmatpush2.msra.mxu0 0.0
        %1151 = vmatprep.subr.mxu0 0.0
        %1152 = vmatpush2.msra.mxu0 0.0
        %1153 = vmatprep.subr.mxu0 0.0
        %1154 = vmatpush2.msra.mxu0 0.0
        %1155 = vmatprep.subr.mxu0 0.0
        %1156 = vmatpush2.msra.mxu0 0.0
        %1157 = vmatprep.subr.mxu0 0.0
        %1158 = vmatpush2.msra.mxu0 0.0
        %1159 = vmatprep.subr.mxu0 0.0
        %1160 = vmatpush2.msra.mxu0 0.0
        %1161 = vmatprep.subr.mxu0 0.0
        %1162 = vmatpush2.msra.mxu0 0.0
        %1163 = vmatprep.subr.mxu0 0.0
        %1164 = vmatpush2.msra.mxu0 0.0
        %1165 = vmatprep.subr.mxu0 0.0
        %1166 = vmatpush2.msra.mxu0 0.0
        %1167 = vmatprep.subr.mxu0 0.0
        %1168 = vmatpush2.msra.mxu0 0.0
        %1169 = vmatprep.subr.mxu0 0.0
        %1170 = vmatpush2.msra.mxu0 0.0
        %1171 = vmatprep.subr.mxu0 0.0
        %1172 = vmatpush2.msra.mxu0 0.0
        %1173 = vmatprep.subr.mxu0 0.0
        %1174 = vmatpush2.msra.mxu0 0.0
        %1175 = vmatprep.mubr.f32.mxu0 0.0
        %1176 = vmatmul.mubr.f32.gmra.mxu0 %v1109
        %v1177 = vpop.f32.mrf.mxu0
        %v1178 = vadd.f32 0.0, %v1177
        %v1179 = vpop.f32.mrf.mxu0
        %1180 = vdwg.mxu0
        %v1181 = vsel %vm327, %v1097, 0
        %1183 = vmatprep.subr.mxu0 0.0
        %1184 = vmatpush1.msra.mxu0 0.0
        %1185 = vmatprep.subr.mxu0 0.0
        %1186 = vmatpush1.msra.mxu0 0.0
        %1187 = vmatprep.subr.mxu0 0.0
        %1188 = vmatpush1.msra.mxu0 0.0
        %1189 = vmatprep.subr.mxu0 0.0
        %1190 = vmatpush1.msra.mxu0 0.0
        %1191 = vmatprep.subr.mxu0 0.0
        %1192 = vmatpush1.msra.mxu0 0.0
        %1193 = vmatprep.subr.mxu0 0.0
        %1194 = vmatpush1.msra.mxu0 0.0
        %1195 = vmatprep.subr.mxu0 0.0
        %1196 = vmatpush1.msra.mxu0 0.0
        %1197 = vmatprep.subr.mxu0 0.0
        %1198 = vmatpush1.msra.mxu0 0.0
        %1199 = vmatprep.subr.mxu0 0.0
        %1200 = vmatpush1.msra.mxu0 0.0
        %1201 = vmatprep.subr.mxu0 0.0
        %1202 = vmatpush1.msra.mxu0 0.0
        %1203 = vmatprep.subr.mxu0 0.0
        %1204 = vmatpush1.msra.mxu0 0.0
        %1205 = vmatprep.subr.mxu0 0.0
        %1206 = vmatpush1.msra.mxu0 0.0
        %1207 = vmatprep.subr.mxu0 0.0
        %1208 = vmatpush1.msra.mxu0 %v1101
        %1209 = vmatprep.subr.mxu0 0.0
        %1210 = vmatpush1.msra.mxu0 %v1100
        %1211 = vmatprep.subr.mxu0 0.0
        %1212 = vmatpush1.msra.mxu0 %v1099
        %1213 = vmatprep.subr.mxu0 0.0
        %1214 = vmatpush1.msra.mxu0 %v1098
        %1215 = vmatprep.subr.mxu0 0.0
        %1216 = vmatpush2.msra.mxu0 0.0
        %1217 = vmatprep.subr.mxu0 0.0
        %1218 = vmatpush2.msra.mxu0 0.0
        %1219 = vmatprep.subr.mxu0 0.0
        %1220 = vmatpush2.msra.mxu0 0.0
        %1221 = vmatprep.subr.mxu0 0.0
        %1222 = vmatpush2.msra.mxu0 0.0
        %1223 = vmatprep.subr.mxu0 0.0
        %1224 = vmatpush2.msra.mxu0 0.0
        %1225 = vmatprep.subr.mxu0 0.0
        %1226 = vmatpush2.msra.mxu0 0.0
        %1227 = vmatprep.subr.mxu0 0.0
        %1228 = vmatpush2.msra.mxu0 0.0
        %1229 = vmatprep.subr.mxu0 0.0
        %1230 = vmatpush2.msra.mxu0 0.0
        %1231 = vmatprep.subr.mxu0 0.0
        %1232 = vmatpush2.msra.mxu0 0.0
        %1233 = vmatprep.subr.mxu0 0.0
        %1234 = vmatpush2.msra.mxu0 0.0
        %1235 = vmatprep.subr.mxu0 0.0
        %1236 = vmatpush2.msra.mxu0 0.0
        %1237 = vmatprep.subr.mxu0 0.0
        %1238 = vmatpush2.msra.mxu0 0.0
        %1239 = vmatprep.subr.mxu0 0.0
        %1240 = vmatpush2.msra.mxu0 0.0
        %1241 = vmatprep.subr.mxu0 0.0
        %1242 = vmatpush2.msra.mxu0 0.0
        %1243 = vmatprep.subr.mxu0 0.0
        %1244 = vmatpush2.msra.mxu0 0.0
        %1245 = vmatprep.subr.mxu0 0.0
        %1246 = vmatpush2.msra.mxu0 0.0
        %1247 = vmatprep.mubr.f32.mxu0 0.0
        %1248 = vmatmul.mubr.f32.gmra.mxu0 %v1181
        %v1249 = vpop.f32.mrf.mxu0
        %v1250 = vadd.f32 %v1178, %v1249
        %v1251 = vpop.f32.mrf.mxu0
        %1252 = vdwg.mxu0
        %s1253 = scalar_lea.vmem %s3, 64
        %v1254 = vld [vmem:[%s1253] sm:$0xff]
        %v1255 = vld [vmem:[%s1253 + $0x8] sm:$0xff]
        %v1256 = vld [vmem:[%s1253 + $0x10] sm:$0xff]
        %v1257 = vld [vmem:[%s1253 + $0x18] sm:$0xff]
        %v1258 = vrot.slane %v1097, 2
        %v1259 = vsel %vm327, %v1258, 0
        %1261 = vmatprep.subr.mxu0 0.0
        %1262 = vmatpush1.msra.mxu0 0.0
        %1263 = vmatprep.subr.mxu0 0.0
        %1264 = vmatpush1.msra.mxu0 0.0
        %1265 = vmatprep.subr.mxu0 0.0
        %1266 = vmatpush1.msra.mxu0 0.0
        %1267 = vmatprep.subr.mxu0 0.0
        %1268 = vmatpush1.msra.mxu0 0.0
        %1269 = vmatprep.subr.mxu0 0.0
        %1270 = vmatpush1.msra.mxu0 0.0
        %1271 = vmatprep.subr.mxu0 0.0
        %1272 = vmatpush1.msra.mxu0 0.0
        %1273 = vmatprep.subr.mxu0 0.0
        %1274 = vmatpush1.msra.mxu0 0.0
        %1275 = vmatprep.subr.mxu0 0.0
        %1276 = vmatpush1.msra.mxu0 0.0
        %1277 = vmatprep.subr.mxu0 0.0
        %1278 = vmatpush1.msra.mxu0 0.0
        %1279 = vmatprep.subr.mxu0 0.0
        %1280 = vmatpush1.msra.mxu0 0.0
        %1281 = vmatprep.subr.mxu0 0.0
        %1282 = vmatpush1.msra.mxu0 0.0
        %1283 = vmatprep.subr.mxu0 0.0
        %1284 = vmatpush1.msra.mxu0 0.0
        %1285 = vmatprep.subr.mxu0 0.0
        %1286 = vmatpush1.msra.mxu0 %v1257
        %1287 = vmatprep.subr.mxu0 0.0
        %1288 = vmatpush1.msra.mxu0 %v1256
        %1289 = vmatprep.subr.mxu0 0.0
        %1290 = vmatpush1.msra.mxu0 %v1255
        %1291 = vmatprep.subr.mxu0 0.0
        %1292 = vmatpush1.msra.mxu0 %v1254
        %1293 = vmatprep.subr.mxu0 0.0
        %1294 = vmatpush2.msra.mxu0 0.0
        %1295 = vmatprep.subr.mxu0 0.0
        %1296 = vmatpush2.msra.mxu0 0.0
        %1297 = vmatprep.subr.mxu0 0.0
        %1298 = vmatpush2.msra.mxu0 0.0
        %1299 = vmatprep.subr.mxu0 0.0
        %1300 = vmatpush2.msra.mxu0 0.0
        %1301 = vmatprep.subr.mxu0 0.0
        %1302 = vmatpush2.msra.mxu0 0.0
        %1303 = vmatprep.subr.mxu0 0.0
        %1304 = vmatpush2.msra.mxu0 0.0
        %1305 = vmatprep.subr.mxu0 0.0
        %1306 = vmatpush2.msra.mxu0 0.0
        %1307 = vmatprep.subr.mxu0 0.0
        %1308 = vmatpush2.msra.mxu0 0.0
        %1309 = vmatprep.subr.mxu0 0.0
        %1310 = vmatpush2.msra.mxu0 0.0
        %1311 = vmatprep.subr.mxu0 0.0
        %1312 = vmatpush2.msra.mxu0 0.0
        %1313 = vmatprep.subr.mxu0 0.0
        %1314 = vmatpush2.msra.mxu0 0.0
        %1315 = vmatprep.subr.mxu0 0.0
        %1316 = vmatpush2.msra.mxu0 0.0
        %1317 = vmatprep.subr.mxu0 0.0
        %1318 = vmatpush2.msra.mxu0 0.0
        %1319 = vmatprep.subr.mxu0 0.0
        %1320 = vmatpush2.msra.mxu0 0.0
        %1321 = vmatprep.subr.mxu0 0.0
        %1322 = vmatpush2.msra.mxu0 0.0
        %1323 = vmatprep.subr.mxu0 0.0
        %1324 = vmatpush2.msra.mxu0 0.0
        %1325 = vmatprep.mubr.f32.mxu0 0.0
        %1326 = vmatmul.mubr.f32.gmra.mxu0 %v1259
        %v1327 = vpop.f32.mrf.mxu0
        %v1328 = vadd.f32 0.0, %v1327
        %v1329 = vpop.f32.mrf.mxu0
        %1330 = vdwg.mxu0
        %v1331 = vadd.f32 %v1250, %v1328
        %s1332 = scalar_lea.vmem %s3, 96
        %v1333 = vld [vmem:[%s1332] sm:$0xff]
        %v1334 = vld [vmem:[%s1332 + $0x8] sm:$0xff]
        %v1335 = vld [vmem:[%s1332 + $0x10] sm:$0xff]
        %v1336 = vld [vmem:[%s1332 + $0x18] sm:$0xff]
        %v1337 = vrot.slane %v1097, 3
        %v1338 = vsel %vm327, %v1337, 0
        %1340 = vmatprep.subr.mxu0 0.0
        %1341 = vmatpush1.msra.mxu0 0.0
        %1342 = vmatprep.subr.mxu0 0.0
        %1343 = vmatpush1.msra.mxu0 0.0
        %1344 = vmatprep.subr.mxu0 0.0
        %1345 = vmatpush1.msra.mxu0 0.0
        %1346 = vmatprep.subr.mxu0 0.0
        %1347 = vmatpush1.msra.mxu0 0.0
        %1348 = vmatprep.subr.mxu0 0.0
        %1349 = vmatpush1.msra.mxu0 0.0
        %1350 = vmatprep.subr.mxu0 0.0
        %1351 = vmatpush1.msra.mxu0 0.0
        %1352 = vmatprep.subr.mxu0 0.0
        %1353 = vmatpush1.msra.mxu0 0.0
        %1354 = vmatprep.subr.mxu0 0.0
        %1355 = vmatpush1.msra.mxu0 0.0
        %1356 = vmatprep.subr.mxu0 0.0
        %1357 = vmatpush1.msra.mxu0 0.0
        %1358 = vmatprep.subr.mxu0 0.0
        %1359 = vmatpush1.msra.mxu0 0.0
        %1360 = vmatprep.subr.mxu0 0.0
        %1361 = vmatpush1.msra.mxu0 0.0
        %1362 = vmatprep.subr.mxu0 0.0
        %1363 = vmatpush1.msra.mxu0 0.0
        %1364 = vmatprep.subr.mxu0 0.0
        %1365 = vmatpush1.msra.mxu0 %v1336
        %1366 = vmatprep.subr.mxu0 0.0
        %1367 = vmatpush1.msra.mxu0 %v1335
        %1368 = vmatprep.subr.mxu0 0.0
        %1369 = vmatpush1.msra.mxu0 %v1334
        %1370 = vmatprep.subr.mxu0 0.0
        %1371 = vmatpush1.msra.mxu0 %v1333
        %1372 = vmatprep.subr.mxu0 0.0
        %1373 = vmatpush2.msra.mxu0 0.0
        %1374 = vmatprep.subr.mxu0 0.0
        %1375 = vmatpush2.msra.mxu0 0.0
        %1376 = vmatprep.subr.mxu0 0.0
        %1377 = vmatpush2.msra.mxu0 0.0
        %1378 = vmatprep.subr.mxu0 0.0
        %1379 = vmatpush2.msra.mxu0 0.0
        %1380 = vmatprep.subr.mxu0 0.0
        %1381 = vmatpush2.msra.mxu0 0.0
        %1382 = vmatprep.subr.mxu0 0.0
        %1383 = vmatpush2.msra.mxu0 0.0
        %1384 = vmatprep.subr.mxu0 0.0
        %1385 = vmatpush2.msra.mxu0 0.0
        %1386 = vmatprep.subr.mxu0 0.0
        %1387 = vmatpush2.msra.mxu0 0.0
        %1388 = vmatprep.subr.mxu0 0.0
        %1389 = vmatpush2.msra.mxu0 0.0
        %1390 = vmatprep.subr.mxu0 0.0
        %1391 = vmatpush2.msra.mxu0 0.0
        %1392 = vmatprep.subr.mxu0 0.0
        %1393 = vmatpush2.msra.mxu0 0.0
        %1394 = vmatprep.subr.mxu0 0.0
        %1395 = vmatpush2.msra.mxu0 0.0
        %1396 = vmatprep.subr.mxu0 0.0
        %1397 = vmatpush2.msra.mxu0 0.0
        %1398 = vmatprep.subr.mxu0 0.0
        %1399 = vmatpush2.msra.mxu0 0.0
        %1400 = vmatprep.subr.mxu0 0.0
        %1401 = vmatpush2.msra.mxu0 0.0
        %1402 = vmatprep.subr.mxu0 0.0
        %1403 = vmatpush2.msra.mxu0 0.0
        %1404 = vmatprep.mubr.f32.mxu0 0.0
        %1405 = vmatmul.mubr.f32.gmra.mxu0 %v1338
        %v1406 = vpop.f32.mrf.mxu0
        %v1407 = vadd.f32 0.0, %v1406
        %v1408 = vpop.f32.mrf.mxu0
        %1409 = vdwg.mxu0
        %v1410 = vadd.f32 %v1331, %v1407
        %v1411 = vld [vmem:[%s4] sm:$0x1]
        %v1412 = vadd.f32 %v1410, %v1411
        %vm1413 = vcmp.ge.f32.partialorder %v1412, 0.0
        %v1414 = vmul.f32 %v1412, 0.01
        %v1415 = vsel %vm1413, %v1412, %v1414
        %v1416 = vld [vmem:[%s5] sm:$0xff]
        %v1417 = vld [vmem:[%s5 + $0x8] sm:$0xff]
        %v1418 = vld [vmem:[%s5 + $0x10] sm:$0xff]
        %v1419 = vld [vmem:[%s5 + $0x18] sm:$0xff]
        %v1420 = vld [vmem:[%s6] sm:$0x1]
        %v1422 = vsel %vm327, %v1415, 0
        %1424 = vmatprep.subr.mxu0 0.0
        %1425 = vmatpush1.msra.mxu0 0.0
        %1426 = vmatprep.subr.mxu0 0.0
        %1427 = vmatpush1.msra.mxu0 0.0
        %1428 = vmatprep.subr.mxu0 0.0
        %1429 = vmatpush1.msra.mxu0 0.0
        %1430 = vmatprep.subr.mxu0 0.0
        %1431 = vmatpush1.msra.mxu0 0.0
        %1432 = vmatprep.subr.mxu0 0.0
        %1433 = vmatpush1.msra.mxu0 0.0
        %1434 = vmatprep.subr.mxu0 0.0
        %1435 = vmatpush1.msra.mxu0 0.0
        %1436 = vmatprep.subr.mxu0 0.0
        %1437 = vmatpush1.msra.mxu0 0.0
        %1438 = vmatprep.subr.mxu0 0.0
        %1439 = vmatpush1.msra.mxu0 0.0
        %1440 = vmatprep.subr.mxu0 0.0
        %1441 = vmatpush1.msra.mxu0 0.0
        %1442 = vmatprep.subr.mxu0 0.0
        %1443 = vmatpush1.msra.mxu0 0.0
        %1444 = vmatprep.subr.mxu0 0.0
        %1445 = vmatpush1.msra.mxu0 0.0
        %1446 = vmatprep.subr.mxu0 0.0
        %1447 = vmatpush1.msra.mxu0 0.0
        %1448 = vmatprep.subr.mxu0 0.0
        %1449 = vmatpush1.msra.mxu0 %v1419
        %1450 = vmatprep.subr.mxu0 0.0
        %1451 = vmatpush1.msra.mxu0 %v1418
        %1452 = vmatprep.subr.mxu0 0.0
        %1453 = vmatpush1.msra.mxu0 %v1417
        %1454 = vmatprep.subr.mxu0 0.0
        %1455 = vmatpush1.msra.mxu0 %v1416
        %1456 = vmatprep.subr.mxu0 0.0
        %1457 = vmatpush2.msra.mxu0 0.0
        %1458 = vmatprep.subr.mxu0 0.0
        %1459 = vmatpush2.msra.mxu0 0.0
        %1460 = vmatprep.subr.mxu0 0.0
        %1461 = vmatpush2.msra.mxu0 0.0
        %1462 = vmatprep.subr.mxu0 0.0
        %1463 = vmatpush2.msra.mxu0 0.0
        %1464 = vmatprep.subr.mxu0 0.0
        %1465 = vmatpush2.msra.mxu0 0.0
        %1466 = vmatprep.subr.mxu0 0.0
        %1467 = vmatpush2.msra.mxu0 0.0
        %1468 = vmatprep.subr.mxu0 0.0
        %1469 = vmatpush2.msra.mxu0 0.0
        %1470 = vmatprep.subr.mxu0 0.0
        %1471 = vmatpush2.msra.mxu0 0.0
        %1472 = vmatprep.subr.mxu0 0.0
        %1473 = vmatpush2.msra.mxu0 0.0
        %1474 = vmatprep.subr.mxu0 0.0
        %1475 = vmatpush2.msra.mxu0 0.0
        %1476 = vmatprep.subr.mxu0 0.0
        %1477 = vmatpush2.msra.mxu0 0.0
        %1478 = vmatprep.subr.mxu0 0.0
        %1479 = vmatpush2.msra.mxu0 0.0
        %1480 = vmatprep.subr.mxu0 0.0
        %1481 = vmatpush2.msra.mxu0 0.0
        %1482 = vmatprep.subr.mxu0 0.0
        %1483 = vmatpush2.msra.mxu0 0.0
        %1484 = vmatprep.subr.mxu0 0.0
        %1485 = vmatpush2.msra.mxu0 0.0
        %1486 = vmatprep.subr.mxu0 0.0
        %1487 = vmatpush2.msra.mxu0 0.0
        %1488 = vmatprep.mubr.f32.mxu0 0.0
        %1489 = vmatmul.mubr.f32.gmra.mxu0 %v1422
        %v1490 = vpop.f32.mrf.mxu0
        %v1491 = vadd.f32 %v1420, %v1490
        %v1492 = vpop.f32.mrf.mxu0
        %1493 = vdwg.mxu0
        %vm1494 = vcmask 253952
        %1495 = vst.msk [vmem:[%s273] sm:$0x1] %vm1494, %v1491
        %s1496 = sand.u32 %s181, 1
        %s1497 = scalar_lea.sflag [#allocation3], %s1496
        %s1498 = sand.u32 %s181, 1
        %s1499 = scalar_lea.vmem [#allocation2], %s1498
        // Predicated region
        $region49: #{gradual_style_block_forward.5} parent=47 // pred_check
          %p1500 = pneg %p191
        $region50: #{gradual_style_block_forward.5} parent=47 // pred_check_branch
          %1502 = sbr.rel (%p1500) target = $region52
        $region51: #{gradual_style_block_forward.5} parent=47 // pred_region
          %s1504 = ssub.s32 16, 16
          %1505 = vsyncadd %s1497, %s1504
          %s1506 = smul.addr %s21, 16
          %s1507 = scalar_lea.hbm %s7, %s1506
          %s1509 = sshll.u32 %s1499, 4
          %s1510 = int_to_ptr.vmem [resolvable:$true] %s1509
          %1512 = dma.vmem_to_hbm [thread:$0]  %s1510, 16, %s1507, %s1497
        $region52: #{gradual_style_block_forward.5} parent=47 // pred_fallthru
          _
      $region48: #{gradual_style_block_forward.5} parent=5 // pred_fallthru
        _
      %p1513 = scmp.le.s32.totalorder 2, %s16
      // Predicated region
      $region53: #{gradual_style_block_forward.5} parent=5 // pred_check
        %p1514 = pneg %p1513
      $region54: #{gradual_style_block_forward.5} parent=5 // pred_check_branch
        %1516 = sbr.rel (%p1514) target = $region56
      $region55: #{gradual_style_block_forward.5} parent=5 // pred_region
        %s1517 = ssub.s32 %s16, 2
        // Predicated region
        $region57: #{gradual_style_block_forward.5} parent=55 // pred_check
          %p1518 = pneg %p197
        $region58: #{gradual_style_block_forward.5} parent=55 // pred_check_branch
          %1520 = sbr.rel (%p1518) target = $region60
        $region59: #{gradual_style_block_forward.5} parent=55 // pred_region
          %s1521 = sand.u32 %s182, 1
          %s1522 = scalar_lea.sflag [#allocation3], %s1521
          %s1523 = sand.u32 %s182, 1
          %s1524 = scalar_lea.vmem [#allocation2], %s1523
          %1525 = dma.done %s1522, 16
        $region60: #{gradual_style_block_forward.5} parent=55 // pred_fallthru
          _
      $region56: #{gradual_style_block_forward.5} parent=5 // pred_fallthru
        _
    $region6: #{gradual_style_block_forward.5} parent=1 // loop_footer
      %s20 = sadd.s32 1, %s16
    $region7: #{gradual_style_block_forward.5} parent=1 // loop_footer_branch
      %15 = sbr.rel target = $region3
    $region8: #{gradual_style_block_forward.5} parent=1 // loop_exit
      _
    %1526 = vsyncpa [#allocation3], 1
    %s1527 = scalar_lea.sflag [#allocation3], 1
    %1528 = vsyncpa %s1527, 1

</llo_original>
